<compile_context>
chip_gen: v5e
topology: v5e:2x2
jax: 0.10.0
libtpu: 0.0.40
codegen_flags: <defaults>
</compile_context>

<pallas_src>
import functools

import jax
import jax.numpy as jnp
from jax import lax
from jax.experimental import pallas as pl
from jax.experimental.pallas import tpu as pltpu

LN_EPS = 1e-5  # PyTorch nn.LayerNorm default
_CONTRACT_LAST = (((1,), (1,)), ((), ()))  # A[m,k] x B[n,k] -> [m,n] (A @ B.T)


def _erf_f32(x):
    # Abramowitz & Stegun 7.1.26 rational approximation, exact f32 division.
    a1, a2, a3, a4, a5 = (0.254829592, -0.284496736, 1.421413741,
                          -1.453152027, 1.061405429)
    p = 0.3275911
    sign = jnp.where(x < 0.0, -1.0, 1.0)
    ax = jnp.abs(x)
    t = 1.0 / (1.0 + p * ax)
    poly = ((((a5 * t + a4) * t + a3) * t + a2) * t + a1) * t
    return sign * (1.0 - poly * jnp.exp(-ax * ax))


def _gelu_exact(x):
    # nn.GELU() default (approximate='none'): 0.5 * x * (1 + erf(x / sqrt(2)))
    return 0.5 * x * (1.0 + _erf_f32(x * 0.7071067811865476))


def _head_forward(x_bf16, w1_bf, w2_bf, vec):
    """ProjectionHead: Linear -> GELU -> Linear -> (+res) -> LayerNorm."""
    b1 = vec[0:1, :]
    b2 = vec[1:2, :]
    gamma = vec[2:3, :]
    beta = vec[3:4, :]
    projected = jnp.dot(x_bf16, w1_bf, preferred_element_type=jnp.float32) + b1
    h = _gelu_exact(projected)
    y = jnp.dot(h.astype(jnp.bfloat16), w2_bf,
                preferred_element_type=jnp.float32) + b2
    # dropout(p=0.1): identity (eval semantics)
    y = y + projected
    mean = jnp.mean(y, axis=-1, keepdims=True)
    ctr = y - mean
    var = jnp.mean(ctr * ctr, axis=-1, keepdims=True)
    y = ctr * lax.rsqrt(var + LN_EPS)
    return y * gamma + beta


def heads_kernel(img_feat_ref, txt_feat_ref,
                 img_w1_ref, img_w2_ref, img_vec_ref,
                 txt_w1_ref, txt_w2_ref, txt_vec_ref,
                 img_emb_ref, txt_emb_ref):
    img = _head_forward(img_feat_ref[...], img_w1_ref[...],
                        img_w2_ref[...], img_vec_ref[...])
    txt = _head_forward(txt_feat_ref[...], txt_w1_ref[...],
                        txt_w2_ref[...], txt_vec_ref[...])
    img_emb_ref[...] = img.astype(jnp.bfloat16)
    txt_emb_ref[...] = txt.astype(jnp.bfloat16)


def _scaled_bf16(x_bf16, scale):
    if scale == 1.0:
        return x_bf16
    return (x_bf16.astype(jnp.float32) * scale).astype(jnp.bfloat16)


def loss_kernel(img_emb_ref, txt_emb_ref, stats_ref, colsum_ref, *,
                tq, temperature):
    """One row-block of the contrastive loss; only axis=-1 reductions."""
    r = pl.program_id(0)
    start = pl.multiple_of(r * tq, tq)
    inv_temp = 1.0 / float(temperature)
    half_temp = 0.5 * float(temperature)

    img_all = img_emb_ref[...]                    # (B, P) bf16, VMEM-resident
    txt_all = txt_emb_ref[...]
    img_r = img_emb_ref[pl.ds(start, tq), :]      # (TQ, P) bf16 row block
    txt_r = txt_emb_ref[pl.ds(start, tq), :]

    # logits rows / logits.T rows; 1/temperature folded into the row operand.
    logits = lax.dot_general(_scaled_bf16(txt_r, inv_temp), img_all,
                             _CONTRACT_LAST, preferred_element_type=jnp.float32)
    logits_t = lax.dot_general(_scaled_bf16(img_r, inv_temp), txt_all,
                               _CONTRACT_LAST, preferred_element_type=jnp.float32)

    # s rows: (img_sim + txt_sim) * temperature / 2  (s is symmetric, so these
    # rows serve both targets[rows, :] and the rows of targets.T implicitly).
    s = (lax.dot_general(_scaled_bf16(img_r, half_temp), img_all,
                         _CONTRACT_LAST, preferred_element_type=jnp.float32)
         + lax.dot_general(_scaled_bf16(txt_r, half_temp), txt_all,
                           _CONTRACT_LAST, preferred_element_type=jnp.float32))

    # targets = softmax(s, axis=-1); exact division on the (TQ,1) denominator.
    m_s = jnp.max(s, axis=-1, keepdims=True)
    e_s = jnp.exp(s - m_s)
    targets = e_s * (1.0 / jnp.sum(e_s, axis=-1, keepdims=True))

    # Row log-sum-exp of logits (texts side) and of logits.T (images side).
    m1 = jnp.max(logits, axis=-1, keepdims=True)
    lse1 = m1 + jnp.log(jnp.sum(jnp.exp(logits - m1), axis=-1, keepdims=True))
    m0 = jnp.max(logits_t, axis=-1, keepdims=True)
    lse0 = m0 + jnp.log(jnp.sum(jnp.exp(logits_t - m0), axis=-1, keepdims=True))

    texts_loss = jnp.sum(targets * (lse1 - logits), axis=-1, keepdims=True)
    cross_rows = jnp.sum(targets * logits, axis=-1, keepdims=True)

    stats_ref[:, 0:1] = texts_loss   # per-row texts_loss
    stats_ref[:, 1:2] = cross_rows   # per-row sum_j targets*logits
    stats_ref[:, 2:3] = lse0         # column-LSE of logits for this block's cols

    # Per-block partial column sums of targets (reduced across blocks on host).
    colsum_ref[0, :, :] = jnp.sum(targets, axis=0, keepdims=True)


def _pack_head_params(w1, b1, w2, b2, gamma, beta):
    vec = jnp.stack([b1, b2, gamma, beta], axis=0).astype(jnp.float32)  # (4, P)
    return w1.astype(jnp.bfloat16), w2.astype(jnp.bfloat16), vec


def clip_model_forward(image_features, text_features, img_params, txt_params,
                       temperature, *, tq=128):
    batch = image_features.shape[0]
    assert text_features.shape[0] == batch
    if tq > batch or batch % tq != 0:
        tq = batch
    num_blocks = batch // tq

    img_w1, img_w2, img_vec = _pack_head_params(*img_params)
    txt_w1, txt_w2, txt_vec = _pack_head_params(*txt_params)
    p = img_w1.shape[1]
    e_img = image_features.shape[1]
    e_txt = text_features.shape[1]

    img_feat = image_features.astype(jnp.bfloat16)   # halve feature DMA bytes
    txt_feat = text_features.astype(jnp.bfloat16)

    cparams = pltpu.CompilerParams(
        dimension_semantics=("parallel",),
        vmem_limit_bytes=48 * 1024 * 1024,
    )

    def full(shape):
        return pl.BlockSpec(shape, lambda r, _n=len(shape): (0,) * _n)

    def row_blk(cols):
        return pl.BlockSpec((tq, cols), lambda r: (r, 0))

    # ---- Kernel 1: projection heads -> bf16 embeddings -------------------
    img_emb, txt_emb = pl.pallas_call(
        heads_kernel,
        grid=(num_blocks,),
        in_specs=[row_blk(e_img), row_blk(e_txt),
                  full((e_img, p)), full((p, p)), full((4, p)),
                  full((e_txt, p)), full((p, p)), full((4, p))],
        out_specs=(row_blk(p), row_blk(p)),
        out_shape=(jax.ShapeDtypeStruct((batch, p), jnp.bfloat16),
                   jax.ShapeDtypeStruct((batch, p), jnp.bfloat16)),
        compiler_params=cparams,
    )(img_feat, txt_feat, img_w1, img_w2, img_vec, txt_w1, txt_w2, txt_vec)

    # ---- Kernel 2: row-block-streamed contrastive loss -------------------
    loss_k = functools.partial(loss_kernel, tq=tq, temperature=float(temperature))
    stats, colsum_parts = pl.pallas_call(
        loss_k,
        grid=(num_blocks,),
        in_specs=[full((batch, p)), full((batch, p))],
        out_specs=(pl.BlockSpec((tq, 3), lambda r: (r, 0)),
                   pl.BlockSpec((1, 1, batch), lambda r: (r, 0, 0))),
        out_shape=(jax.ShapeDtypeStruct((batch, 3), jnp.float32),
                   jax.ShapeDtypeStruct((num_blocks, 1, batch), jnp.float32)),
        compiler_params=cparams,
    )(img_emb, txt_emb)

    # ---- O(B) final reduction (plain JAX) ---------------------------------
    texts_sum = jnp.sum(stats[:, 0])
    cross_sum = jnp.sum(stats[:, 1])               # sum_{i,j} targets*logits
    lse0 = stats[:, 2]                             # per-column LSE of logits
    colsum = jnp.sum(colsum_parts[:, 0, :], axis=0)  # per-column sum of targets
    images_sum = jnp.dot(colsum, lse0) - cross_sum
    return (texts_sum + images_sum) / (2.0 * batch)


def init_projection_head_params(key, embedding_dim, projection_dim):
    k1, k2 = jax.random.split(key)
    w1 = jax.random.normal(k1, (embedding_dim, projection_dim), jnp.float32) * 0.02
    b1 = jnp.zeros((projection_dim,), jnp.float32)
    w2 = jax.random.normal(k2, (projection_dim, projection_dim), jnp.float32) * 0.02
    b2 = jnp.zeros((projection_dim,), jnp.float32)
    gamma = jnp.ones((projection_dim,), jnp.float32)
    beta = jnp.zeros((projection_dim,), jnp.float32)
    return (w1, b1, w2, b2, gamma, beta)


def _reference_loss(image_features, text_features, img_params, txt_params,
                    temperature):
    """Pure-JAX mirror (same bf16 operand rounding) of the PyTorch forward."""
    def head(x, params):
        w1, b1, w2, b2, gamma, beta = params
        xb = x.astype(jnp.bfloat16).astype(jnp.float32)
        w1b = w1.astype(jnp.bfloat16).astype(jnp.float32)
        w2b = w2.astype(jnp.bfloat16).astype(jnp.float32)
        projected = xb @ w1b + b1
        h = _gelu_exact(projected)
        y = h.astype(jnp.bfloat16).astype(jnp.float32) @ w2b + b2
        y = y + projected
        mean = y.mean(-1, keepdims=True)
        ctr = y - mean
        var = (ctr * ctr).mean(-1, keepdims=True)
        y = ctr * lax.rsqrt(var + LN_EPS)
        return (y * gamma + beta).astype(jnp.bfloat16).astype(jnp.float32)

    img_emb = head(image_features, img_params)
    txt_emb = head(text_features, txt_params)
    logits = txt_emb @ img_emb.T / temperature
    img_sim = img_emb @ img_emb.T
    txt_sim = txt_emb @ txt_emb.T
    targets = jax.nn.softmax((img_sim + txt_sim) / 2.0 * temperature, axis=-1)
    texts_loss = jnp.sum(-targets * jax.nn.log_softmax(logits, axis=-1), axis=1)
    images_loss = jnp.sum(-targets.T * jax.nn.log_softmax(logits.T, axis=-1),
                          axis=1)
    return jnp.mean((images_loss + texts_loss) / 2.0)


if __name__ == "__main__":
    # Small, shape-consistent synthetic config (stands in for CFG).  Batch is a
    # multiple of 128 so the row-block grid (tq=128, 2 blocks) is exercised.
    BATCH = 256
    IMAGE_EMBEDDING = 64    # CFG.image_embedding
    TEXT_EMBEDDING = 32     # CFG.text_embedding
    PROJECTION_DIM = 256    # ProjectionHead default projection_dim
    TEMPERATURE = 1.0       # CFG.temperature

    root = jax.random.PRNGKey(0)
    k_img_feat, k_txt_feat, k_img_head, k_txt_head = jax.random.split(root, 4)

    # Stand-ins for model.encode_image(imgs) / model.encode_text(txts) outputs.
    image_features = jax.random.normal(
        k_img_feat, (BATCH, IMAGE_EMBEDDING), jnp.float32)
    text_features = jax.random.normal(
        k_txt_feat, (BATCH, TEXT_EMBEDDING), jnp.float32)

    img_params = init_projection_head_params(
        k_img_head, IMAGE_EMBEDDING, PROJECTION_DIM)
    txt_params = init_projection_head_params(
        k_txt_head, TEXT_EMBEDDING, PROJECTION_DIM)

    loss = clip_model_forward(image_features, text_features,
                              img_params, txt_params, TEMPERATURE, tq=128)
    loss = jax.block_until_ready(loss)

    ref = _reference_loss(image_features, text_features,
                          img_params, txt_params, TEMPERATURE)
    ref = jax.block_until_ready(ref)

    assert loss.shape == ()
    assert bool(jnp.isfinite(loss))
    assert abs(float(loss) - float(ref)) <= 1e-2 * max(1.0, abs(float(ref))), (
        float(loss), float(ref))
    print("KERNEL_OK")
</pallas_src>

<mosaic_0001>
module attributes {stable_mosaic.version = 11 : i64} {
  func.func @heads_kernel(%arg0: i32, %arg1: memref<128x64xbf16, #tpu.memory_space<vmem>>, %arg2: memref<128x32xbf16, #tpu.memory_space<vmem>>, %arg3: memref<64x256xbf16, #tpu.memory_space<vmem>>, %arg4: memref<256x256xbf16, #tpu.memory_space<vmem>>, %arg5: memref<4x256xf32, #tpu.memory_space<vmem>>, %arg6: memref<32x256xbf16, #tpu.memory_space<vmem>>, %arg7: memref<256x256xbf16, #tpu.memory_space<vmem>>, %arg8: memref<4x256xf32, #tpu.memory_space<vmem>>, %arg9: memref<128x256xbf16, #tpu.memory_space<vmem>>, %arg10: memref<128x256xbf16, #tpu.memory_space<vmem>>) attributes {dimension_semantics = [#tpu.dimension_semantics<parallel>], iteration_bounds = array<i64: 2>, scalar_prefetch = 0 : i64, scratch_operands = 0 : i64, tpu.core_type = #tpu.core_type<tc>, window_params = [{transform_indices = @transform_0, window_bounds = array<i64: 128, 64>}, {transform_indices = @transform_1, window_bounds = array<i64: 128, 32>}, {pipeline_mode = #tpu.pipeline_mode<synchronous>, transform_indices = @transform_2, window_bounds = array<i64: 64, 256>}, {pipeline_mode = #tpu.pipeline_mode<synchronous>, transform_indices = @transform_3, window_bounds = array<i64: 256, 256>}, {pipeline_mode = #tpu.pipeline_mode<synchronous>, transform_indices = @transform_4, window_bounds = array<i64: 4, 256>}, {pipeline_mode = #tpu.pipeline_mode<synchronous>, transform_indices = @transform_5, window_bounds = array<i64: 32, 256>}, {pipeline_mode = #tpu.pipeline_mode<synchronous>, transform_indices = @transform_6, window_bounds = array<i64: 256, 256>}, {pipeline_mode = #tpu.pipeline_mode<synchronous>, transform_indices = @transform_7, window_bounds = array<i64: 4, 256>}, {transform_indices = @transform_8, window_bounds = array<i64: 128, 256>}, {transform_indices = @transform_9, window_bounds = array<i64: 128, 256>}]} {
    %c0 = arith.constant 0 : index
    %c0_0 = arith.constant 0 : index
    %0 = vector.load %arg1[%c0, %c0_0] : memref<128x64xbf16, #tpu.memory_space<vmem>>, vector<128x64xbf16>
    %c0_1 = arith.constant 0 : index
    %c0_2 = arith.constant 0 : index
    %1 = vector.load %arg3[%c0_1, %c0_2] : memref<64x256xbf16, #tpu.memory_space<vmem>>, vector<64x256xbf16>
    %c0_3 = arith.constant 0 : index
    %c0_4 = arith.constant 0 : index
    %2 = vector.load %arg4[%c0_3, %c0_4] : memref<256x256xbf16, #tpu.memory_space<vmem>>, vector<256x256xbf16>
    %c0_5 = arith.constant 0 : index
    %c0_6 = arith.constant 0 : index
    %3 = vector.load %arg5[%c0_5, %c0_6] : memref<4x256xf32, #tpu.memory_space<vmem>>, vector<4x256xf32>
    %4 = vector.extract_strided_slice %3 {offsets = [0, 0], sizes = [1, 256], strides = [1, 1]} : vector<4x256xf32> to vector<1x256xf32>
    %5 = vector.extract_strided_slice %3 {offsets = [1, 0], sizes = [1, 256], strides = [1, 1]} : vector<4x256xf32> to vector<1x256xf32>
    %6 = vector.extract_strided_slice %3 {offsets = [2, 0], sizes = [1, 256], strides = [1, 1]} : vector<4x256xf32> to vector<1x256xf32>
    %7 = vector.extract_strided_slice %3 {offsets = [3, 0], sizes = [1, 256], strides = [1, 1]} : vector<4x256xf32> to vector<1x256xf32>
    %cst = arith.constant dense<0.000000e+00> : vector<128x256xf32>
    %8 = tpu.matmul %0, %1, %cst {dimension_numbers = #tpu.dot_dimension_numbers<[1], [0], [0], [1], [0, 0, 1, 1], [], []>} : vector<128x64xbf16>, vector<64x256xbf16>, vector<128x256xf32> -> vector<128x256xf32>
    %9 = vector.broadcast %4 : vector<1x256xf32> to vector<128x256xf32>
    %10 = arith.addf %8, %9 : vector<128x256xf32>
    %cst_7 = arith.constant 5.000000e-01 : f32
    %11 = vector.broadcast %cst_7 : f32 to vector<128x256xf32>
    %12 = arith.mulf %11, %10 : vector<128x256xf32>
    %cst_8 = arith.constant 0.707106769 : f32
    %13 = vector.broadcast %cst_8 : f32 to vector<128x256xf32>
    %14 = arith.mulf %10, %13 : vector<128x256xf32>
    %cst_9 = arith.constant 0.000000e+00 : f32
    %15 = vector.broadcast %cst_9 : f32 to vector<128x256xf32>
    %16 = arith.cmpf olt, %14, %15 : vector<128x256xf32>
    %cst_10 = arith.constant -1.000000e+00 : f32
    %cst_11 = arith.constant 1.000000e+00 : f32
    %17 = vector.broadcast %cst_10 : f32 to vector<128x256xf32>
    %18 = vector.broadcast %cst_11 : f32 to vector<128x256xf32>
    %19 = arith.select %16, %17, %18 : vector<128x256xi1>, vector<128x256xf32>
    %20 = math.absf %14 : vector<128x256xf32>
    %cst_12 = arith.constant 0.327591091 : f32
    %21 = vector.broadcast %cst_12 : f32 to vector<128x256xf32>
    %22 = arith.mulf %21, %20 : vector<128x256xf32>
    %cst_13 = arith.constant 1.000000e+00 : f32
    %23 = vector.broadcast %cst_13 : f32 to vector<128x256xf32>
    %24 = arith.addf %23, %22 : vector<128x256xf32>
    %cst_14 = arith.constant 1.000000e+00 : f32
    %25 = vector.broadcast %cst_14 : f32 to vector<128x256xf32>
    %26 = arith.divf %25, %24 : vector<128x256xf32>
    %cst_15 = arith.constant 1.06140542 : f32
    %27 = vector.broadcast %cst_15 : f32 to vector<128x256xf32>
    %28 = arith.mulf %27, %26 : vector<128x256xf32>
    %cst_16 = arith.constant -1.45315206 : f32
    %29 = vector.broadcast %cst_16 : f32 to vector<128x256xf32>
    %30 = arith.addf %28, %29 : vector<128x256xf32>
    %31 = arith.mulf %30, %26 : vector<128x256xf32>
    %cst_17 = arith.constant 1.42141378 : f32
    %32 = vector.broadcast %cst_17 : f32 to vector<128x256xf32>
    %33 = arith.addf %31, %32 : vector<128x256xf32>
    %34 = arith.mulf %33, %26 : vector<128x256xf32>
    %cst_18 = arith.constant -0.284496725 : f32
    %35 = vector.broadcast %cst_18 : f32 to vector<128x256xf32>
    %36 = arith.addf %34, %35 : vector<128x256xf32>
    %37 = arith.mulf %36, %26 : vector<128x256xf32>
    %cst_19 = arith.constant 0.254829586 : f32
    %38 = vector.broadcast %cst_19 : f32 to vector<128x256xf32>
    %39 = arith.addf %37, %38 : vector<128x256xf32>
    %40 = arith.mulf %39, %26 : vector<128x256xf32>
    %cst_20 = arith.constant 0.000000e+00 : f32
    %41 = vector.broadcast %cst_20 : f32 to vector<128x256xf32>
    %42 = arith.subf %41, %20 : vector<128x256xf32>
    %43 = arith.mulf %42, %20 : vector<128x256xf32>
    %44 = math.exp %43 : vector<128x256xf32>
    %45 = arith.mulf %40, %44 : vector<128x256xf32>
    %cst_21 = arith.constant 1.000000e+00 : f32
    %46 = vector.broadcast %cst_21 : f32 to vector<128x256xf32>
    %47 = arith.subf %46, %45 : vector<128x256xf32>
    %48 = arith.mulf %19, %47 : vector<128x256xf32>
    %cst_22 = arith.constant 1.000000e+00 : f32
    %49 = vector.broadcast %cst_22 : f32 to vector<128x256xf32>
    %50 = arith.addf %49, %48 : vector<128x256xf32>
    %51 = arith.mulf %12, %50 : vector<128x256xf32>
    %52 = arith.truncf %51 : vector<128x256xf32> to vector<128x256xbf16>
    %cst_23 = arith.constant dense<0.000000e+00> : vector<128x256xf32>
    %53 = tpu.matmul %52, %2, %cst_23 {dimension_numbers = #tpu.dot_dimension_numbers<[1], [0], [0], [1], [0, 0, 1, 1], [], []>} : vector<128x256xbf16>, vector<256x256xbf16>, vector<128x256xf32> -> vector<128x256xf32>
    %54 = vector.broadcast %5 : vector<1x256xf32> to vector<128x256xf32>
    %55 = arith.addf %53, %54 : vector<128x256xf32>
    %56 = arith.addf %55, %10 : vector<128x256xf32>
    %cst_24 = arith.constant dense<0.000000e+00> : vector<128xf32>
    %57 = vector.multi_reduction <add>, %56, %cst_24 [1] : vector<128x256xf32> to vector<128xf32>
    %58 = vector.shape_cast %57 : vector<128xf32> to vector<128x1xf32>
    %cst_25 = arith.constant 2.560000e+02 : f32
    %59 = vector.broadcast %cst_25 : f32 to vector<128x1xf32>
    %60 = arith.divf %58, %59 : vector<128x1xf32>
    %61 = vector.broadcast %60 : vector<128x1xf32> to vector<128x256xf32>
    %62 = arith.subf %56, %61 : vector<128x256xf32>
    %63 = arith.mulf %62, %62 : vector<128x256xf32>
    %cst_26 = arith.constant dense<0.000000e+00> : vector<128xf32>
    %64 = vector.multi_reduction <add>, %63, %cst_26 [1] : vector<128x256xf32> to vector<128xf32>
    %65 = vector.shape_cast %64 : vector<128xf32> to vector<128x1xf32>
    %cst_27 = arith.constant 2.560000e+02 : f32
    %66 = vector.broadcast %cst_27 : f32 to vector<128x1xf32>
    %67 = arith.divf %65, %66 : vector<128x1xf32>
    %cst_28 = arith.constant 9.99999974E-6 : f32
    %68 = vector.broadcast %cst_28 : f32 to vector<128x1xf32>
    %69 = arith.addf %67, %68 : vector<128x1xf32>
    %70 = math.rsqrt %69 : vector<128x1xf32>
    %71 = vector.broadcast %70 : vector<128x1xf32> to vector<128x256xf32>
    %72 = arith.mulf %62, %71 : vector<128x256xf32>
    %73 = vector.broadcast %6 : vector<1x256xf32> to vector<128x256xf32>
    %74 = arith.mulf %72, %73 : vector<128x256xf32>
    %75 = vector.broadcast %7 : vector<1x256xf32> to vector<128x256xf32>
    %76 = arith.addf %74, %75 : vector<128x256xf32>
    %c0_29 = arith.constant 0 : index
    %c0_30 = arith.constant 0 : index
    %77 = vector.load %arg2[%c0_29, %c0_30] : memref<128x32xbf16, #tpu.memory_space<vmem>>, vector<128x32xbf16>
    %c0_31 = arith.constant 0 : index
    %c0_32 = arith.constant 0 : index
    %78 = vector.load %arg6[%c0_31, %c0_32] : memref<32x256xbf16, #tpu.memory_space<vmem>>, vector<32x256xbf16>
    %c0_33 = arith.constant 0 : index
    %c0_34 = arith.constant 0 : index
    %79 = vector.load %arg7[%c0_33, %c0_34] : memref<256x256xbf16, #tpu.memory_space<vmem>>, vector<256x256xbf16>
    %c0_35 = arith.constant 0 : index
    %c0_36 = arith.constant 0 : index
    %80 = vector.load %arg8[%c0_35, %c0_36] : memref<4x256xf32, #tpu.memory_space<vmem>>, vector<4x256xf32>
    %81 = vector.extract_strided_slice %80 {offsets = [0, 0], sizes = [1, 256], strides = [1, 1]} : vector<4x256xf32> to vector<1x256xf32>
    %82 = vector.extract_strided_slice %80 {offsets = [1, 0], sizes = [1, 256], strides = [1, 1]} : vector<4x256xf32> to vector<1x256xf32>
    %83 = vector.extract_strided_slice %80 {offsets = [2, 0], sizes = [1, 256], strides = [1, 1]} : vector<4x256xf32> to vector<1x256xf32>
    %84 = vector.extract_strided_slice %80 {offsets = [3, 0], sizes = [1, 256], strides = [1, 1]} : vector<4x256xf32> to vector<1x256xf32>
    %cst_37 = arith.constant dense<0.000000e+00> : vector<128x256xf32>
    %85 = tpu.matmul %77, %78, %cst_37 {dimension_numbers = #tpu.dot_dimension_numbers<[1], [0], [0], [1], [0, 0, 1, 1], [], []>} : vector<128x32xbf16>, vector<32x256xbf16>, vector<128x256xf32> -> vector<128x256xf32>
    %86 = vector.broadcast %81 : vector<1x256xf32> to vector<128x256xf32>
    %87 = arith.addf %85, %86 : vector<128x256xf32>
    %cst_38 = arith.constant 5.000000e-01 : f32
    %88 = vector.broadcast %cst_38 : f32 to vector<128x256xf32>
    %89 = arith.mulf %88, %87 : vector<128x256xf32>
    %cst_39 = arith.constant 0.707106769 : f32
    %90 = vector.broadcast %cst_39 : f32 to vector<128x256xf32>
    %91 = arith.mulf %87, %90 : vector<128x256xf32>
    %cst_40 = arith.constant 0.000000e+00 : f32
    %92 = vector.broadcast %cst_40 : f32 to vector<128x256xf32>
    %93 = arith.cmpf olt, %91, %92 : vector<128x256xf32>
    %cst_41 = arith.constant -1.000000e+00 : f32
    %cst_42 = arith.constant 1.000000e+00 : f32
    %94 = vector.broadcast %cst_41 : f32 to vector<128x256xf32>
    %95 = vector.broadcast %cst_42 : f32 to vector<128x256xf32>
    %96 = arith.select %93, %94, %95 : vector<128x256xi1>, vector<128x256xf32>
    %97 = math.absf %91 : vector<128x256xf32>
    %cst_43 = arith.constant 0.327591091 : f32
    %98 = vector.broadcast %cst_43 : f32 to vector<128x256xf32>
    %99 = arith.mulf %98, %97 : vector<128x256xf32>
    %cst_44 = arith.constant 1.000000e+00 : f32
    %100 = vector.broadcast %cst_44 : f32 to vector<128x256xf32>
    %101 = arith.addf %100, %99 : vector<128x256xf32>
    %cst_45 = arith.constant 1.000000e+00 : f32
    %102 = vector.broadcast %cst_45 : f32 to vector<128x256xf32>
    %103 = arith.divf %102, %101 : vector<128x256xf32>
    %cst_46 = arith.constant 1.06140542 : f32
    %104 = vector.broadcast %cst_46 : f32 to vector<128x256xf32>
    %105 = arith.mulf %104, %103 : vector<128x256xf32>
    %cst_47 = arith.constant -1.45315206 : f32
    %106 = vector.broadcast %cst_47 : f32 to vector<128x256xf32>
    %107 = arith.addf %105, %106 : vector<128x256xf32>
    %108 = arith.mulf %107, %103 : vector<128x256xf32>
    %cst_48 = arith.constant 1.42141378 : f32
    %109 = vector.broadcast %cst_48 : f32 to vector<128x256xf32>
    %110 = arith.addf %108, %109 : vector<128x256xf32>
    %111 = arith.mulf %110, %103 : vector<128x256xf32>
    %cst_49 = arith.constant -0.284496725 : f32
    %112 = vector.broadcast %cst_49 : f32 to vector<128x256xf32>
    %113 = arith.addf %111, %112 : vector<128x256xf32>
    %114 = arith.mulf %113, %103 : vector<128x256xf32>
    %cst_50 = arith.constant 0.254829586 : f32
    %115 = vector.broadcast %cst_50 : f32 to vector<128x256xf32>
    %116 = arith.addf %114, %115 : vector<128x256xf32>
    %117 = arith.mulf %116, %103 : vector<128x256xf32>
    %cst_51 = arith.constant 0.000000e+00 : f32
    %118 = vector.broadcast %cst_51 : f32 to vector<128x256xf32>
    %119 = arith.subf %118, %97 : vector<128x256xf32>
    %120 = arith.mulf %119, %97 : vector<128x256xf32>
    %121 = math.exp %120 : vector<128x256xf32>
    %122 = arith.mulf %117, %121 : vector<128x256xf32>
    %cst_52 = arith.constant 1.000000e+00 : f32
    %123 = vector.broadcast %cst_52 : f32 to vector<128x256xf32>
    %124 = arith.subf %123, %122 : vector<128x256xf32>
    %125 = arith.mulf %96, %124 : vector<128x256xf32>
    %cst_53 = arith.constant 1.000000e+00 : f32
    %126 = vector.broadcast %cst_53 : f32 to vector<128x256xf32>
    %127 = arith.addf %126, %125 : vector<128x256xf32>
    %128 = arith.mulf %89, %127 : vector<128x256xf32>
    %129 = arith.truncf %128 : vector<128x256xf32> to vector<128x256xbf16>
    %cst_54 = arith.constant dense<0.000000e+00> : vector<128x256xf32>
    %130 = tpu.matmul %129, %79, %cst_54 {dimension_numbers = #tpu.dot_dimension_numbers<[1], [0], [0], [1], [0, 0, 1, 1], [], []>} : vector<128x256xbf16>, vector<256x256xbf16>, vector<128x256xf32> -> vector<128x256xf32>
    %131 = vector.broadcast %82 : vector<1x256xf32> to vector<128x256xf32>
    %132 = arith.addf %130, %131 : vector<128x256xf32>
    %133 = arith.addf %132, %87 : vector<128x256xf32>
    %cst_55 = arith.constant dense<0.000000e+00> : vector<128xf32>
    %134 = vector.multi_reduction <add>, %133, %cst_55 [1] : vector<128x256xf32> to vector<128xf32>
    %135 = vector.shape_cast %134 : vector<128xf32> to vector<128x1xf32>
    %cst_56 = arith.constant 2.560000e+02 : f32
    %136 = vector.broadcast %cst_56 : f32 to vector<128x1xf32>
    %137 = arith.divf %135, %136 : vector<128x1xf32>
    %138 = vector.broadcast %137 : vector<128x1xf32> to vector<128x256xf32>
    %139 = arith.subf %133, %138 : vector<128x256xf32>
    %140 = arith.mulf %139, %139 : vector<128x256xf32>
    %cst_57 = arith.constant dense<0.000000e+00> : vector<128xf32>
    %141 = vector.multi_reduction <add>, %140, %cst_57 [1] : vector<128x256xf32> to vector<128xf32>
    %142 = vector.shape_cast %141 : vector<128xf32> to vector<128x1xf32>
    %cst_58 = arith.constant 2.560000e+02 : f32
    %143 = vector.broadcast %cst_58 : f32 to vector<128x1xf32>
    %144 = arith.divf %142, %143 : vector<128x1xf32>
    %cst_59 = arith.constant 9.99999974E-6 : f32
    %145 = vector.broadcast %cst_59 : f32 to vector<128x1xf32>
    %146 = arith.addf %144, %145 : vector<128x1xf32>
    %147 = math.rsqrt %146 : vector<128x1xf32>
    %148 = vector.broadcast %147 : vector<128x1xf32> to vector<128x256xf32>
    %149 = arith.mulf %139, %148 : vector<128x256xf32>
    %150 = vector.broadcast %83 : vector<1x256xf32> to vector<128x256xf32>
    %151 = arith.mulf %149, %150 : vector<128x256xf32>
    %152 = vector.broadcast %84 : vector<1x256xf32> to vector<128x256xf32>
    %153 = arith.addf %151, %152 : vector<128x256xf32>
    %154 = arith.truncf %76 : vector<128x256xf32> to vector<128x256xbf16>
    %c0_60 = arith.constant 0 : index
    %c0_61 = arith.constant 0 : index
    %155 = vector.load %arg9[%c0_60, %c0_61] : memref<128x256xbf16, #tpu.memory_space<vmem>>, vector<128x256xbf16>
    tpu.vector_store %arg9[%c0_60, %c0_61], %154 {strides = array<i32>} : memref<128x256xbf16, #tpu.memory_space<vmem>>, vector<128x256xbf16>,
    %156 = arith.truncf %153 : vector<128x256xf32> to vector<128x256xbf16>
    %c0_62 = arith.constant 0 : index
    %c0_63 = arith.constant 0 : index
    %157 = vector.load %arg10[%c0_62, %c0_63] : memref<128x256xbf16, #tpu.memory_space<vmem>>, vector<128x256xbf16>
    tpu.vector_store %arg10[%c0_62, %c0_63], %156 {strides = array<i32>} : memref<128x256xbf16, #tpu.memory_space<vmem>>, vector<128x256xbf16>,
    return
  }
  func.func @transform_0(%arg0: i32) -> (i32, i32) {
    %c0_i32 = arith.constant 0 : i32
    %c0_i32_0 = arith.constant 0 : i32
    return %arg0, %c0_i32 : i32, i32
  }
  func.func @transform_1(%arg0: i32) -> (i32, i32) {
    %c0_i32 = arith.constant 0 : i32
    %c0_i32_0 = arith.constant 0 : i32
    return %arg0, %c0_i32 : i32, i32
  }
  func.func @transform_2(%arg0: i32) -> (i32, i32) {
    %c0_i32 = arith.constant 0 : i32
    %c0_i32_0 = arith.constant 0 : i32
    %c0_i32_1 = arith.constant 0 : i32
    return %c0_i32, %c0_i32_0 : i32, i32
  }
  func.func @transform_3(%arg0: i32) -> (i32, i32) {
    %c0_i32 = arith.constant 0 : i32
    %c0_i32_0 = arith.constant 0 : i32
    %c0_i32_1 = arith.constant 0 : i32
    return %c0_i32, %c0_i32_0 : i32, i32
  }
  func.func @transform_4(%arg0: i32) -> (i32, i32) {
    %c0_i32 = arith.constant 0 : i32
    %c0_i32_0 = arith.constant 0 : i32
    %c0_i32_1 = arith.constant 0 : i32
    return %c0_i32, %c0_i32_0 : i32, i32
  }
  func.func @transform_5(%arg0: i32) -> (i32, i32) {
    %c0_i32 = arith.constant 0 : i32
    %c0_i32_0 = arith.constant 0 : i32
    %c0_i32_1 = arith.constant 0 : i32
    return %c0_i32, %c0_i32_0 : i32, i32
  }
  func.func @transform_6(%arg0: i32) -> (i32, i32) {
    %c0_i32 = arith.constant 0 : i32
    %c0_i32_0 = arith.constant 0 : i32
    %c0_i32_1 = arith.constant 0 : i32
    return %c0_i32, %c0_i32_0 : i32, i32
  }
  func.func @transform_7(%arg0: i32) -> (i32, i32) {
    %c0_i32 = arith.constant 0 : i32
    %c0_i32_0 = arith.constant 0 : i32
    %c0_i32_1 = arith.constant 0 : i32
    return %c0_i32, %c0_i32_0 : i32, i32
  }
  func.func @transform_8(%arg0: i32) -> (i32, i32) {
    %c0_i32 = arith.constant 0 : i32
    %c0_i32_0 = arith.constant 0 : i32
    return %arg0, %c0_i32 : i32, i32
  }
  func.func @transform_9(%arg0: i32) -> (i32, i32) {
    %c0_i32 = arith.constant 0 : i32
    %c0_i32_0 = arith.constant 0 : i32
    return %arg0, %c0_i32 : i32, i32
  }
}

</mosaic_0001>

<llo_original>
// kernel: tpu_custom_call.1
$region0: #{tpu_custom_call.1}
  #allocation0 [shape = 'u32[]', space=smem, size = 0x4, offset = 0x4, fixed_abs, tag = 'smem constant byte address 0x4 - core index']
  #allocation1 [shape = 'u32[72,128]{1,0:T(1,128)}', space=vmem, size = 0x9000, scoped, tag = 'internal scratch']
  %s0 = inlined_call_operand.vmem [shape: bf16[256,64], index: 0, kind: input, shape index: {}]
  %s1 = inlined_call_operand.vmem [shape: bf16[256,32], index: 1, kind: input, shape index: {}]
  %s2 = inlined_call_operand.vmem [shape: bf16[64,256], index: 2, kind: input, shape index: {}]
  %s3 = inlined_call_operand.vmem [shape: bf16[256,256], index: 3, kind: input, shape index: {}]
  %s4 = inlined_call_operand.hbm [shape: f32[4,256], index: 4, kind: input, shape index: {}]
  %s5 = inlined_call_operand.hbm [shape: bf16[32,256], index: 5, kind: input, shape index: {}]
  %s6 = inlined_call_operand.hbm [shape: bf16[256,256], index: 6, kind: input, shape index: {}]
  %s7 = inlined_call_operand.hbm [shape: f32[4,256], index: 7, kind: input, shape index: {}]
  %s8 = inlined_call_operand.hbm [shape: bf16[256,256], index: 8, kind: output, shape index: {0}]
  %s9 = inlined_call_operand.hbm [shape: bf16[256,256], index: 9, kind: output, shape index: {1}]
  %10 = xla_tuple %s8, %s9
  %s11 = sld [smem:[#allocation0]]
  $region89: #{tpu_custom_call.1} parent=0
    _
  %s13 = ssub.s32 1, %s11
  %s14 = scalar_select 0, %s13, %s11
  $region1: #{tpu_custom_call.1} parent=0
    #allocation2 [shape = 'u8[4096]{0}', space=vmem, size = 0x1000, scoped, tag = 'input window, operand 4, single buffered']
    #allocation3 [shape = 's32[2]{0}', space=sflag, size = 0x8, scoped, tag = 'scoped memory for tpu_custom_call.1']
    #allocation4 [shape = 's32[2]{0}', space=sflag, size = 0x8, scoped, tag = 'scoped memory for tpu_custom_call.1']
    #allocation5 [shape = 'u8[16384]{0}', space=vmem, size = 0x4000, scoped, tag = 'input window, operand 5, single buffered']
    #allocation6 [shape = 's32[1]{0}', space=sflag, size = 0x4, scoped, tag = 'scoped memory for tpu_custom_call.1']
    #allocation7 [shape = 'u8[131072]{0}', space=vmem, size = 0x20000, scoped, tag = 'input window, operand 6, single buffered']
    #allocation8 [shape = 'u8[4096]{0}', space=vmem, size = 0x1000, scoped, tag = 'input window, operand 7, single buffered']
    #allocation9 [shape = 's32[1]{0}', space=sflag, size = 0x4, scoped, tag = 'scoped memory for tpu_custom_call.1']
    #allocation10 [shape = 'u8[131072]{0}', space=vmem, size = 0x20000, scoped, tag = 'output window, operand 0']
    #allocation11 [shape = 'u8[131072]{0}', space=vmem, size = 0x20000, scoped, tag = 'output window, operand 1']
    #allocation12 [shape = 's32[2]{0}', space=sflag, size = 0x8, scoped, tag = 'scoped memory for tpu_custom_call.1']
    %15 = vsyncpa [#allocation3], 0
    %16 = vsyncpa [#allocation6], 0
    %17 = vsyncpa [#allocation9], 0
    %18 = vsyncpa [#allocation4], 0
    %s19 = scalar_lea.sflag [#allocation4], 1
    %20 = vsyncpa %s19, 0
    %21 = vsyncpa [#allocation12], 0
    %s22 = scalar_lea.sflag [#allocation12], 1
    %23 = vsyncpa %s22, 0
    loop: start=0, step=1, limit=4
    $region2: #{tpu_custom_call.1} parent=1 // loop_pre_header
      _
    $region3: #{tpu_custom_call.1} parent=1 // loop_header
      %s25 = sphi 0, %s29
      %p26 = scmp.ge.s32.totalorder %s25, 4
      %s35 = sphi 0, %s37
      %s38 = sphi 0, %s35
      %s39 = sphi 0, %s38
      %s55 = sphi 0, %s39
      %s61 = sphi 0, %s63
      %s64 = sphi 0, %s61
      %s65 = sphi 0, %s64
      %s81 = sphi 0, %s65
      %s85 = sphi 0, %s85
      %s87 = sphi 0, %s85
      %s88 = sphi 0, %s87
      %s102 = sphi 0, %s88
      %s106 = sphi 0, %s106
      %s108 = sphi 0, %s106
      %s109 = sphi 0, %s108
      %s123 = sphi 0, %s109
      %s127 = sphi 0, %s127
      %s129 = sphi 0, %s127
      %s130 = sphi 0, %s129
      %s144 = sphi 0, %s130
      %s148 = sphi 0, %s148
      %s150 = sphi 0, %s148
      %s151 = sphi 0, %s150
      %s165 = sphi 0, %s151
      %s169 = sphi 0, %s169
      %s171 = sphi 0, %s169
      %s172 = sphi 0, %s171
      %s186 = sphi 0, %s172
      %s190 = sphi 0, %s190
      %s192 = sphi 0, %s190
      %s193 = sphi 0, %s192
      %s207 = sphi 0, %s193
      %s213 = sphi 0, %s215
      %s216 = sphi 0, %s213
      %s217 = sphi 0, %s216
      %s233 = sphi 0, %s217
      %s239 = sphi 0, %s241
      %s242 = sphi 0, %s239
      %s243 = sphi 0, %s242
      %s259 = sphi 0, %s243
    $region4: #{tpu_custom_call.1} parent=1 // loop_header_branch
      %28 = sbr.rel (%p26) target = $region8
    $region5: #{tpu_custom_call.1} parent=1 // loop_body
      %s30 = ssub.s32 %s25, 1
      %s31 = ssub.s32 %s25, 2
      %s32 = sadd.s32 %s25, 1
      %s33 = ssub.s32 %s25, %s32
      %p34 = scmp.eq.s32.totalorder %s33, 0
      %s36 = sadd.s32 %s35, 1
      %s37 = scalar_select %p34, %s35, %s36
      %p40 = pneg %p34
      %p41 = scmp.eq.s32.totalorder %s25, 1
      %p42 = por %p40, %p41
      %p43 = scmp.ne.s32.totalorder %s35, %s38
      %p44 = scmp.eq.s32.totalorder %s25, 0
      %p45 = por %p43, %p44
      %p46 = scmp.ne.s32.totalorder %s35, %s38
      %p47 = scmp.eq.s32.totalorder %s30, 1
      %p48 = por %p46, %p47
      %p49 = scmp.ne.s32.totalorder %s38, %s39
      %p50 = scmp.eq.s32.totalorder %s30, 0
      %p51 = por %p49, %p50
      %p52 = scmp.ne.s32.totalorder %s38, %s39
      %p53 = scmp.eq.s32.totalorder %s31, 1
      %p54 = por %p52, %p53
      %p56 = scmp.ne.s32.totalorder %s39, %s55
      %p57 = scmp.eq.s32.totalorder %s31, 0
      %p58 = por %p56, %p57
      %s59 = ssub.s32 %s25, %s32
      %p60 = scmp.eq.s32.totalorder %s59, 0
      %s62 = sadd.s32 %s61, 1
      %s63 = scalar_select %p60, %s61, %s62
      %p66 = pneg %p60
      %p67 = scmp.eq.s32.totalorder %s25, 1
      %p68 = por %p66, %p67
      %p69 = scmp.ne.s32.totalorder %s61, %s64
      %p70 = scmp.eq.s32.totalorder %s25, 0
      %p71 = por %p69, %p70
      %p72 = scmp.ne.s32.totalorder %s61, %s64
      %p73 = scmp.eq.s32.totalorder %s30, 1
      %p74 = por %p72, %p73
      %p75 = scmp.ne.s32.totalorder %s64, %s65
      %p76 = scmp.eq.s32.totalorder %s30, 0
      %p77 = por %p75, %p76
      %p78 = scmp.ne.s32.totalorder %s64, %s65
      %p79 = scmp.eq.s32.totalorder %s31, 1
      %p80 = por %p78, %p79
      %p82 = scmp.ne.s32.totalorder %s65, %s81
      %p83 = scmp.eq.s32.totalorder %s31, 0
      %p84 = por %p82, %p83
      %s86 = sadd.s32 %s85, 1
      %p89 = scmp.eq.s32.totalorder %s25, 1
      %p90 = scmp.ne.s32.totalorder %s85, %s87
      %p91 = scmp.eq.s32.totalorder %s25, 0
      %p92 = por %p90, %p91
      %p93 = scmp.ne.s32.totalorder %s85, %s87
      %p94 = scmp.eq.s32.totalorder %s30, 1
      %p95 = por %p93, %p94
      %p96 = scmp.ne.s32.totalorder %s87, %s88
      %p97 = scmp.eq.s32.totalorder %s30, 0
      %p98 = por %p96, %p97
      %p99 = scmp.ne.s32.totalorder %s87, %s88
      %p100 = scmp.eq.s32.totalorder %s31, 1
      %p101 = por %p99, %p100
      %p103 = scmp.ne.s32.totalorder %s88, %s102
      %p104 = scmp.eq.s32.totalorder %s31, 0
      %p105 = por %p103, %p104
      %s107 = sadd.s32 %s106, 1
      %p110 = scmp.eq.s32.totalorder %s25, 1
      %p111 = scmp.ne.s32.totalorder %s106, %s108
      %p112 = scmp.eq.s32.totalorder %s25, 0
      %p113 = por %p111, %p112
      %p114 = scmp.ne.s32.totalorder %s106, %s108
      %p115 = scmp.eq.s32.totalorder %s30, 1
      %p116 = por %p114, %p115
      %p117 = scmp.ne.s32.totalorder %s108, %s109
      %p118 = scmp.eq.s32.totalorder %s30, 0
      %p119 = por %p117, %p118
      %p120 = scmp.ne.s32.totalorder %s108, %s109
      %p121 = scmp.eq.s32.totalorder %s31, 1
      %p122 = por %p120, %p121
      %p124 = scmp.ne.s32.totalorder %s109, %s123
      %p125 = scmp.eq.s32.totalorder %s31, 0
      %p126 = por %p124, %p125
      %s128 = sadd.s32 %s127, 1
      %p131 = scmp.eq.s32.totalorder %s25, 1
      %p132 = scmp.ne.s32.totalorder %s127, %s129
      %p133 = scmp.eq.s32.totalorder %s25, 0
      %p134 = por %p132, %p133
      %p135 = scmp.ne.s32.totalorder %s127, %s129
      %p136 = scmp.eq.s32.totalorder %s30, 1
      %p137 = por %p135, %p136
      %p138 = scmp.ne.s32.totalorder %s129, %s130
      %p139 = scmp.eq.s32.totalorder %s30, 0
      %p140 = por %p138, %p139
      %p141 = scmp.ne.s32.totalorder %s129, %s130
      %p142 = scmp.eq.s32.totalorder %s31, 1
      %p143 = por %p141, %p142
      %p145 = scmp.ne.s32.totalorder %s130, %s144
      %p146 = scmp.eq.s32.totalorder %s31, 0
      %p147 = por %p145, %p146
      %s149 = sadd.s32 %s148, 1
      %p152 = scmp.eq.s32.totalorder %s25, 1
      %p153 = scmp.ne.s32.totalorder %s148, %s150
      %p154 = scmp.eq.s32.totalorder %s25, 0
      %p155 = por %p153, %p154
      %p156 = scmp.ne.s32.totalorder %s148, %s150
      %p157 = scmp.eq.s32.totalorder %s30, 1
      %p158 = por %p156, %p157
      %p159 = scmp.ne.s32.totalorder %s150, %s151
      %p160 = scmp.eq.s32.totalorder %s30, 0
      %p161 = por %p159, %p160
      %p162 = scmp.ne.s32.totalorder %s150, %s151
      %p163 = scmp.eq.s32.totalorder %s31, 1
      %p164 = por %p162, %p163
      %p166 = scmp.ne.s32.totalorder %s151, %s165
      %p167 = scmp.eq.s32.totalorder %s31, 0
      %p168 = por %p166, %p167
      %s170 = sadd.s32 %s169, 1
      %p173 = scmp.eq.s32.totalorder %s25, 1
      %p174 = scmp.ne.s32.totalorder %s169, %s171
      %p175 = scmp.eq.s32.totalorder %s25, 0
      %p176 = por %p174, %p175
      %p177 = scmp.ne.s32.totalorder %s169, %s171
      %p178 = scmp.eq.s32.totalorder %s30, 1
      %p179 = por %p177, %p178
      %p180 = scmp.ne.s32.totalorder %s171, %s172
      %p181 = scmp.eq.s32.totalorder %s30, 0
      %p182 = por %p180, %p181
      %p183 = scmp.ne.s32.totalorder %s171, %s172
      %p184 = scmp.eq.s32.totalorder %s31, 1
      %p185 = por %p183, %p184
      %p187 = scmp.ne.s32.totalorder %s172, %s186
      %p188 = scmp.eq.s32.totalorder %s31, 0
      %p189 = por %p187, %p188
      %s191 = sadd.s32 %s190, 1
      %p194 = scmp.eq.s32.totalorder %s25, 1
      %p195 = scmp.ne.s32.totalorder %s190, %s192
      %p196 = scmp.eq.s32.totalorder %s25, 0
      %p197 = por %p195, %p196
      %p198 = scmp.ne.s32.totalorder %s190, %s192
      %p199 = scmp.eq.s32.totalorder %s30, 1
      %p200 = por %p198, %p199
      %p201 = scmp.ne.s32.totalorder %s192, %s193
      %p202 = scmp.eq.s32.totalorder %s30, 0
      %p203 = por %p201, %p202
      %p204 = scmp.ne.s32.totalorder %s192, %s193
      %p205 = scmp.eq.s32.totalorder %s31, 1
      %p206 = por %p204, %p205
      %p208 = scmp.ne.s32.totalorder %s193, %s207
      %p209 = scmp.eq.s32.totalorder %s31, 0
      %p210 = por %p208, %p209
      %s211 = ssub.s32 %s25, %s32
      %p212 = scmp.eq.s32.totalorder %s211, 0
      %s214 = sadd.s32 %s213, 1
      %s215 = scalar_select %p212, %s213, %s214
      %p218 = pneg %p212
      %p219 = scmp.eq.s32.totalorder %s25, 1
      %p220 = por %p218, %p219
      %p221 = scmp.ne.s32.totalorder %s213, %s216
      %p222 = scmp.eq.s32.totalorder %s25, 0
      %p223 = por %p221, %p222
      %p224 = scmp.ne.s32.totalorder %s213, %s216
      %p225 = scmp.eq.s32.totalorder %s30, 1
      %p226 = por %p224, %p225
      %p227 = scmp.ne.s32.totalorder %s216, %s217
      %p228 = scmp.eq.s32.totalorder %s30, 0
      %p229 = por %p227, %p228
      %p230 = scmp.ne.s32.totalorder %s216, %s217
      %p231 = scmp.eq.s32.totalorder %s31, 1
      %p232 = por %p230, %p231
      %p234 = scmp.ne.s32.totalorder %s217, %s233
      %p235 = scmp.eq.s32.totalorder %s31, 0
      %p236 = por %p234, %p235
      %s237 = ssub.s32 %s25, %s32
      %p238 = scmp.eq.s32.totalorder %s237, 0
      %s240 = sadd.s32 %s239, 1
      %s241 = scalar_select %p238, %s239, %s240
      %p244 = pneg %p238
      %p245 = scmp.eq.s32.totalorder %s25, 1
      %p246 = por %p244, %p245
      %p247 = scmp.ne.s32.totalorder %s239, %s242
      %p248 = scmp.eq.s32.totalorder %s25, 0
      %p249 = por %p247, %p248
      %p250 = scmp.ne.s32.totalorder %s239, %s242
      %p251 = scmp.eq.s32.totalorder %s30, 1
      %p252 = por %p250, %p251
      %p253 = scmp.ne.s32.totalorder %s242, %s243
      %p254 = scmp.eq.s32.totalorder %s30, 0
      %p255 = por %p253, %p254
      %p256 = scmp.ne.s32.totalorder %s242, %s243
      %p257 = scmp.eq.s32.totalorder %s31, 1
      %p258 = por %p256, %p257
      %p260 = scmp.ne.s32.totalorder %s243, %s259
      %p261 = scmp.eq.s32.totalorder %s31, 0
      %p262 = por %p260, %p261
      %p263 = scmp.le.s32.totalorder 1, %s25
      %p264 = scmp.lt.s32.totalorder %s25, 3
      %p265 = pnand %p263, %p264
      %p266 = pneg %p265
      // Predicated region
      $region9: #{tpu_custom_call.1} parent=5 // pred_check
        _
      $region10: #{tpu_custom_call.1} parent=5 // pred_check_branch
        %268 = sbr.rel (%p265) target = $region12
      $region11: #{tpu_custom_call.1} parent=5 // pred_region
        %s269 = ssub.s32 %s25, 1
        // Predicated region
        $region13: #{tpu_custom_call.1} parent=11 // pred_check
          %p270 = pneg %p98
        $region14: #{tpu_custom_call.1} parent=11 // pred_check_branch
          %272 = sbr.rel (%p270) target = $region16
        $region15: #{tpu_custom_call.1} parent=11 // pred_region
          _
        $region16: #{tpu_custom_call.1} parent=11 // pred_fallthru
          _
        // Predicated region
        $region17: #{tpu_custom_call.1} parent=11 // pred_check
          %p273 = pneg %p119
        $region18: #{tpu_custom_call.1} parent=11 // pred_check_branch
          %275 = sbr.rel (%p273) target = $region20
        $region19: #{tpu_custom_call.1} parent=11 // pred_region
          _
        $region20: #{tpu_custom_call.1} parent=11 // pred_fallthru
          _
        // Predicated region
        $region21: #{tpu_custom_call.1} parent=11 // pred_check
          %p276 = pneg %p140
        $region22: #{tpu_custom_call.1} parent=11 // pred_check_branch
          %278 = sbr.rel (%p276) target = $region24
        $region23: #{tpu_custom_call.1} parent=11 // pred_region
          %280 = vsyncadd [#allocation3], 0
          %s282 = sshll.u32 %s4, 4
          %s283 = int_to_ptr.hbm [resolvable:$true] %s282
          %s284 = sshll.u32 [#allocation2], 4
          %s285 = int_to_ptr.vmem [resolvable:$true] %s284
          %287 = dma.hbm_to_vmem [thread:$0]  %s283, 128, %s285, [#allocation3]
        $region24: #{tpu_custom_call.1} parent=11 // pred_fallthru
          _
        // Predicated region
        $region25: #{tpu_custom_call.1} parent=11 // pred_check
          %p288 = pneg %p161
        $region26: #{tpu_custom_call.1} parent=11 // pred_check_branch
          %290 = sbr.rel (%p288) target = $region28
        $region27: #{tpu_custom_call.1} parent=11 // pred_region
          %292 = vsyncadd [#allocation6], 0
          %s293 = sshll.u32 %s5, 4
          %s294 = int_to_ptr.hbm [resolvable:$true] %s293
          %s295 = sshll.u32 [#allocation5], 4
          %s296 = int_to_ptr.vmem [resolvable:$true] %s295
          %301 = dma.hbm_to_vmem [thread:$0]  %s294, 512, %s296, [#allocation6], 128, 128, 8
        $region28: #{tpu_custom_call.1} parent=11 // pred_fallthru
          _
        // Predicated region
        $region29: #{tpu_custom_call.1} parent=11 // pred_check
          %p302 = pneg %p182
        $region30: #{tpu_custom_call.1} parent=11 // pred_check_branch
          %304 = sbr.rel (%p302) target = $region32
        $region31: #{tpu_custom_call.1} parent=11 // pred_region
          %306 = vsyncadd [#allocation6], 0
          %s307 = sshll.u32 %s6, 4
          %s308 = int_to_ptr.hbm [resolvable:$true] %s307
          %s309 = sshll.u32 [#allocation7], 4
          %s310 = int_to_ptr.vmem [resolvable:$true] %s309
          %315 = dma.hbm_to_vmem [thread:$0]  %s308, 4096, %s310, [#allocation6], 128, 128, 8
        $region32: #{tpu_custom_call.1} parent=11 // pred_fallthru
          _
        // Predicated region
        $region33: #{tpu_custom_call.1} parent=11 // pred_check
          %p316 = pneg %p203
        $region34: #{tpu_custom_call.1} parent=11 // pred_check_branch
          %318 = sbr.rel (%p316) target = $region36
        $region35: #{tpu_custom_call.1} parent=11 // pred_region
          %320 = vsyncadd [#allocation9], 0
          %s322 = sshll.u32 %s7, 4
          %s323 = int_to_ptr.hbm [resolvable:$true] %s322
          %s324 = sshll.u32 [#allocation8], 4
          %s325 = int_to_ptr.vmem [resolvable:$true] %s324
          %327 = dma.hbm_to_vmem [thread:$0]  %s323, 128, %s325, [#allocation9]
        $region36: #{tpu_custom_call.1} parent=11 // pred_fallthru
          _
      $region12: #{tpu_custom_call.1} parent=5 // pred_fallthru
        _
      %p328 = scmp.lt.s32.totalorder %s25, 2
      // Predicated region
      $region37: #{tpu_custom_call.1} parent=5 // pred_check
        %p329 = pneg %p328
      $region38: #{tpu_custom_call.1} parent=5 // pred_check_branch
        %331 = sbr.rel (%p329) target = $region40
      $region39: #{tpu_custom_call.1} parent=5 // pred_region
        // Predicated region
        $region41: #{tpu_custom_call.1} parent=39 // pred_check
          %p332 = pneg %p45
        $region42: #{tpu_custom_call.1} parent=39 // pred_check_branch
          %334 = sbr.rel (%p332) target = $region44
        $region43: #{tpu_custom_call.1} parent=39 // pred_region
          %s335 = smul.u32 16, %s25
          %p336 = scmp.lt.s32.totalorder %s335, 31
          %s337 = scalar_select %p336, %s335, 31
          %s338 = smul.addr %s337, 4
          %s339 = scalar_lea.vmem %s0, %s338
          %s340 = smul.u32 16, %s25
        $region44: #{tpu_custom_call.1} parent=39 // pred_fallthru
          _
        // Predicated region
        $region45: #{tpu_custom_call.1} parent=39 // pred_check
          %p341 = pneg %p71
        $region46: #{tpu_custom_call.1} parent=39 // pred_check_branch
          %343 = sbr.rel (%p341) target = $region48
        $region47: #{tpu_custom_call.1} parent=39 // pred_region
          %s344 = smul.u32 16, %s25
          %p345 = scmp.lt.s32.totalorder %s344, 31
          %s346 = scalar_select %p345, %s344, 31
          %s347 = smul.addr %s346, 4
          %s348 = scalar_lea.vmem %s1, %s347
          %s349 = smul.u32 16, %s25
        $region48: #{tpu_custom_call.1} parent=39 // pred_fallthru
          _
      $region40: #{tpu_custom_call.1} parent=5 // pred_fallthru
        _
      %p350 = scmp.le.s32.totalorder 1, %s25
      %p351 = scmp.lt.s32.totalorder %s25, 3
      %p352 = pnand %p350, %p351
      %p353 = pneg %p352
      // Predicated region
      $region49: #{tpu_custom_call.1} parent=5 // pred_check
        _
      $region50: #{tpu_custom_call.1} parent=5 // pred_check_branch
        %355 = sbr.rel (%p352) target = $region52
      $region51: #{tpu_custom_call.1} parent=5 // pred_region
        %s356 = ssub.s32 %s25, 1
        // Predicated region
        $region53: #{tpu_custom_call.1} parent=51 // pred_check
          %p357 = pneg %p140
        $region54: #{tpu_custom_call.1} parent=51 // pred_check_branch
          %359 = sbr.rel (%p357) target = $region56
        $region55: #{tpu_custom_call.1} parent=51 // pred_region
          %361 = dma.done [#allocation3], 128
        $region56: #{tpu_custom_call.1} parent=51 // pred_fallthru
          _
        // Predicated region
        $region57: #{tpu_custom_call.1} parent=51 // pred_check
          %p362 = pneg %p161
        $region58: #{tpu_custom_call.1} parent=51 // pred_check_branch
          %364 = sbr.rel (%p362) target = $region60
        $region59: #{tpu_custom_call.1} parent=51 // pred_region
          %366 = dma.done [#allocation6], 512
        $region60: #{tpu_custom_call.1} parent=51 // pred_fallthru
          _
        // Predicated region
        $region61: #{tpu_custom_call.1} parent=51 // pred_check
          %p367 = pneg %p182
        $region62: #{tpu_custom_call.1} parent=51 // pred_check_branch
          %369 = sbr.rel (%p367) target = $region64
        $region63: #{tpu_custom_call.1} parent=51 // pred_region
          %371 = dma.done [#allocation6], 4096
        $region64: #{tpu_custom_call.1} parent=51 // pred_fallthru
          _
        // Predicated region
        $region65: #{tpu_custom_call.1} parent=51 // pred_check
          %p372 = pneg %p203
        $region66: #{tpu_custom_call.1} parent=51 // pred_check_branch
          %374 = sbr.rel (%p372) target = $region68
        $region67: #{tpu_custom_call.1} parent=51 // pred_region
          %376 = dma.done [#allocation9], 128
        $region68: #{tpu_custom_call.1} parent=51 // pred_fallthru
          _
        %s377 = smul.u32 16, %s30
        %p378 = scmp.lt.s32.totalorder %s377, 31
        %s379 = scalar_select %p378, %s377, 31
        %s380 = smul.addr %s379, 4
        %s381 = scalar_lea.vmem %s0, %s380
        %p382 = pneg %p51
        %p383 = pneg %p48
        %s384 = smul.u32 16, %s30
        %p385 = scmp.lt.s32.totalorder %s384, 31
        %s386 = scalar_select %p385, %s384, 31
        %s387 = smul.addr %s386, 4
        %s388 = scalar_lea.vmem %s1, %s387
        %p389 = pneg %p77
        %p390 = pneg %p74
        %p391 = pneg %p98
        %p392 = pneg %p95
        %p393 = pneg %p119
        %p394 = pneg %p116
        %p395 = pneg %p140
        %p396 = pneg %p137
        %p397 = pneg %p161
        %p398 = pneg %p158
        %p399 = pneg %p182
        %p400 = pneg %p179
        %p401 = pneg %p203
        %p402 = pneg %p200
        %p403 = pneg %p229
        %p404 = pneg %p226
        %s405 = sand.u32 %s216, 1
        %s406 = scalar_lea.sflag [#allocation4], %s405
        %s407 = sand.u32 %s216, 1
        %s408 = smul.addr %s407, 128
        %s409 = scalar_lea.vmem [#allocation10], %s408
        %p410 = pneg %p255
        %p411 = pneg %p252
        %s412 = sand.u32 %s242, 1
        %s413 = scalar_lea.sflag [#allocation12], %s412
        %s414 = sand.u32 %s242, 1
        %s415 = smul.addr %s414, 128
        %s416 = scalar_lea.vmem [#allocation11], %s415
        %s417 = smul.u32 16, %s30
        %p418 = scmp.lt.s32.totalorder %s417, 31
        %s419 = scalar_select %p418, %s417, 31
        %s420 = smul.addr %s419, 4
        %s421 = scalar_lea.vmem %s0, %s420
        %s422 = smul.u32 16, %s30
        %s423 = smul.u32 16, %s30
        %p424 = scmp.lt.s32.totalorder %s423, 31
        %s425 = scalar_select %p424, %s423, 31
        %s426 = smul.addr %s425, 4
        %s427 = scalar_lea.vmem %s1, %s426
        %s428 = smul.u32 16, %s30
        %s429 = smul.u32 16, %s30
        %s430 = smul.u32 16, %s30
        %v432 = vld [vmem:[%s421] sm:$0xf]
        %v433 = vld [vmem:[%s421 + $0x4] sm:$0xf]
        %v434 = vld [vmem:[%s421 + $0x8] sm:$0xf]
        %v435 = vld [vmem:[%s421 + $0xc] sm:$0xf]
        %v436 = vld [vmem:[%s421 + $0x10] sm:$0xf]
        %v437 = vld [vmem:[%s421 + $0x14] sm:$0xf]
        %v438 = vld [vmem:[%s421 + $0x18] sm:$0xf]
        %v439 = vld [vmem:[%s421 + $0x1c] sm:$0xf]
        %v440 = vld [vmem:[%s421 + $0x20] sm:$0xf]
        %v441 = vld [vmem:[%s421 + $0x24] sm:$0xf]
        %v442 = vld [vmem:[%s421 + $0x28] sm:$0xf]
        %v443 = vld [vmem:[%s421 + $0x2c] sm:$0xf]
        %v444 = vld [vmem:[%s421 + $0x30] sm:$0xf]
        %v445 = vld [vmem:[%s421 + $0x34] sm:$0xf]
        %v446 = vld [vmem:[%s421 + $0x38] sm:$0xf]
        %v447 = vld [vmem:[%s421 + $0x3c] sm:$0xf]
        %v448 = vld [vmem:[%s2] sm:$0xff]
        %v449 = vld [vmem:[%s2 + $0x8] sm:$0xff]
        %v450 = vld [vmem:[%s2 + $0x10] sm:$0xff]
        %v451 = vld [vmem:[%s2 + $0x18] sm:$0xff]
        %v452 = vld [vmem:[%s2 + $0x20] sm:$0xff]
        %v453 = vld [vmem:[%s2 + $0x28] sm:$0xff]
        %v454 = vld [vmem:[%s2 + $0x30] sm:$0xff]
        %v455 = vld [vmem:[%s2 + $0x38] sm:$0xff]
        %v456 = vld [vmem:[%s3] sm:$0xff]
        %v457 = vld [vmem:[%s3 + $0x8] sm:$0xff]
        %v458 = vld [vmem:[%s3 + $0x10] sm:$0xff]
        %v459 = vld [vmem:[%s3 + $0x18] sm:$0xff]
        %v460 = vld [vmem:[%s3 + $0x20] sm:$0xff]
        %v461 = vld [vmem:[%s3 + $0x28] sm:$0xff]
        %v462 = vld [vmem:[%s3 + $0x30] sm:$0xff]
        %v463 = vld [vmem:[%s3 + $0x38] sm:$0xff]
        %v464 = vld [vmem:[%s3 + $0x40] sm:$0xff]
        %v465 = vld [vmem:[%s3 + $0x48] sm:$0xff]
        %v466 = vld [vmem:[%s3 + $0x50] sm:$0xff]
        %v467 = vld [vmem:[%s3 + $0x58] sm:$0xff]
        %v468 = vld [vmem:[%s3 + $0x60] sm:$0xff]
        %v469 = vld [vmem:[%s3 + $0x68] sm:$0xff]
        %v470 = vld [vmem:[%s3 + $0x70] sm:$0xff]
        %v471 = vld [vmem:[%s3 + $0x78] sm:$0xff]
        %v472 = vld [vmem:[%s3 + $0x80] sm:$0xff]
        %v473 = vld [vmem:[%s3 + $0x88] sm:$0xff]
        %v474 = vld [vmem:[%s3 + $0x90] sm:$0xff]
        %v475 = vld [vmem:[%s3 + $0x98] sm:$0xff]
        %v476 = vld [vmem:[%s3 + $0xa0] sm:$0xff]
        %v477 = vld [vmem:[%s3 + $0xa8] sm:$0xff]
        %v478 = vld [vmem:[%s3 + $0xb0] sm:$0xff]
        %v479 = vld [vmem:[%s3 + $0xb8] sm:$0xff]
        %v480 = vld [vmem:[%s3 + $0xc0] sm:$0xff]
        %v481 = vld [vmem:[%s3 + $0xc8] sm:$0xff]
        %v482 = vld [vmem:[%s3 + $0xd0] sm:$0xff]
        %v483 = vld [vmem:[%s3 + $0xd8] sm:$0xff]
        %v484 = vld [vmem:[%s3 + $0xe0] sm:$0xff]
        %v485 = vld [vmem:[%s3 + $0xe8] sm:$0xff]
        %v486 = vld [vmem:[%s3 + $0xf0] sm:$0xff]
        %v487 = vld [vmem:[%s3 + $0xf8] sm:$0xff]
        %v488 = vld [vmem:[#allocation2] sm:$0xff]
        %v490 = vperm.slane %v488, 0
        %v491 = vperm.slane %v488, 4
        %v494 = vperm.slane %v490, 0
        %v495 = vperm.slane %v491, 0
        %v512 = vunpack.c.l.b16 %v432
        %v513 = vunpack.c.l.b16 %v433
        %v514 = vunpack.c.l.b16 %v434
        %v515 = vunpack.c.l.b16 %v435
        %v516 = vunpack.c.l.b16 %v436
        %v517 = vunpack.c.l.b16 %v437
        %v518 = vunpack.c.l.b16 %v438
        %v519 = vunpack.c.l.b16 %v439
        %v520 = vunpack.c.l.b16 %v440
        %v521 = vunpack.c.l.b16 %v441
        %v522 = vunpack.c.l.b16 %v442
        %v523 = vunpack.c.l.b16 %v443
        %v524 = vunpack.c.l.b16 %v444
        %v525 = vunpack.c.l.b16 %v445
        %v526 = vunpack.c.l.b16 %v446
        %v527 = vunpack.c.l.b16 %v447
        %v528 = vpack.c.b16 %v513, %v512
        %v529 = vpack.c.b16 %v515, %v514
        %v530 = vpack.c.b16 %v517, %v516
        %v531 = vpack.c.b16 %v519, %v518
        %v532 = vpack.c.b16 %v521, %v520
        %v533 = vpack.c.b16 %v523, %v522
        %v534 = vpack.c.b16 %v525, %v524
        %v535 = vpack.c.b16 %v527, %v526
        %v544 = vunpack.c.l.b16 %v448
        %v545 = vunpack.c.h.b16 %v448
        %v546 = vunpack.c.l.b16 %v449
        %v547 = vunpack.c.h.b16 %v449
        %v548 = vunpack.c.l.b16 %v450
        %v549 = vunpack.c.h.b16 %v450
        %v550 = vunpack.c.l.b16 %v451
        %v551 = vunpack.c.h.b16 %v451
        %v552 = vunpack.c.l.b16 %v452
        %v553 = vunpack.c.h.b16 %v452
        %v554 = vunpack.c.l.b16 %v453
        %v555 = vunpack.c.h.b16 %v453
        %v556 = vunpack.c.l.b16 %v454
        %v557 = vunpack.c.h.b16 %v454
        %v558 = vunpack.c.l.b16 %v455
        %v559 = vunpack.c.h.b16 %v455
        %v560 = vpack.c.b16 %v546, %v544
        %v561 = vpack.c.b16 %v547, %v545
        %v562 = vpack.c.b16 %v550, %v548
        %v563 = vpack.c.b16 %v551, %v549
        %v564 = vpack.c.b16 %v554, %v552
        %v565 = vpack.c.b16 %v555, %v553
        %v566 = vpack.c.b16 %v558, %v556
        %v567 = vpack.c.b16 %v559, %v557
        %vm576 = vcmask 523264
        %v578 = vsel %vm576, %v528, 0
        %v581 = vsel %vm576, %v529, 0
        %v584 = vsel %vm576, %v530, 0
        %v587 = vsel %vm576, %v531, 0
        %v590 = vsel %vm576, %v532, 0
        %v593 = vsel %vm576, %v533, 0
        %v596 = vsel %vm576, %v534, 0
        %v599 = vsel %vm576, %v535, 0
        %601 = vmatpush.bf16.msra.mxu0 0
        %602 = vmatpush.bf16.msra.mxu0 0
        %603 = vmatpush.bf16.msra.mxu0 0
        %604 = vmatpush.bf16.msra.mxu0 0
        %605 = vmatpush.bf16.msra.mxu0 %v566
        %606 = vmatpush.bf16.msra.mxu0 %v564
        %607 = vmatpush.bf16.msra.mxu0 %v562
        %608 = vmatpush.bf16.msra.mxu0 %v560
        %609 = vmatmul.bf16.gmra.mxu0 %v578
        %v610 = vpop.f32.mrf.mxu0
        %v611 = vadd.f32 %v494, %v610
        %v612 = vpop.f32.mrf.mxu0
        %v613 = vadd.f32 %v494, %v612
        %614 = vmatmul.bf16.gmra.mxu0 %v581
        %v615 = vpop.f32.mrf.mxu0
        %v616 = vadd.f32 %v494, %v615
        %v617 = vpop.f32.mrf.mxu0
        %v618 = vadd.f32 %v494, %v617
        %619 = vmatmul.bf16.gmra.mxu0 %v584
        %v620 = vpop.f32.mrf.mxu0
        %v621 = vadd.f32 %v494, %v620
        %v622 = vpop.f32.mrf.mxu0
        %v623 = vadd.f32 %v494, %v622
        %624 = vmatmul.bf16.gmra.mxu0 %v587
        %v625 = vpop.f32.mrf.mxu0
        %v626 = vadd.f32 %v494, %v625
        %v627 = vpop.f32.mrf.mxu0
        %v628 = vadd.f32 %v494, %v627
        %629 = vmatmul.bf16.gmra.mxu0 %v590
        %v630 = vpop.f32.mrf.mxu0
        %v631 = vadd.f32 %v494, %v630
        %v632 = vpop.f32.mrf.mxu0
        %v633 = vadd.f32 %v494, %v632
        %634 = vmatmul.bf16.gmra.mxu0 %v593
        %v635 = vpop.f32.mrf.mxu0
        %v636 = vadd.f32 %v494, %v635
        %v637 = vpop.f32.mrf.mxu0
        %v638 = vadd.f32 %v494, %v637
        %639 = vmatmul.bf16.gmra.mxu0 %v596
        %v640 = vpop.f32.mrf.mxu0
        %v641 = vadd.f32 %v494, %v640
        %v642 = vpop.f32.mrf.mxu0
        %v643 = vadd.f32 %v494, %v642
        %644 = vmatmul.bf16.gmra.mxu0 %v599
        %v645 = vpop.f32.mrf.mxu0
        %v646 = vadd.f32 %v494, %v645
        %v647 = vpop.f32.mrf.mxu0
        %v648 = vadd.f32 %v494, %v647
        %649 = vdwg.mxu0
        %650 = vmatpush.bf16.msra.mxu0 0
        %651 = vmatpush.bf16.msra.mxu0 0
        %652 = vmatpush.bf16.msra.mxu0 0
        %653 = vmatpush.bf16.msra.mxu0 0
        %654 = vmatpush.bf16.msra.mxu0 %v567
        %655 = vmatpush.bf16.msra.mxu0 %v565
        %656 = vmatpush.bf16.msra.mxu0 %v563
        %657 = vmatpush.bf16.msra.mxu0 %v561
        %658 = vmatmul.bf16.gmra.mxu0 %v578
        %v659 = vpop.f32.mrf.mxu0
        %v660 = vadd.f32 %v495, %v659
        %v661 = vpop.f32.mrf.mxu0
        %v662 = vadd.f32 %v495, %v661
        %663 = vmatmul.bf16.gmra.mxu0 %v581
        %v664 = vpop.f32.mrf.mxu0
        %v665 = vadd.f32 %v495, %v664
        %v666 = vpop.f32.mrf.mxu0
        %v667 = vadd.f32 %v495, %v666
        %668 = vmatmul.bf16.gmra.mxu0 %v584
        %v669 = vpop.f32.mrf.mxu0
        %v670 = vadd.f32 %v495, %v669
        %v671 = vpop.f32.mrf.mxu0
        %v672 = vadd.f32 %v495, %v671
        %673 = vmatmul.bf16.gmra.mxu0 %v587
        %v674 = vpop.f32.mrf.mxu0
        %v675 = vadd.f32 %v495, %v674
        %v676 = vpop.f32.mrf.mxu0
        %v677 = vadd.f32 %v495, %v676
        %678 = vmatmul.bf16.gmra.mxu0 %v590
        %v679 = vpop.f32.mrf.mxu0
        %v680 = vadd.f32 %v495, %v679
        %v681 = vpop.f32.mrf.mxu0
        %v682 = vadd.f32 %v495, %v681
        %683 = vmatmul.bf16.gmra.mxu0 %v593
        %v684 = vpop.f32.mrf.mxu0
        %v685 = vadd.f32 %v495, %v684
        %v686 = vpop.f32.mrf.mxu0
        %v687 = vadd.f32 %v495, %v686
        %688 = vmatmul.bf16.gmra.mxu0 %v596
        %v689 = vpop.f32.mrf.mxu0
        %v690 = vadd.f32 %v495, %v689
        %v691 = vpop.f32.mrf.mxu0
        %v692 = vadd.f32 %v495, %v691
        %693 = vmatmul.bf16.gmra.mxu0 %v599
        %v694 = vpop.f32.mrf.mxu0
        %v695 = vadd.f32 %v495, %v694
        %v696 = vpop.f32.mrf.mxu0
        %v697 = vadd.f32 %v495, %v696
        %698 = vdwg.mxu0
        %v699 = vmul.f32 %v611, 0.5
        %v700 = vmul.f32 %v660, 0.5
        %v701 = vmul.f32 %v613, 0.5
        %v702 = vmul.f32 %v662, 0.5
        %v703 = vmul.f32 %v616, 0.5
        %v704 = vmul.f32 %v665, 0.5
        %v705 = vmul.f32 %v618, 0.5
        %v706 = vmul.f32 %v667, 0.5
        %v707 = vmul.f32 %v621, 0.5
        %v708 = vmul.f32 %v670, 0.5
        %v709 = vmul.f32 %v623, 0.5
        %v710 = vmul.f32 %v672, 0.5
        %v711 = vmul.f32 %v626, 0.5
        %v712 = vmul.f32 %v675, 0.5
        %v713 = vmul.f32 %v628, 0.5
        %v714 = vmul.f32 %v677, 0.5
        %v715 = vmul.f32 %v631, 0.5
        %v716 = vmul.f32 %v680, 0.5
        %v717 = vmul.f32 %v633, 0.5
        %v718 = vmul.f32 %v682, 0.5
        %v719 = vmul.f32 %v636, 0.5
        %v720 = vmul.f32 %v685, 0.5
        %v721 = vmul.f32 %v638, 0.5
        %v722 = vmul.f32 %v687, 0.5
        %v723 = vmul.f32 %v641, 0.5
        %v724 = vmul.f32 %v690, 0.5
        %v725 = vmul.f32 %v643, 0.5
        %v726 = vmul.f32 %v692, 0.5
        %v727 = vmul.f32 %v646, 0.5
        %v728 = vmul.f32 %v695, 0.5
        %v729 = vmul.f32 %v648, 0.5
        %v730 = vmul.f32 %v697, 0.5
        %v731 = vmul.f32 %v611, 0.70710677
        %v732 = vmul.f32 %v660, 0.70710677
        %v733 = vmul.f32 %v613, 0.70710677
        %v734 = vmul.f32 %v662, 0.70710677
        %v735 = vmul.f32 %v616, 0.70710677
        %v736 = vmul.f32 %v665, 0.70710677
        %v737 = vmul.f32 %v618, 0.70710677
        %v738 = vmul.f32 %v667, 0.70710677
        %v739 = vmul.f32 %v621, 0.70710677
        %v740 = vmul.f32 %v670, 0.70710677
        %v741 = vmul.f32 %v623, 0.70710677
        %v742 = vmul.f32 %v672, 0.70710677
        %v743 = vmul.f32 %v626, 0.70710677
        %v744 = vmul.f32 %v675, 0.70710677
        %v745 = vmul.f32 %v628, 0.70710677
        %v746 = vmul.f32 %v677, 0.70710677
        %v747 = vmul.f32 %v631, 0.70710677
        %v748 = vmul.f32 %v680, 0.70710677
        %v749 = vmul.f32 %v633, 0.70710677
        %v750 = vmul.f32 %v682, 0.70710677
        %v751 = vmul.f32 %v636, 0.70710677
        %v752 = vmul.f32 %v685, 0.70710677
        %v753 = vmul.f32 %v638, 0.70710677
        %v754 = vmul.f32 %v687, 0.70710677
        %v755 = vmul.f32 %v641, 0.70710677
        %v756 = vmul.f32 %v690, 0.70710677
        %v757 = vmul.f32 %v643, 0.70710677
        %v758 = vmul.f32 %v692, 0.70710677
        %v759 = vmul.f32 %v646, 0.70710677
        %v760 = vmul.f32 %v695, 0.70710677
        %v761 = vmul.f32 %v648, 0.70710677
        %v762 = vmul.f32 %v697, 0.70710677
        %vm763 = vcmp.lt.f32.partialorder %v731, 0.0
        %vm764 = vcmp.lt.f32.partialorder %v732, 0.0
        %vm765 = vcmp.lt.f32.partialorder %v733, 0.0
        %vm766 = vcmp.lt.f32.partialorder %v734, 0.0
        %vm767 = vcmp.lt.f32.partialorder %v735, 0.0
        %vm768 = vcmp.lt.f32.partialorder %v736, 0.0
        %vm769 = vcmp.lt.f32.partialorder %v737, 0.0
        %vm770 = vcmp.lt.f32.partialorder %v738, 0.0
        %vm771 = vcmp.lt.f32.partialorder %v739, 0.0
        %vm772 = vcmp.lt.f32.partialorder %v740, 0.0
        %vm773 = vcmp.lt.f32.partialorder %v741, 0.0
        %vm774 = vcmp.lt.f32.partialorder %v742, 0.0
        %vm775 = vcmp.lt.f32.partialorder %v743, 0.0
        %vm776 = vcmp.lt.f32.partialorder %v744, 0.0
        %vm777 = vcmp.lt.f32.partialorder %v745, 0.0
        %vm778 = vcmp.lt.f32.partialorder %v746, 0.0
        %vm779 = vcmp.lt.f32.partialorder %v747, 0.0
        %vm780 = vcmp.lt.f32.partialorder %v748, 0.0
        %vm781 = vcmp.lt.f32.partialorder %v749, 0.0
        %vm782 = vcmp.lt.f32.partialorder %v750, 0.0
        %vm783 = vcmp.lt.f32.partialorder %v751, 0.0
        %vm784 = vcmp.lt.f32.partialorder %v752, 0.0
        %vm785 = vcmp.lt.f32.partialorder %v753, 0.0
        %vm786 = vcmp.lt.f32.partialorder %v754, 0.0
        %vm787 = vcmp.lt.f32.partialorder %v755, 0.0
        %vm788 = vcmp.lt.f32.partialorder %v756, 0.0
        %vm789 = vcmp.lt.f32.partialorder %v757, 0.0
        %vm790 = vcmp.lt.f32.partialorder %v758, 0.0
        %vm791 = vcmp.lt.f32.partialorder %v759, 0.0
        %vm792 = vcmp.lt.f32.partialorder %v760, 0.0
        %vm793 = vcmp.lt.f32.partialorder %v761, 0.0
        %vm794 = vcmp.lt.f32.partialorder %v762, 0.0
        %v795 = vsel %vm763, -1.0, 1.0
        %v796 = vsel %vm764, -1.0, 1.0
        %v797 = vsel %vm765, -1.0, 1.0
        %v798 = vsel %vm766, -1.0, 1.0
        %v799 = vsel %vm767, -1.0, 1.0
        %v800 = vsel %vm768, -1.0, 1.0
        %v801 = vsel %vm769, -1.0, 1.0
        %v802 = vsel %vm770, -1.0, 1.0
        %v803 = vsel %vm771, -1.0, 1.0
        %v804 = vsel %vm772, -1.0, 1.0
        %v805 = vsel %vm773, -1.0, 1.0
        %v806 = vsel %vm774, -1.0, 1.0
        %v807 = vsel %vm775, -1.0, 1.0
        %v808 = vsel %vm776, -1.0, 1.0
        %v809 = vsel %vm777, -1.0, 1.0
        %v810 = vsel %vm778, -1.0, 1.0
        %v811 = vsel %vm779, -1.0, 1.0
        %v812 = vsel %vm780, -1.0, 1.0
        %v813 = vsel %vm781, -1.0, 1.0
        %v814 = vsel %vm782, -1.0, 1.0
        %v815 = vsel %vm783, -1.0, 1.0
        %v816 = vsel %vm784, -1.0, 1.0
        %v817 = vsel %vm785, -1.0, 1.0
        %v818 = vsel %vm786, -1.0, 1.0
        %v819 = vsel %vm787, -1.0, 1.0
        %v820 = vsel %vm788, -1.0, 1.0
        %v821 = vsel %vm789, -1.0, 1.0
        %v822 = vsel %vm790, -1.0, 1.0
        %v823 = vsel %vm791, -1.0, 1.0
        %v824 = vsel %vm792, -1.0, 1.0
        %v825 = vsel %vm793, -1.0, 1.0
        %v826 = vsel %vm794, -1.0, 1.0
        %v827 = vand.u32 2147483647, %v731
        %v828 = vand.u32 2147483647, %v732
        %v829 = vand.u32 2147483647, %v733
        %v830 = vand.u32 2147483647, %v734
        %v831 = vand.u32 2147483647, %v735
        %v832 = vand.u32 2147483647, %v736
        %v833 = vand.u32 2147483647, %v737
        %v834 = vand.u32 2147483647, %v738
        %v835 = vand.u32 2147483647, %v739
        %v836 = vand.u32 2147483647, %v740
        %v837 = vand.u32 2147483647, %v741
        %v838 = vand.u32 2147483647, %v742
        %v839 = vand.u32 2147483647, %v743
        %v840 = vand.u32 2147483647, %v744
        %v841 = vand.u32 2147483647, %v745
        %v842 = vand.u32 2147483647, %v746
        %v843 = vand.u32 2147483647, %v747
        %v844 = vand.u32 2147483647, %v748
        %v845 = vand.u32 2147483647, %v749
        %v846 = vand.u32 2147483647, %v750
        %v847 = vand.u32 2147483647, %v751
        %v848 = vand.u32 2147483647, %v752
        %v849 = vand.u32 2147483647, %v753
        %v850 = vand.u32 2147483647, %v754
        %v851 = vand.u32 2147483647, %v755
        %v852 = vand.u32 2147483647, %v756
        %v853 = vand.u32 2147483647, %v757
        %v854 = vand.u32 2147483647, %v758
        %v855 = vand.u32 2147483647, %v759
        %v856 = vand.u32 2147483647, %v760
        %v857 = vand.u32 2147483647, %v761
        %v858 = vand.u32 2147483647, %v762
        %v859 = vmul.f32 %v827, 0.3275911
        %v860 = vmul.f32 %v828, 0.3275911
        %v861 = vmul.f32 %v829, 0.3275911
        %v862 = vmul.f32 %v830, 0.3275911
        %v863 = vmul.f32 %v831, 0.3275911
        %v864 = vmul.f32 %v832, 0.3275911
        %v865 = vmul.f32 %v833, 0.3275911
        %v866 = vmul.f32 %v834, 0.3275911
        %v867 = vmul.f32 %v835, 0.3275911
        %v868 = vmul.f32 %v836, 0.3275911
        %v869 = vmul.f32 %v837, 0.3275911
        %v870 = vmul.f32 %v838, 0.3275911
        %v871 = vmul.f32 %v839, 0.3275911
        %v872 = vmul.f32 %v840, 0.3275911
        %v873 = vmul.f32 %v841, 0.3275911
        %v874 = vmul.f32 %v842, 0.3275911
        %v875 = vmul.f32 %v843, 0.3275911
        %v876 = vmul.f32 %v844, 0.3275911
        %v877 = vmul.f32 %v845, 0.3275911
        %v878 = vmul.f32 %v846, 0.3275911
        %v879 = vmul.f32 %v847, 0.3275911
        %v880 = vmul.f32 %v848, 0.3275911
        %v881 = vmul.f32 %v849, 0.3275911
        %v882 = vmul.f32 %v850, 0.3275911
        %v883 = vmul.f32 %v851, 0.3275911
        %v884 = vmul.f32 %v852, 0.3275911
        %v885 = vmul.f32 %v853, 0.3275911
        %v886 = vmul.f32 %v854, 0.3275911
        %v887 = vmul.f32 %v855, 0.3275911
        %v888 = vmul.f32 %v856, 0.3275911
        %v889 = vmul.f32 %v857, 0.3275911
        %v890 = vmul.f32 %v858, 0.3275911
        %v891 = vadd.f32 %v859, 1.0
        %v892 = vadd.f32 %v860, 1.0
        %v893 = vadd.f32 %v861, 1.0
        %v894 = vadd.f32 %v862, 1.0
        %v895 = vadd.f32 %v863, 1.0
        %v896 = vadd.f32 %v864, 1.0
        %v897 = vadd.f32 %v865, 1.0
        %v898 = vadd.f32 %v866, 1.0
        %v899 = vadd.f32 %v867, 1.0
        %v900 = vadd.f32 %v868, 1.0
        %v901 = vadd.f32 %v869, 1.0
        %v902 = vadd.f32 %v870, 1.0
        %v903 = vadd.f32 %v871, 1.0
        %v904 = vadd.f32 %v872, 1.0
        %v905 = vadd.f32 %v873, 1.0
        %v906 = vadd.f32 %v874, 1.0
        %v907 = vadd.f32 %v875, 1.0
        %v908 = vadd.f32 %v876, 1.0
        %v909 = vadd.f32 %v877, 1.0
        %v910 = vadd.f32 %v878, 1.0
        %v911 = vadd.f32 %v879, 1.0
        %v912 = vadd.f32 %v880, 1.0
        %v913 = vadd.f32 %v881, 1.0
        %v914 = vadd.f32 %v882, 1.0
        %v915 = vadd.f32 %v883, 1.0
        %v916 = vadd.f32 %v884, 1.0
        %v917 = vadd.f32 %v885, 1.0
        %v918 = vadd.f32 %v886, 1.0
        %v919 = vadd.f32 %v887, 1.0
        %v920 = vadd.f32 %v888, 1.0
        %v921 = vadd.f32 %v889, 1.0
        %v922 = vadd.f32 %v890, 1.0
        %v923 = vrcp.pop %v891
        %v924 = vmul.f32 %v891, %v923
        %v925 = vsub.f32 1.0, %v924
        %v926 = vmul.f32 %v923, %v925
        %v927 = vadd.f32 %v923, %v926
        %vm928 = vweird.f32 %v891
        %vm929 = vweird.f32 %v923
        %vm930 = vmor %vm928, %vm929
        %v931 = vsel %vm930, %v923, %v927
        %v932 = vand.u32 2147483647, %v891
        %vm933 = vcmp.eq.f32.partialorder %v932, 8.507059e+37
        %v934 = vand.u32 %v891, 2147483648
        %v935 = vor.u32 1.1754944e-38, %v934
        %v936 = vsel %vm933, %v935, %v931
        %v937 = vmul.f32 1.0, %v936
        %v938 = vrcp.pop %v892
        %v939 = vmul.f32 %v892, %v938
        %v940 = vsub.f32 1.0, %v939
        %v941 = vmul.f32 %v938, %v940
        %v942 = vadd.f32 %v938, %v941
        %vm943 = vweird.f32 %v892
        %vm944 = vweird.f32 %v938
        %vm945 = vmor %vm943, %vm944
        %v946 = vsel %vm945, %v938, %v942
        %v947 = vand.u32 2147483647, %v892
        %vm948 = vcmp.eq.f32.partialorder %v947, 8.507059e+37
        %v949 = vand.u32 %v892, 2147483648
        %v950 = vor.u32 1.1754944e-38, %v949
        %v951 = vsel %vm948, %v950, %v946
        %v952 = vmul.f32 1.0, %v951
        %v953 = vrcp.pop %v893
        %v954 = vmul.f32 %v893, %v953
        %v955 = vsub.f32 1.0, %v954
        %v956 = vmul.f32 %v953, %v955
        %v957 = vadd.f32 %v953, %v956
        %vm958 = vweird.f32 %v893
        %vm959 = vweird.f32 %v953
        %vm960 = vmor %vm958, %vm959
        %v961 = vsel %vm960, %v953, %v957
        %v962 = vand.u32 2147483647, %v893
        %vm963 = vcmp.eq.f32.partialorder %v962, 8.507059e+37
        %v964 = vand.u32 %v893, 2147483648
        %v965 = vor.u32 1.1754944e-38, %v964
        %v966 = vsel %vm963, %v965, %v961
        %v967 = vmul.f32 1.0, %v966
        %v968 = vrcp.pop %v894
        %v969 = vmul.f32 %v894, %v968
        %v970 = vsub.f32 1.0, %v969
        %v971 = vmul.f32 %v968, %v970
        %v972 = vadd.f32 %v968, %v971
        %vm973 = vweird.f32 %v894
        %vm974 = vweird.f32 %v968
        %vm975 = vmor %vm973, %vm974
        %v976 = vsel %vm975, %v968, %v972
        %v977 = vand.u32 2147483647, %v894
        %vm978 = vcmp.eq.f32.partialorder %v977, 8.507059e+37
        %v979 = vand.u32 %v894, 2147483648
        %v980 = vor.u32 1.1754944e-38, %v979
        %v981 = vsel %vm978, %v980, %v976
        %v982 = vmul.f32 1.0, %v981
        %v983 = vrcp.pop %v895
        %v984 = vmul.f32 %v895, %v983
        %v985 = vsub.f32 1.0, %v984
        %v986 = vmul.f32 %v983, %v985
        %v987 = vadd.f32 %v983, %v986
        %vm988 = vweird.f32 %v895
        %vm989 = vweird.f32 %v983
        %vm990 = vmor %vm988, %vm989
        %v991 = vsel %vm990, %v983, %v987
        %v992 = vand.u32 2147483647, %v895
        %vm993 = vcmp.eq.f32.partialorder %v992, 8.507059e+37
        %v994 = vand.u32 %v895, 2147483648
        %v995 = vor.u32 1.1754944e-38, %v994
        %v996 = vsel %vm993, %v995, %v991
        %v997 = vmul.f32 1.0, %v996
        %v998 = vrcp.pop %v896
        %v999 = vmul.f32 %v896, %v998
        %v1000 = vsub.f32 1.0, %v999
        %v1001 = vmul.f32 %v998, %v1000
        %v1002 = vadd.f32 %v998, %v1001
        %vm1003 = vweird.f32 %v896
        %vm1004 = vweird.f32 %v998
        %vm1005 = vmor %vm1003, %vm1004
        %v1006 = vsel %vm1005, %v998, %v1002
        %v1007 = vand.u32 2147483647, %v896
        %vm1008 = vcmp.eq.f32.partialorder %v1007, 8.507059e+37
        %v1009 = vand.u32 %v896, 2147483648
        %v1010 = vor.u32 1.1754944e-38, %v1009
        %v1011 = vsel %vm1008, %v1010, %v1006
        %v1012 = vmul.f32 1.0, %v1011
        %v1013 = vrcp.pop %v897
        %v1014 = vmul.f32 %v897, %v1013
        %v1015 = vsub.f32 1.0, %v1014
        %v1016 = vmul.f32 %v1013, %v1015
        %v1017 = vadd.f32 %v1013, %v1016
        %vm1018 = vweird.f32 %v897
        %vm1019 = vweird.f32 %v1013
        %vm1020 = vmor %vm1018, %vm1019
        %v1021 = vsel %vm1020, %v1013, %v1017
        %v1022 = vand.u32 2147483647, %v897
        %vm1023 = vcmp.eq.f32.partialorder %v1022, 8.507059e+37
        %v1024 = vand.u32 %v897, 2147483648
        %v1025 = vor.u32 1.1754944e-38, %v1024
        %v1026 = vsel %vm1023, %v1025, %v1021
        %v1027 = vmul.f32 1.0, %v1026
        %v1028 = vrcp.pop %v898
        %v1029 = vmul.f32 %v898, %v1028
        %v1030 = vsub.f32 1.0, %v1029
        %v1031 = vmul.f32 %v1028, %v1030
        %v1032 = vadd.f32 %v1028, %v1031
        %vm1033 = vweird.f32 %v898
        %vm1034 = vweird.f32 %v1028
        %vm1035 = vmor %vm1033, %vm1034
        %v1036 = vsel %vm1035, %v1028, %v1032
        %v1037 = vand.u32 2147483647, %v898
        %vm1038 = vcmp.eq.f32.partialorder %v1037, 8.507059e+37
        %v1039 = vand.u32 %v898, 2147483648
        %v1040 = vor.u32 1.1754944e-38, %v1039
        %v1041 = vsel %vm1038, %v1040, %v1036
        %v1042 = vmul.f32 1.0, %v1041
        %v1043 = vrcp.pop %v899
        %v1044 = vmul.f32 %v899, %v1043
        %v1045 = vsub.f32 1.0, %v1044
        %v1046 = vmul.f32 %v1043, %v1045
        %v1047 = vadd.f32 %v1043, %v1046
        %vm1048 = vweird.f32 %v899
        %vm1049 = vweird.f32 %v1043
        %vm1050 = vmor %vm1048, %vm1049
        %v1051 = vsel %vm1050, %v1043, %v1047
        %v1052 = vand.u32 2147483647, %v899
        %vm1053 = vcmp.eq.f32.partialorder %v1052, 8.507059e+37
        %v1054 = vand.u32 %v899, 2147483648
        %v1055 = vor.u32 1.1754944e-38, %v1054
        %v1056 = vsel %vm1053, %v1055, %v1051
        %v1057 = vmul.f32 1.0, %v1056
        %v1058 = vrcp.pop %v900
        %v1059 = vmul.f32 %v900, %v1058
        %v1060 = vsub.f32 1.0, %v1059
        %v1061 = vmul.f32 %v1058, %v1060
        %v1062 = vadd.f32 %v1058, %v1061
        %vm1063 = vweird.f32 %v900
        %vm1064 = vweird.f32 %v1058
        %vm1065 = vmor %vm1063, %vm1064
        %v1066 = vsel %vm1065, %v1058, %v1062
        %v1067 = vand.u32 2147483647, %v900
        %vm1068 = vcmp.eq.f32.partialorder %v1067, 8.507059e+37
        %v1069 = vand.u32 %v900, 2147483648
        %v1070 = vor.u32 1.1754944e-38, %v1069
        %v1071 = vsel %vm1068, %v1070, %v1066
        %v1072 = vmul.f32 1.0, %v1071
        %v1073 = vrcp.pop %v901
        %v1074 = vmul.f32 %v901, %v1073
        %v1075 = vsub.f32 1.0, %v1074
        %v1076 = vmul.f32 %v1073, %v1075
        %v1077 = vadd.f32 %v1073, %v1076
        %vm1078 = vweird.f32 %v901
        %vm1079 = vweird.f32 %v1073
        %vm1080 = vmor %vm1078, %vm1079
        %v1081 = vsel %vm1080, %v1073, %v1077
        %v1082 = vand.u32 2147483647, %v901
        %vm1083 = vcmp.eq.f32.partialorder %v1082, 8.507059e+37
        %v1084 = vand.u32 %v901, 2147483648
        %v1085 = vor.u32 1.1754944e-38, %v1084
        %v1086 = vsel %vm1083, %v1085, %v1081
        %v1087 = vmul.f32 1.0, %v1086
        %v1088 = vrcp.pop %v902
        %v1089 = vmul.f32 %v902, %v1088
        %v1090 = vsub.f32 1.0, %v1089
        %v1091 = vmul.f32 %v1088, %v1090
        %v1092 = vadd.f32 %v1088, %v1091
        %vm1093 = vweird.f32 %v902
        %vm1094 = vweird.f32 %v1088
        %vm1095 = vmor %vm1093, %vm1094
        %v1096 = vsel %vm1095, %v1088, %v1092
        %v1097 = vand.u32 2147483647, %v902
        %vm1098 = vcmp.eq.f32.partialorder %v1097, 8.507059e+37
        %v1099 = vand.u32 %v902, 2147483648
        %v1100 = vor.u32 1.1754944e-38, %v1099
        %v1101 = vsel %vm1098, %v1100, %v1096
        %v1102 = vmul.f32 1.0, %v1101
        %v1103 = vrcp.pop %v903
        %v1104 = vmul.f32 %v903, %v1103
        %v1105 = vsub.f32 1.0, %v1104
        %v1106 = vmul.f32 %v1103, %v1105
        %v1107 = vadd.f32 %v1103, %v1106
        %vm1108 = vweird.f32 %v903
        %vm1109 = vweird.f32 %v1103
        %vm1110 = vmor %vm1108, %vm1109
        %v1111 = vsel %vm1110, %v1103, %v1107
        %v1112 = vand.u32 2147483647, %v903
        %vm1113 = vcmp.eq.f32.partialorder %v1112, 8.507059e+37
        %v1114 = vand.u32 %v903, 2147483648
        %v1115 = vor.u32 1.1754944e-38, %v1114
        %v1116 = vsel %vm1113, %v1115, %v1111
        %v1117 = vmul.f32 1.0, %v1116
        %v1118 = vrcp.pop %v904
        %v1119 = vmul.f32 %v904, %v1118
        %v1120 = vsub.f32 1.0, %v1119
        %v1121 = vmul.f32 %v1118, %v1120
        %v1122 = vadd.f32 %v1118, %v1121
        %vm1123 = vweird.f32 %v904
        %vm1124 = vweird.f32 %v1118
        %vm1125 = vmor %vm1123, %vm1124
        %v1126 = vsel %vm1125, %v1118, %v1122
        %v1127 = vand.u32 2147483647, %v904
        %vm1128 = vcmp.eq.f32.partialorder %v1127, 8.507059e+37
        %v1129 = vand.u32 %v904, 2147483648
        %v1130 = vor.u32 1.1754944e-38, %v1129
        %v1131 = vsel %vm1128, %v1130, %v1126
        %v1132 = vmul.f32 1.0, %v1131
        %v1133 = vrcp.pop %v905
        %v1134 = vmul.f32 %v905, %v1133
        %v1135 = vsub.f32 1.0, %v1134
        %v1136 = vmul.f32 %v1133, %v1135
        %v1137 = vadd.f32 %v1133, %v1136
        %vm1138 = vweird.f32 %v905
        %vm1139 = vweird.f32 %v1133
        %vm1140 = vmor %vm1138, %vm1139
        %v1141 = vsel %vm1140, %v1133, %v1137
        %v1142 = vand.u32 2147483647, %v905
        %vm1143 = vcmp.eq.f32.partialorder %v1142, 8.507059e+37
        %v1144 = vand.u32 %v905, 2147483648
        %v1145 = vor.u32 1.1754944e-38, %v1144
        %v1146 = vsel %vm1143, %v1145, %v1141
        %v1147 = vmul.f32 1.0, %v1146
        %v1148 = vrcp.pop %v906
        %v1149 = vmul.f32 %v906, %v1148
        %v1150 = vsub.f32 1.0, %v1149
        %v1151 = vmul.f32 %v1148, %v1150
        %v1152 = vadd.f32 %v1148, %v1151
        %vm1153 = vweird.f32 %v906
        %vm1154 = vweird.f32 %v1148
        %vm1155 = vmor %vm1153, %vm1154
        %v1156 = vsel %vm1155, %v1148, %v1152
        %v1157 = vand.u32 2147483647, %v906
        %vm1158 = vcmp.eq.f32.partialorder %v1157, 8.507059e+37
        %v1159 = vand.u32 %v906, 2147483648
        %v1160 = vor.u32 1.1754944e-38, %v1159
        %v1161 = vsel %vm1158, %v1160, %v1156
        %v1162 = vmul.f32 1.0, %v1161
        %v1163 = vrcp.pop %v907
        %v1164 = vmul.f32 %v907, %v1163
        %v1165 = vsub.f32 1.0, %v1164
        %v1166 = vmul.f32 %v1163, %v1165
        %v1167 = vadd.f32 %v1163, %v1166
        %vm1168 = vweird.f32 %v907
        %vm1169 = vweird.f32 %v1163
        %vm1170 = vmor %vm1168, %vm1169
        %v1171 = vsel %vm1170, %v1163, %v1167
        %v1172 = vand.u32 2147483647, %v907
        %vm1173 = vcmp.eq.f32.partialorder %v1172, 8.507059e+37
        %v1174 = vand.u32 %v907, 2147483648
        %v1175 = vor.u32 1.1754944e-38, %v1174
        %v1176 = vsel %vm1173, %v1175, %v1171
        %v1177 = vmul.f32 1.0, %v1176
        %v1178 = vrcp.pop %v908
        %v1179 = vmul.f32 %v908, %v1178
        %v1180 = vsub.f32 1.0, %v1179
        %v1181 = vmul.f32 %v1178, %v1180
        %v1182 = vadd.f32 %v1178, %v1181
        %vm1183 = vweird.f32 %v908
        %vm1184 = vweird.f32 %v1178
        %vm1185 = vmor %vm1183, %vm1184
        %v1186 = vsel %vm1185, %v1178, %v1182
        %v1187 = vand.u32 2147483647, %v908
        %vm1188 = vcmp.eq.f32.partialorder %v1187, 8.507059e+37
        %v1189 = vand.u32 %v908, 2147483648
        %v1190 = vor.u32 1.1754944e-38, %v1189
        %v1191 = vsel %vm1188, %v1190, %v1186
        %v1192 = vmul.f32 1.0, %v1191
        %v1193 = vrcp.pop %v909
        %v1194 = vmul.f32 %v909, %v1193
        %v1195 = vsub.f32 1.0, %v1194
        %v1196 = vmul.f32 %v1193, %v1195
        %v1197 = vadd.f32 %v1193, %v1196
        %vm1198 = vweird.f32 %v909
        %vm1199 = vweird.f32 %v1193
        %vm1200 = vmor %vm1198, %vm1199
        %v1201 = vsel %vm1200, %v1193, %v1197
        %v1202 = vand.u32 2147483647, %v909
        %vm1203 = vcmp.eq.f32.partialorder %v1202, 8.507059e+37
        %v1204 = vand.u32 %v909, 2147483648
        %v1205 = vor.u32 1.1754944e-38, %v1204
        %v1206 = vsel %vm1203, %v1205, %v1201
        %v1207 = vmul.f32 1.0, %v1206
        %v1208 = vrcp.pop %v910
        %v1209 = vmul.f32 %v910, %v1208
        %v1210 = vsub.f32 1.0, %v1209
        %v1211 = vmul.f32 %v1208, %v1210
        %v1212 = vadd.f32 %v1208, %v1211
        %vm1213 = vweird.f32 %v910
        %vm1214 = vweird.f32 %v1208
        %vm1215 = vmor %vm1213, %vm1214
        %v1216 = vsel %vm1215, %v1208, %v1212
        %v1217 = vand.u32 2147483647, %v910
        %vm1218 = vcmp.eq.f32.partialorder %v1217, 8.507059e+37
        %v1219 = vand.u32 %v910, 2147483648
        %v1220 = vor.u32 1.1754944e-38, %v1219
        %v1221 = vsel %vm1218, %v1220, %v1216
        %v1222 = vmul.f32 1.0, %v1221
        %v1223 = vrcp.pop %v911
        %v1224 = vmul.f32 %v911, %v1223
        %v1225 = vsub.f32 1.0, %v1224
        %v1226 = vmul.f32 %v1223, %v1225
        %v1227 = vadd.f32 %v1223, %v1226
        %vm1228 = vweird.f32 %v911
        %vm1229 = vweird.f32 %v1223
        %vm1230 = vmor %vm1228, %vm1229
        %v1231 = vsel %vm1230, %v1223, %v1227
        %v1232 = vand.u32 2147483647, %v911
        %vm1233 = vcmp.eq.f32.partialorder %v1232, 8.507059e+37
        %v1234 = vand.u32 %v911, 2147483648
        %v1235 = vor.u32 1.1754944e-38, %v1234
        %v1236 = vsel %vm1233, %v1235, %v1231
        %v1237 = vmul.f32 1.0, %v1236
        %v1238 = vrcp.pop %v912
        %v1239 = vmul.f32 %v912, %v1238
        %v1240 = vsub.f32 1.0, %v1239
        %v1241 = vmul.f32 %v1238, %v1240
        %v1242 = vadd.f32 %v1238, %v1241
        %vm1243 = vweird.f32 %v912
        %vm1244 = vweird.f32 %v1238
        %vm1245 = vmor %vm1243, %vm1244
        %v1246 = vsel %vm1245, %v1238, %v1242
        %v1247 = vand.u32 2147483647, %v912
        %vm1248 = vcmp.eq.f32.partialorder %v1247, 8.507059e+37
        %v1249 = vand.u32 %v912, 2147483648
        %v1250 = vor.u32 1.1754944e-38, %v1249
        %v1251 = vsel %vm1248, %v1250, %v1246
        %v1252 = vmul.f32 1.0, %v1251
        %v1253 = vrcp.pop %v913
        %v1254 = vmul.f32 %v913, %v1253
        %v1255 = vsub.f32 1.0, %v1254
        %v1256 = vmul.f32 %v1253, %v1255
        %v1257 = vadd.f32 %v1253, %v1256
        %vm1258 = vweird.f32 %v913
        %vm1259 = vweird.f32 %v1253
        %vm1260 = vmor %vm1258, %vm1259
        %v1261 = vsel %vm1260, %v1253, %v1257
        %v1262 = vand.u32 2147483647, %v913
        %vm1263 = vcmp.eq.f32.partialorder %v1262, 8.507059e+37
        %v1264 = vand.u32 %v913, 2147483648
        %v1265 = vor.u32 1.1754944e-38, %v1264
        %v1266 = vsel %vm1263, %v1265, %v1261
        %v1267 = vmul.f32 1.0, %v1266
        %v1268 = vrcp.pop %v914
        %v1269 = vmul.f32 %v914, %v1268
        %v1270 = vsub.f32 1.0, %v1269
        %v1271 = vmul.f32 %v1268, %v1270
        %v1272 = vadd.f32 %v1268, %v1271
        %vm1273 = vweird.f32 %v914
        %vm1274 = vweird.f32 %v1268
        %vm1275 = vmor %vm1273, %vm1274
        %v1276 = vsel %vm1275, %v1268, %v1272
        %v1277 = vand.u32 2147483647, %v914
        %vm1278 = vcmp.eq.f32.partialorder %v1277, 8.507059e+37
        %v1279 = vand.u32 %v914, 2147483648
        %v1280 = vor.u32 1.1754944e-38, %v1279
        %v1281 = vsel %vm1278, %v1280, %v1276
        %v1282 = vmul.f32 1.0, %v1281
        %v1283 = vrcp.pop %v915
        %v1284 = vmul.f32 %v915, %v1283
        %v1285 = vsub.f32 1.0, %v1284
        %v1286 = vmul.f32 %v1283, %v1285
        %v1287 = vadd.f32 %v1283, %v1286
        %vm1288 = vweird.f32 %v915
        %vm1289 = vweird.f32 %v1283
        %vm1290 = vmor %vm1288, %vm1289
        %v1291 = vsel %vm1290, %v1283, %v1287
        %v1292 = vand.u32 2147483647, %v915
        %vm1293 = vcmp.eq.f32.partialorder %v1292, 8.507059e+37
        %v1294 = vand.u32 %v915, 2147483648
        %v1295 = vor.u32 1.1754944e-38, %v1294
        %v1296 = vsel %vm1293, %v1295, %v1291
        %v1297 = vmul.f32 1.0, %v1296
        %v1298 = vrcp.pop %v916
        %v1299 = vmul.f32 %v916, %v1298
        %v1300 = vsub.f32 1.0, %v1299
        %v1301 = vmul.f32 %v1298, %v1300
        %v1302 = vadd.f32 %v1298, %v1301
        %vm1303 = vweird.f32 %v916
        %vm1304 = vweird.f32 %v1298
        %vm1305 = vmor %vm1303, %vm1304
        %v1306 = vsel %vm1305, %v1298, %v1302
        %v1307 = vand.u32 2147483647, %v916
        %vm1308 = vcmp.eq.f32.partialorder %v1307, 8.507059e+37
        %v1309 = vand.u32 %v916, 2147483648
        %v1310 = vor.u32 1.1754944e-38, %v1309
        %v1311 = vsel %vm1308, %v1310, %v1306
        %v1312 = vmul.f32 1.0, %v1311
        %v1313 = vrcp.pop %v917
        %v1314 = vmul.f32 %v917, %v1313
        %v1315 = vsub.f32 1.0, %v1314
        %v1316 = vmul.f32 %v1313, %v1315
        %v1317 = vadd.f32 %v1313, %v1316
        %vm1318 = vweird.f32 %v917
        %vm1319 = vweird.f32 %v1313
        %vm1320 = vmor %vm1318, %vm1319
        %v1321 = vsel %vm1320, %v1313, %v1317
        %v1322 = vand.u32 2147483647, %v917
        %vm1323 = vcmp.eq.f32.partialorder %v1322, 8.507059e+37
        %v1324 = vand.u32 %v917, 2147483648
        %v1325 = vor.u32 1.1754944e-38, %v1324
        %v1326 = vsel %vm1323, %v1325, %v1321
        %v1327 = vmul.f32 1.0, %v1326
        %v1328 = vrcp.pop %v918
        %v1329 = vmul.f32 %v918, %v1328
        %v1330 = vsub.f32 1.0, %v1329
        %v1331 = vmul.f32 %v1328, %v1330
        %v1332 = vadd.f32 %v1328, %v1331
        %vm1333 = vweird.f32 %v918
        %vm1334 = vweird.f32 %v1328
        %vm1335 = vmor %vm1333, %vm1334
        %v1336 = vsel %vm1335, %v1328, %v1332
        %v1337 = vand.u32 2147483647, %v918
        %vm1338 = vcmp.eq.f32.partialorder %v1337, 8.507059e+37
        %v1339 = vand.u32 %v918, 2147483648
        %v1340 = vor.u32 1.1754944e-38, %v1339
        %v1341 = vsel %vm1338, %v1340, %v1336
        %v1342 = vmul.f32 1.0, %v1341
        %v1343 = vrcp.pop %v919
        %v1344 = vmul.f32 %v919, %v1343
        %v1345 = vsub.f32 1.0, %v1344
        %v1346 = vmul.f32 %v1343, %v1345
        %v1347 = vadd.f32 %v1343, %v1346
        %vm1348 = vweird.f32 %v919
        %vm1349 = vweird.f32 %v1343
        %vm1350 = vmor %vm1348, %vm1349
        %v1351 = vsel %vm1350, %v1343, %v1347
        %v1352 = vand.u32 2147483647, %v919
        %vm1353 = vcmp.eq.f32.partialorder %v1352, 8.507059e+37
        %v1354 = vand.u32 %v919, 2147483648
        %v1355 = vor.u32 1.1754944e-38, %v1354
        %v1356 = vsel %vm1353, %v1355, %v1351
        %v1357 = vmul.f32 1.0, %v1356
        %v1358 = vrcp.pop %v920
        %v1359 = vmul.f32 %v920, %v1358
        %v1360 = vsub.f32 1.0, %v1359
        %v1361 = vmul.f32 %v1358, %v1360
        %v1362 = vadd.f32 %v1358, %v1361
        %vm1363 = vweird.f32 %v920
        %vm1364 = vweird.f32 %v1358
        %vm1365 = vmor %vm1363, %vm1364
        %v1366 = vsel %vm1365, %v1358, %v1362
        %v1367 = vand.u32 2147483647, %v920
        %vm1368 = vcmp.eq.f32.partialorder %v1367, 8.507059e+37
        %v1369 = vand.u32 %v920, 2147483648
        %v1370 = vor.u32 1.1754944e-38, %v1369
        %v1371 = vsel %vm1368, %v1370, %v1366
        %v1372 = vmul.f32 1.0, %v1371
        %v1373 = vrcp.pop %v921
        %v1374 = vmul.f32 %v921, %v1373
        %v1375 = vsub.f32 1.0, %v1374
        %v1376 = vmul.f32 %v1373, %v1375
        %v1377 = vadd.f32 %v1373, %v1376
        %vm1378 = vweird.f32 %v921
        %vm1379 = vweird.f32 %v1373
        %vm1380 = vmor %vm1378, %vm1379
        %v1381 = vsel %vm1380, %v1373, %v1377
        %v1382 = vand.u32 2147483647, %v921
        %vm1383 = vcmp.eq.f32.partialorder %v1382, 8.507059e+37
        %v1384 = vand.u32 %v921, 2147483648
        %v1385 = vor.u32 1.1754944e-38, %v1384
        %v1386 = vsel %vm1383, %v1385, %v1381
        %v1387 = vmul.f32 1.0, %v1386
        %v1388 = vrcp.pop %v922
        %v1389 = vmul.f32 %v922, %v1388
        %v1390 = vsub.f32 1.0, %v1389
        %v1391 = vmul.f32 %v1388, %v1390
        %v1392 = vadd.f32 %v1388, %v1391
        %vm1393 = vweird.f32 %v922
        %vm1394 = vweird.f32 %v1388
        %vm1395 = vmor %vm1393, %vm1394
        %v1396 = vsel %vm1395, %v1388, %v1392
        %v1397 = vand.u32 2147483647, %v922
        %vm1398 = vcmp.eq.f32.partialorder %v1397, 8.507059e+37
        %v1399 = vand.u32 %v922, 2147483648
        %v1400 = vor.u32 1.1754944e-38, %v1399
        %v1401 = vsel %vm1398, %v1400, %v1396
        %v1402 = vmul.f32 1.0, %v1401
        %v1403 = vmul.f32 %v937, 1.0614054
        %v1404 = vmul.f32 %v952, 1.0614054
        %v1405 = vmul.f32 %v967, 1.0614054
        %v1406 = vmul.f32 %v982, 1.0614054
        %v1407 = vmul.f32 %v997, 1.0614054
        %v1408 = vmul.f32 %v1012, 1.0614054
        %v1409 = vmul.f32 %v1027, 1.0614054
        %v1410 = vmul.f32 %v1042, 1.0614054
        %v1411 = vmul.f32 %v1057, 1.0614054
        %v1412 = vmul.f32 %v1072, 1.0614054
        %v1413 = vmul.f32 %v1087, 1.0614054
        %v1414 = vmul.f32 %v1102, 1.0614054
        %v1415 = vmul.f32 %v1117, 1.0614054
        %v1416 = vmul.f32 %v1132, 1.0614054
        %v1417 = vmul.f32 %v1147, 1.0614054
        %v1418 = vmul.f32 %v1162, 1.0614054
        %v1419 = vmul.f32 %v1177, 1.0614054
        %v1420 = vmul.f32 %v1192, 1.0614054
        %v1421 = vmul.f32 %v1207, 1.0614054
        %v1422 = vmul.f32 %v1222, 1.0614054
        %v1423 = vmul.f32 %v1237, 1.0614054
        %v1424 = vmul.f32 %v1252, 1.0614054
        %v1425 = vmul.f32 %v1267, 1.0614054
        %v1426 = vmul.f32 %v1282, 1.0614054
        %v1427 = vmul.f32 %v1297, 1.0614054
        %v1428 = vmul.f32 %v1312, 1.0614054
        %v1429 = vmul.f32 %v1327, 1.0614054
        %v1430 = vmul.f32 %v1342, 1.0614054
        %v1431 = vmul.f32 %v1357, 1.0614054
        %v1432 = vmul.f32 %v1372, 1.0614054
        %v1433 = vmul.f32 %v1387, 1.0614054
        %v1434 = vmul.f32 %v1402, 1.0614054
        %v1435 = vadd.f32 %v1403, -1.4531521
        %v1436 = vadd.f32 %v1404, -1.4531521
        %v1437 = vadd.f32 %v1405, -1.4531521
        %v1438 = vadd.f32 %v1406, -1.4531521
        %v1439 = vadd.f32 %v1407, -1.4531521
        %v1440 = vadd.f32 %v1408, -1.4531521
        %v1441 = vadd.f32 %v1409, -1.4531521
        %v1442 = vadd.f32 %v1410, -1.4531521
        %v1443 = vadd.f32 %v1411, -1.4531521
        %v1444 = vadd.f32 %v1412, -1.4531521
        %v1445 = vadd.f32 %v1413, -1.4531521
        %v1446 = vadd.f32 %v1414, -1.4531521
        %v1447 = vadd.f32 %v1415, -1.4531521
        %v1448 = vadd.f32 %v1416, -1.4531521
        %v1449 = vadd.f32 %v1417, -1.4531521
        %v1450 = vadd.f32 %v1418, -1.4531521
        %v1451 = vadd.f32 %v1419, -1.4531521
        %v1452 = vadd.f32 %v1420, -1.4531521
        %v1453 = vadd.f32 %v1421, -1.4531521
        %v1454 = vadd.f32 %v1422, -1.4531521
        %v1455 = vadd.f32 %v1423, -1.4531521
        %v1456 = vadd.f32 %v1424, -1.4531521
        %v1457 = vadd.f32 %v1425, -1.4531521
        %v1458 = vadd.f32 %v1426, -1.4531521
        %v1459 = vadd.f32 %v1427, -1.4531521
        %v1460 = vadd.f32 %v1428, -1.4531521
        %v1461 = vadd.f32 %v1429, -1.4531521
        %v1462 = vadd.f32 %v1430, -1.4531521
        %v1463 = vadd.f32 %v1431, -1.4531521
        %v1464 = vadd.f32 %v1432, -1.4531521
        %v1465 = vadd.f32 %v1433, -1.4531521
        %v1466 = vadd.f32 %v1434, -1.4531521
        %v1467 = vmul.f32 %v1435, %v937
        %v1468 = vmul.f32 %v1436, %v952
        %v1469 = vmul.f32 %v1437, %v967
        %v1470 = vmul.f32 %v1438, %v982
        %v1471 = vmul.f32 %v1439, %v997
        %v1472 = vmul.f32 %v1440, %v1012
        %v1473 = vmul.f32 %v1441, %v1027
        %v1474 = vmul.f32 %v1442, %v1042
        %v1475 = vmul.f32 %v1443, %v1057
        %v1476 = vmul.f32 %v1444, %v1072
        %v1477 = vmul.f32 %v1445, %v1087
        %v1478 = vmul.f32 %v1446, %v1102
        %v1479 = vmul.f32 %v1447, %v1117
        %v1480 = vmul.f32 %v1448, %v1132
        %v1481 = vmul.f32 %v1449, %v1147
        %v1482 = vmul.f32 %v1450, %v1162
        %v1483 = vmul.f32 %v1451, %v1177
        %v1484 = vmul.f32 %v1452, %v1192
        %v1485 = vmul.f32 %v1453, %v1207
        %v1486 = vmul.f32 %v1454, %v1222
        %v1487 = vmul.f32 %v1455, %v1237
        %v1488 = vmul.f32 %v1456, %v1252
        %v1489 = vmul.f32 %v1457, %v1267
        %v1490 = vmul.f32 %v1458, %v1282
        %v1491 = vmul.f32 %v1459, %v1297
        %v1492 = vmul.f32 %v1460, %v1312
        %v1493 = vmul.f32 %v1461, %v1327
        %v1494 = vmul.f32 %v1462, %v1342
        %v1495 = vmul.f32 %v1463, %v1357
        %v1496 = vmul.f32 %v1464, %v1372
        %v1497 = vmul.f32 %v1465, %v1387
        %v1498 = vmul.f32 %v1466, %v1402
        %v1499 = vadd.f32 %v1467, 1.4214138
        %v1500 = vadd.f32 %v1468, 1.4214138
        %v1501 = vadd.f32 %v1469, 1.4214138
        %v1502 = vadd.f32 %v1470, 1.4214138
        %v1503 = vadd.f32 %v1471, 1.4214138
        %v1504 = vadd.f32 %v1472, 1.4214138
        %v1505 = vadd.f32 %v1473, 1.4214138
        %v1506 = vadd.f32 %v1474, 1.4214138
        %v1507 = vadd.f32 %v1475, 1.4214138
        %v1508 = vadd.f32 %v1476, 1.4214138
        %v1509 = vadd.f32 %v1477, 1.4214138
        %v1510 = vadd.f32 %v1478, 1.4214138
        %v1511 = vadd.f32 %v1479, 1.4214138
        %v1512 = vadd.f32 %v1480, 1.4214138
        %v1513 = vadd.f32 %v1481, 1.4214138
        %v1514 = vadd.f32 %v1482, 1.4214138
        %v1515 = vadd.f32 %v1483, 1.4214138
        %v1516 = vadd.f32 %v1484, 1.4214138
        %v1517 = vadd.f32 %v1485, 1.4214138
        %v1518 = vadd.f32 %v1486, 1.4214138
        %v1519 = vadd.f32 %v1487, 1.4214138
        %v1520 = vadd.f32 %v1488, 1.4214138
        %v1521 = vadd.f32 %v1489, 1.4214138
        %v1522 = vadd.f32 %v1490, 1.4214138
        %v1523 = vadd.f32 %v1491, 1.4214138
        %v1524 = vadd.f32 %v1492, 1.4214138
        %v1525 = vadd.f32 %v1493, 1.4214138
        %v1526 = vadd.f32 %v1494, 1.4214138
        %v1527 = vadd.f32 %v1495, 1.4214138
        %v1528 = vadd.f32 %v1496, 1.4214138
        %v1529 = vadd.f32 %v1497, 1.4214138
        %v1530 = vadd.f32 %v1498, 1.4214138
        %v1531 = vmul.f32 %v1499, %v937
        %v1532 = vmul.f32 %v1500, %v952
        %v1533 = vmul.f32 %v1501, %v967
        %v1534 = vmul.f32 %v1502, %v982
        %v1535 = vmul.f32 %v1503, %v997
        %v1536 = vmul.f32 %v1504, %v1012
        %v1537 = vmul.f32 %v1505, %v1027
        %v1538 = vmul.f32 %v1506, %v1042
        %v1539 = vmul.f32 %v1507, %v1057
        %v1540 = vmul.f32 %v1508, %v1072
        %v1541 = vmul.f32 %v1509, %v1087
        %v1542 = vmul.f32 %v1510, %v1102
        %v1543 = vmul.f32 %v1511, %v1117
        %v1544 = vmul.f32 %v1512, %v1132
        %v1545 = vmul.f32 %v1513, %v1147
        %v1546 = vmul.f32 %v1514, %v1162
        %v1547 = vmul.f32 %v1515, %v1177
        %v1548 = vmul.f32 %v1516, %v1192
        %v1549 = vmul.f32 %v1517, %v1207
        %v1550 = vmul.f32 %v1518, %v1222
        %v1551 = vmul.f32 %v1519, %v1237
        %v1552 = vmul.f32 %v1520, %v1252
        %v1553 = vmul.f32 %v1521, %v1267
        %v1554 = vmul.f32 %v1522, %v1282
        %v1555 = vmul.f32 %v1523, %v1297
        %v1556 = vmul.f32 %v1524, %v1312
        %v1557 = vmul.f32 %v1525, %v1327
        %v1558 = vmul.f32 %v1526, %v1342
        %v1559 = vmul.f32 %v1527, %v1357
        %v1560 = vmul.f32 %v1528, %v1372
        %v1561 = vmul.f32 %v1529, %v1387
        %v1562 = vmul.f32 %v1530, %v1402
        %v1563 = vadd.f32 %v1531, -0.28449672
        %v1564 = vadd.f32 %v1532, -0.28449672
        %v1565 = vadd.f32 %v1533, -0.28449672
        %v1566 = vadd.f32 %v1534, -0.28449672
        %v1567 = vadd.f32 %v1535, -0.28449672
        %v1568 = vadd.f32 %v1536, -0.28449672
        %v1569 = vadd.f32 %v1537, -0.28449672
        %v1570 = vadd.f32 %v1538, -0.28449672
        %v1571 = vadd.f32 %v1539, -0.28449672
        %v1572 = vadd.f32 %v1540, -0.28449672
        %v1573 = vadd.f32 %v1541, -0.28449672
        %v1574 = vadd.f32 %v1542, -0.28449672
        %v1575 = vadd.f32 %v1543, -0.28449672
        %v1576 = vadd.f32 %v1544, -0.28449672
        %v1577 = vadd.f32 %v1545, -0.28449672
        %v1578 = vadd.f32 %v1546, -0.28449672
        %v1579 = vadd.f32 %v1547, -0.28449672
        %v1580 = vadd.f32 %v1548, -0.28449672
        %v1581 = vadd.f32 %v1549, -0.28449672
        %v1582 = vadd.f32 %v1550, -0.28449672
        %v1583 = vadd.f32 %v1551, -0.28449672
        %v1584 = vadd.f32 %v1552, -0.28449672
        %v1585 = vadd.f32 %v1553, -0.28449672
        %v1586 = vadd.f32 %v1554, -0.28449672
        %v1587 = vadd.f32 %v1555, -0.28449672
        %v1588 = vadd.f32 %v1556, -0.28449672
        %v1589 = vadd.f32 %v1557, -0.28449672
        %v1590 = vadd.f32 %v1558, -0.28449672
        %v1591 = vadd.f32 %v1559, -0.28449672
        %v1592 = vadd.f32 %v1560, -0.28449672
        %v1593 = vadd.f32 %v1561, -0.28449672
        %v1594 = vadd.f32 %v1562, -0.28449672
        %v1595 = vmul.f32 %v1563, %v937
        %v1596 = vmul.f32 %v1564, %v952
        %v1597 = vmul.f32 %v1565, %v967
        %v1598 = vmul.f32 %v1566, %v982
        %v1599 = vmul.f32 %v1567, %v997
        %v1600 = vmul.f32 %v1568, %v1012
        %v1601 = vmul.f32 %v1569, %v1027
        %v1602 = vmul.f32 %v1570, %v1042
        %v1603 = vmul.f32 %v1571, %v1057
        %v1604 = vmul.f32 %v1572, %v1072
        %v1605 = vmul.f32 %v1573, %v1087
        %v1606 = vmul.f32 %v1574, %v1102
        %v1607 = vmul.f32 %v1575, %v1117
        %v1608 = vmul.f32 %v1576, %v1132
        %v1609 = vmul.f32 %v1577, %v1147
        %v1610 = vmul.f32 %v1578, %v1162
        %v1611 = vmul.f32 %v1579, %v1177
        %v1612 = vmul.f32 %v1580, %v1192
        %v1613 = vmul.f32 %v1581, %v1207
        %v1614 = vmul.f32 %v1582, %v1222
        %v1615 = vmul.f32 %v1583, %v1237
        %v1616 = vmul.f32 %v1584, %v1252
        %v1617 = vmul.f32 %v1585, %v1267
        %v1618 = vmul.f32 %v1586, %v1282
        %v1619 = vmul.f32 %v1587, %v1297
        %v1620 = vmul.f32 %v1588, %v1312
        %v1621 = vmul.f32 %v1589, %v1327
        %v1622 = vmul.f32 %v1590, %v1342
        %v1623 = vmul.f32 %v1591, %v1357
        %v1624 = vmul.f32 %v1592, %v1372
        %v1625 = vmul.f32 %v1593, %v1387
        %v1626 = vmul.f32 %v1594, %v1402
        %v1627 = vadd.f32 %v1595, 0.2548296
        %v1628 = vadd.f32 %v1596, 0.2548296
        %v1629 = vadd.f32 %v1597, 0.2548296
        %v1630 = vadd.f32 %v1598, 0.2548296
        %v1631 = vadd.f32 %v1599, 0.2548296
        %v1632 = vadd.f32 %v1600, 0.2548296
        %v1633 = vadd.f32 %v1601, 0.2548296
        %v1634 = vadd.f32 %v1602, 0.2548296
        %v1635 = vadd.f32 %v1603, 0.2548296
        %v1636 = vadd.f32 %v1604, 0.2548296
        %v1637 = vadd.f32 %v1605, 0.2548296
        %v1638 = vadd.f32 %v1606, 0.2548296
        %v1639 = vadd.f32 %v1607, 0.2548296
        %v1640 = vadd.f32 %v1608, 0.2548296
        %v1641 = vadd.f32 %v1609, 0.2548296
        %v1642 = vadd.f32 %v1610, 0.2548296
        %v1643 = vadd.f32 %v1611, 0.2548296
        %v1644 = vadd.f32 %v1612, 0.2548296
        %v1645 = vadd.f32 %v1613, 0.2548296
        %v1646 = vadd.f32 %v1614, 0.2548296
        %v1647 = vadd.f32 %v1615, 0.2548296
        %v1648 = vadd.f32 %v1616, 0.2548296
        %v1649 = vadd.f32 %v1617, 0.2548296
        %v1650 = vadd.f32 %v1618, 0.2548296
        %v1651 = vadd.f32 %v1619, 0.2548296
        %v1652 = vadd.f32 %v1620, 0.2548296
        %v1653 = vadd.f32 %v1621, 0.2548296
        %v1654 = vadd.f32 %v1622, 0.2548296
        %v1655 = vadd.f32 %v1623, 0.2548296
        %v1656 = vadd.f32 %v1624, 0.2548296
        %v1657 = vadd.f32 %v1625, 0.2548296
        %v1658 = vadd.f32 %v1626, 0.2548296
        %v1659 = vmul.f32 %v1627, %v937
        %v1660 = vmul.f32 %v1628, %v952
        %v1661 = vmul.f32 %v1629, %v967
        %v1662 = vmul.f32 %v1630, %v982
        %v1663 = vmul.f32 %v1631, %v997
        %v1664 = vmul.f32 %v1632, %v1012
        %v1665 = vmul.f32 %v1633, %v1027
        %v1666 = vmul.f32 %v1634, %v1042
        %v1667 = vmul.f32 %v1635, %v1057
        %v1668 = vmul.f32 %v1636, %v1072
        %v1669 = vmul.f32 %v1637, %v1087
        %v1670 = vmul.f32 %v1638, %v1102
        %v1671 = vmul.f32 %v1639, %v1117
        %v1672 = vmul.f32 %v1640, %v1132
        %v1673 = vmul.f32 %v1641, %v1147
        %v1674 = vmul.f32 %v1642, %v1162
        %v1675 = vmul.f32 %v1643, %v1177
        %v1676 = vmul.f32 %v1644, %v1192
        %v1677 = vmul.f32 %v1645, %v1207
        %v1678 = vmul.f32 %v1646, %v1222
        %v1679 = vmul.f32 %v1647, %v1237
        %v1680 = vmul.f32 %v1648, %v1252
        %v1681 = vmul.f32 %v1649, %v1267
        %v1682 = vmul.f32 %v1650, %v1282
        %v1683 = vmul.f32 %v1651, %v1297
        %v1684 = vmul.f32 %v1652, %v1312
        %v1685 = vmul.f32 %v1653, %v1327
        %v1686 = vmul.f32 %v1654, %v1342
        %v1687 = vmul.f32 %v1655, %v1357
        %v1688 = vmul.f32 %v1656, %v1372
        %v1689 = vmul.f32 %v1657, %v1387
        %v1690 = vmul.f32 %v1658, %v1402
        %v1691 = vsub.f32 0.0, %v827
        %v1692 = vsub.f32 0.0, %v828
        %v1693 = vsub.f32 0.0, %v829
        %v1694 = vsub.f32 0.0, %v830
        %v1695 = vsub.f32 0.0, %v831
        %v1696 = vsub.f32 0.0, %v832
        %v1697 = vsub.f32 0.0, %v833
        %v1698 = vsub.f32 0.0, %v834
        %v1699 = vsub.f32 0.0, %v835
        %v1700 = vsub.f32 0.0, %v836
        %v1701 = vsub.f32 0.0, %v837
        %v1702 = vsub.f32 0.0, %v838
        %v1703 = vsub.f32 0.0, %v839
        %v1704 = vsub.f32 0.0, %v840
        %v1705 = vsub.f32 0.0, %v841
        %v1706 = vsub.f32 0.0, %v842
        %v1707 = vsub.f32 0.0, %v843
        %v1708 = vsub.f32 0.0, %v844
        %v1709 = vsub.f32 0.0, %v845
        %v1710 = vsub.f32 0.0, %v846
        %v1711 = vsub.f32 0.0, %v847
        %v1712 = vsub.f32 0.0, %v848
        %v1713 = vsub.f32 0.0, %v849
        %v1714 = vsub.f32 0.0, %v850
        %v1715 = vsub.f32 0.0, %v851
        %v1716 = vsub.f32 0.0, %v852
        %v1717 = vsub.f32 0.0, %v853
        %v1718 = vsub.f32 0.0, %v854
        %v1719 = vsub.f32 0.0, %v855
        %v1720 = vsub.f32 0.0, %v856
        %v1721 = vsub.f32 0.0, %v857
        %v1722 = vsub.f32 0.0, %v858
        %v1723 = vmul.f32 %v1691, %v827
        %v1724 = vmul.f32 %v1692, %v828
        %v1725 = vmul.f32 %v1693, %v829
        %v1726 = vmul.f32 %v1694, %v830
        %v1727 = vmul.f32 %v1695, %v831
        %v1728 = vmul.f32 %v1696, %v832
        %v1729 = vmul.f32 %v1697, %v833
        %v1730 = vmul.f32 %v1698, %v834
        %v1731 = vmul.f32 %v1699, %v835
        %v1732 = vmul.f32 %v1700, %v836
        %v1733 = vmul.f32 %v1701, %v837
        %v1734 = vmul.f32 %v1702, %v838
        %v1735 = vmul.f32 %v1703, %v839
        %v1736 = vmul.f32 %v1704, %v840
        %v1737 = vmul.f32 %v1705, %v841
        %v1738 = vmul.f32 %v1706, %v842
        %v1739 = vmul.f32 %v1707, %v843
        %v1740 = vmul.f32 %v1708, %v844
        %v1741 = vmul.f32 %v1709, %v845
        %v1742 = vmul.f32 %v1710, %v846
        %v1743 = vmul.f32 %v1711, %v847
        %v1744 = vmul.f32 %v1712, %v848
        %v1745 = vmul.f32 %v1713, %v849
        %v1746 = vmul.f32 %v1714, %v850
        %v1747 = vmul.f32 %v1715, %v851
        %v1748 = vmul.f32 %v1716, %v852
        %v1749 = vmul.f32 %v1717, %v853
        %v1750 = vmul.f32 %v1718, %v854
        %v1751 = vmul.f32 %v1719, %v855
        %v1752 = vmul.f32 %v1720, %v856
        %v1753 = vmul.f32 %v1721, %v857
        %v1754 = vmul.f32 %v1722, %v858
        %v1755 = vmul.f32 %v1723, 1.442695
        %v1756 = vpow.pop %v1755
        %v1757 = vmul.f32 %v1724, 1.442695
        %v1758 = vpow.pop %v1757
        %v1759 = vmul.f32 %v1725, 1.442695
        %v1760 = vpow.pop %v1759
        %v1761 = vmul.f32 %v1726, 1.442695
        %v1762 = vpow.pop %v1761
        %v1763 = vmul.f32 %v1727, 1.442695
        %v1764 = vpow.pop %v1763
        %v1765 = vmul.f32 %v1728, 1.442695
        %v1766 = vpow.pop %v1765
        %v1767 = vmul.f32 %v1729, 1.442695
        %v1768 = vpow.pop %v1767
        %v1769 = vmul.f32 %v1730, 1.442695
        %v1770 = vpow.pop %v1769
        %v1771 = vmul.f32 %v1731, 1.442695
        %v1772 = vpow.pop %v1771
        %v1773 = vmul.f32 %v1732, 1.442695
        %v1774 = vpow.pop %v1773
        %v1775 = vmul.f32 %v1733, 1.442695
        %v1776 = vpow.pop %v1775
        %v1777 = vmul.f32 %v1734, 1.442695
        %v1778 = vpow.pop %v1777
        %v1779 = vmul.f32 %v1735, 1.442695
        %v1780 = vpow.pop %v1779
        %v1781 = vmul.f32 %v1736, 1.442695
        %v1782 = vpow.pop %v1781
        %v1783 = vmul.f32 %v1737, 1.442695
        %v1784 = vpow.pop %v1783
        %v1785 = vmul.f32 %v1738, 1.442695
        %v1786 = vpow.pop %v1785
        %v1787 = vmul.f32 %v1739, 1.442695
        %v1788 = vpow.pop %v1787
        %v1789 = vmul.f32 %v1740, 1.442695
        %v1790 = vpow.pop %v1789
        %v1791 = vmul.f32 %v1741, 1.442695
        %v1792 = vpow.pop %v1791
        %v1793 = vmul.f32 %v1742, 1.442695
        %v1794 = vpow.pop %v1793
        %v1795 = vmul.f32 %v1743, 1.442695
        %v1796 = vpow.pop %v1795
        %v1797 = vmul.f32 %v1744, 1.442695
        %v1798 = vpow.pop %v1797
        %v1799 = vmul.f32 %v1745, 1.442695
        %v1800 = vpow.pop %v1799
        %v1801 = vmul.f32 %v1746, 1.442695
        %v1802 = vpow.pop %v1801
        %v1803 = vmul.f32 %v1747, 1.442695
        %v1804 = vpow.pop %v1803
        %v1805 = vmul.f32 %v1748, 1.442695
        %v1806 = vpow.pop %v1805
        %v1807 = vmul.f32 %v1749, 1.442695
        %v1808 = vpow.pop %v1807
        %v1809 = vmul.f32 %v1750, 1.442695
        %v1810 = vpow.pop %v1809
        %v1811 = vmul.f32 %v1751, 1.442695
        %v1812 = vpow.pop %v1811
        %v1813 = vmul.f32 %v1752, 1.442695
        %v1814 = vpow.pop %v1813
        %v1815 = vmul.f32 %v1753, 1.442695
        %v1816 = vpow.pop %v1815
        %v1817 = vmul.f32 %v1754, 1.442695
        %v1818 = vpow.pop %v1817
        %v1819 = vmul.f32 %v1659, %v1756
        %v1820 = vmul.f32 %v1660, %v1758
        %v1821 = vmul.f32 %v1661, %v1760
        %v1822 = vmul.f32 %v1662, %v1762
        %v1823 = vmul.f32 %v1663, %v1764
        %v1824 = vmul.f32 %v1664, %v1766
        %v1825 = vmul.f32 %v1665, %v1768
        %v1826 = vmul.f32 %v1666, %v1770
        %v1827 = vmul.f32 %v1667, %v1772
        %v1828 = vmul.f32 %v1668, %v1774
        %v1829 = vmul.f32 %v1669, %v1776
        %v1830 = vmul.f32 %v1670, %v1778
        %v1831 = vmul.f32 %v1671, %v1780
        %v1832 = vmul.f32 %v1672, %v1782
        %v1833 = vmul.f32 %v1673, %v1784
        %v1834 = vmul.f32 %v1674, %v1786
        %v1835 = vmul.f32 %v1675, %v1788
        %v1836 = vmul.f32 %v1676, %v1790
        %v1837 = vmul.f32 %v1677, %v1792
        %v1838 = vmul.f32 %v1678, %v1794
        %v1839 = vmul.f32 %v1679, %v1796
        %v1840 = vmul.f32 %v1680, %v1798
        %v1841 = vmul.f32 %v1681, %v1800
        %v1842 = vmul.f32 %v1682, %v1802
        %v1843 = vmul.f32 %v1683, %v1804
        %v1844 = vmul.f32 %v1684, %v1806
        %v1845 = vmul.f32 %v1685, %v1808
        %v1846 = vmul.f32 %v1686, %v1810
        %v1847 = vmul.f32 %v1687, %v1812
        %v1848 = vmul.f32 %v1688, %v1814
        %v1849 = vmul.f32 %v1689, %v1816
        %v1850 = vmul.f32 %v1690, %v1818
        %v1851 = vsub.f32 1.0, %v1819
        %v1852 = vsub.f32 1.0, %v1820
        %v1853 = vsub.f32 1.0, %v1821
        %v1854 = vsub.f32 1.0, %v1822
        %v1855 = vsub.f32 1.0, %v1823
        %v1856 = vsub.f32 1.0, %v1824
        %v1857 = vsub.f32 1.0, %v1825
        %v1858 = vsub.f32 1.0, %v1826
        %v1859 = vsub.f32 1.0, %v1827
        %v1860 = vsub.f32 1.0, %v1828
        %v1861 = vsub.f32 1.0, %v1829
        %v1862 = vsub.f32 1.0, %v1830
        %v1863 = vsub.f32 1.0, %v1831
        %v1864 = vsub.f32 1.0, %v1832
        %v1865 = vsub.f32 1.0, %v1833
        %v1866 = vsub.f32 1.0, %v1834
        %v1867 = vsub.f32 1.0, %v1835
        %v1868 = vsub.f32 1.0, %v1836
        %v1869 = vsub.f32 1.0, %v1837
        %v1870 = vsub.f32 1.0, %v1838
        %v1871 = vsub.f32 1.0, %v1839
        %v1872 = vsub.f32 1.0, %v1840
        %v1873 = vsub.f32 1.0, %v1841
        %v1874 = vsub.f32 1.0, %v1842
        %v1875 = vsub.f32 1.0, %v1843
        %v1876 = vsub.f32 1.0, %v1844
        %v1877 = vsub.f32 1.0, %v1845
        %v1878 = vsub.f32 1.0, %v1846
        %v1879 = vsub.f32 1.0, %v1847
        %v1880 = vsub.f32 1.0, %v1848
        %v1881 = vsub.f32 1.0, %v1849
        %v1882 = vsub.f32 1.0, %v1850
        %v1883 = vmul.f32 %v795, %v1851
        %v1884 = vmul.f32 %v796, %v1852
        %v1885 = vmul.f32 %v797, %v1853
        %v1886 = vmul.f32 %v798, %v1854
        %v1887 = vmul.f32 %v799, %v1855
        %v1888 = vmul.f32 %v800, %v1856
        %v1889 = vmul.f32 %v801, %v1857
        %v1890 = vmul.f32 %v802, %v1858
        %v1891 = vmul.f32 %v803, %v1859
        %v1892 = vmul.f32 %v804, %v1860
        %v1893 = vmul.f32 %v805, %v1861
        %v1894 = vmul.f32 %v806, %v1862
        %v1895 = vmul.f32 %v807, %v1863
        %v1896 = vmul.f32 %v808, %v1864
        %v1897 = vmul.f32 %v809, %v1865
        %v1898 = vmul.f32 %v810, %v1866
        %v1899 = vmul.f32 %v811, %v1867
        %v1900 = vmul.f32 %v812, %v1868
        %v1901 = vmul.f32 %v813, %v1869
        %v1902 = vmul.f32 %v814, %v1870
        %v1903 = vmul.f32 %v815, %v1871
        %v1904 = vmul.f32 %v816, %v1872
        %v1905 = vmul.f32 %v817, %v1873
        %v1906 = vmul.f32 %v818, %v1874
        %v1907 = vmul.f32 %v819, %v1875
        %v1908 = vmul.f32 %v820, %v1876
        %v1909 = vmul.f32 %v821, %v1877
        %v1910 = vmul.f32 %v822, %v1878
        %v1911 = vmul.f32 %v823, %v1879
        %v1912 = vmul.f32 %v824, %v1880
        %v1913 = vmul.f32 %v825, %v1881
        %v1914 = vmul.f32 %v826, %v1882
        %v1915 = vadd.f32 %v1883, 1.0
        %v1916 = vadd.f32 %v1884, 1.0
        %v1917 = vadd.f32 %v1885, 1.0
        %v1918 = vadd.f32 %v1886, 1.0
        %v1919 = vadd.f32 %v1887, 1.0
        %v1920 = vadd.f32 %v1888, 1.0
        %v1921 = vadd.f32 %v1889, 1.0
        %v1922 = vadd.f32 %v1890, 1.0
        %v1923 = vadd.f32 %v1891, 1.0
        %v1924 = vadd.f32 %v1892, 1.0
        %v1925 = vadd.f32 %v1893, 1.0
        %v1926 = vadd.f32 %v1894, 1.0
        %v1927 = vadd.f32 %v1895, 1.0
        %v1928 = vadd.f32 %v1896, 1.0
        %v1929 = vadd.f32 %v1897, 1.0
        %v1930 = vadd.f32 %v1898, 1.0
        %v1931 = vadd.f32 %v1899, 1.0
        %v1932 = vadd.f32 %v1900, 1.0
        %v1933 = vadd.f32 %v1901, 1.0
        %v1934 = vadd.f32 %v1902, 1.0
        %v1935 = vadd.f32 %v1903, 1.0
        %v1936 = vadd.f32 %v1904, 1.0
        %v1937 = vadd.f32 %v1905, 1.0
        %v1938 = vadd.f32 %v1906, 1.0
        %v1939 = vadd.f32 %v1907, 1.0
        %v1940 = vadd.f32 %v1908, 1.0
        %v1941 = vadd.f32 %v1909, 1.0
        %v1942 = vadd.f32 %v1910, 1.0
        %v1943 = vadd.f32 %v1911, 1.0
        %v1944 = vadd.f32 %v1912, 1.0
        %v1945 = vadd.f32 %v1913, 1.0
        %v1946 = vadd.f32 %v1914, 1.0
        %v1947 = vmul.f32 %v699, %v1915
        %v1948 = vmul.f32 %v700, %v1916
        %v1949 = vmul.f32 %v701, %v1917
        %v1950 = vmul.f32 %v702, %v1918
        %v1951 = vmul.f32 %v703, %v1919
        %v1952 = vmul.f32 %v704, %v1920
        %v1953 = vmul.f32 %v705, %v1921
        %v1954 = vmul.f32 %v706, %v1922
        %v1955 = vmul.f32 %v707, %v1923
        %v1956 = vmul.f32 %v708, %v1924
        %v1957 = vmul.f32 %v709, %v1925
        %v1958 = vmul.f32 %v710, %v1926
        %v1959 = vmul.f32 %v711, %v1927
        %v1960 = vmul.f32 %v712, %v1928
        %v1961 = vmul.f32 %v713, %v1929
        %v1962 = vmul.f32 %v714, %v1930
        %v1963 = vmul.f32 %v715, %v1931
        %v1964 = vmul.f32 %v716, %v1932
        %v1965 = vmul.f32 %v717, %v1933
        %v1966 = vmul.f32 %v718, %v1934
        %v1967 = vmul.f32 %v719, %v1935
        %v1968 = vmul.f32 %v720, %v1936
        %v1969 = vmul.f32 %v721, %v1937
        %v1970 = vmul.f32 %v722, %v1938
        %v1971 = vmul.f32 %v723, %v1939
        %v1972 = vmul.f32 %v724, %v1940
        %v1973 = vmul.f32 %v725, %v1941
        %v1974 = vmul.f32 %v726, %v1942
        %v1975 = vmul.f32 %v727, %v1943
        %v1976 = vmul.f32 %v728, %v1944
        %v1977 = vmul.f32 %v729, %v1945
        %v1978 = vmul.f32 %v730, %v1946
        %v1979 = vpack.c.bf16 %v1949, %v1947
        %v1980 = vpack.c.bf16 %v1950, %v1948
        %v1981 = vpack.c.bf16 %v1953, %v1951
        %v1982 = vpack.c.bf16 %v1954, %v1952
        %v1983 = vpack.c.bf16 %v1957, %v1955
        %v1984 = vpack.c.bf16 %v1958, %v1956
        %v1985 = vpack.c.bf16 %v1961, %v1959
        %v1986 = vpack.c.bf16 %v1962, %v1960
        %v1987 = vpack.c.bf16 %v1965, %v1963
        %v1988 = vpack.c.bf16 %v1966, %v1964
        %v1989 = vpack.c.bf16 %v1969, %v1967
        %v1990 = vpack.c.bf16 %v1970, %v1968
        %v1991 = vpack.c.bf16 %v1973, %v1971
        %v1992 = vpack.c.bf16 %v1974, %v1972
        %v1993 = vpack.c.bf16 %v1977, %v1975
        %v1994 = vpack.c.bf16 %v1978, %v1976
        %v1995 = vperm.slane %v488, 1
        %v1996 = vperm.slane %v488, 5
        %v1999 = vperm.slane %v1995, 1
        %v2000 = vperm.slane %v1996, 1
        %v2033 = vunpack.c.l.b16 %v456
        %v2034 = vunpack.c.h.b16 %v456
        %v2035 = vunpack.c.l.b16 %v457
        %v2036 = vunpack.c.h.b16 %v457
        %v2037 = vunpack.c.l.b16 %v458
        %v2038 = vunpack.c.h.b16 %v458
        %v2039 = vunpack.c.l.b16 %v459
        %v2040 = vunpack.c.h.b16 %v459
        %v2041 = vunpack.c.l.b16 %v460
        %v2042 = vunpack.c.h.b16 %v460
        %v2043 = vunpack.c.l.b16 %v461
        %v2044 = vunpack.c.h.b16 %v461
        %v2045 = vunpack.c.l.b16 %v462
        %v2046 = vunpack.c.h.b16 %v462
        %v2047 = vunpack.c.l.b16 %v463
        %v2048 = vunpack.c.h.b16 %v463
        %v2049 = vunpack.c.l.b16 %v464
        %v2050 = vunpack.c.h.b16 %v464
        %v2051 = vunpack.c.l.b16 %v465
        %v2052 = vunpack.c.h.b16 %v465
        %v2053 = vunpack.c.l.b16 %v466
        %v2054 = vunpack.c.h.b16 %v466
        %v2055 = vunpack.c.l.b16 %v467
        %v2056 = vunpack.c.h.b16 %v467
        %v2057 = vunpack.c.l.b16 %v468
        %v2058 = vunpack.c.h.b16 %v468
        %v2059 = vunpack.c.l.b16 %v469
        %v2060 = vunpack.c.h.b16 %v469
        %v2061 = vunpack.c.l.b16 %v470
        %v2062 = vunpack.c.h.b16 %v470
        %v2063 = vunpack.c.l.b16 %v471
        %v2064 = vunpack.c.h.b16 %v471
        %v2065 = vunpack.c.l.b16 %v472
        %v2066 = vunpack.c.h.b16 %v472
        %v2067 = vunpack.c.l.b16 %v473
        %v2068 = vunpack.c.h.b16 %v473
        %v2069 = vunpack.c.l.b16 %v474
        %v2070 = vunpack.c.h.b16 %v474
        %v2071 = vunpack.c.l.b16 %v475
        %v2072 = vunpack.c.h.b16 %v475
        %v2073 = vunpack.c.l.b16 %v476
        %v2074 = vunpack.c.h.b16 %v476
        %v2075 = vunpack.c.l.b16 %v477
        %v2076 = vunpack.c.h.b16 %v477
        %v2077 = vunpack.c.l.b16 %v478
        %v2078 = vunpack.c.h.b16 %v478
        %v2079 = vunpack.c.l.b16 %v479
        %v2080 = vunpack.c.h.b16 %v479
        %v2081 = vunpack.c.l.b16 %v480
        %v2082 = vunpack.c.h.b16 %v480
        %v2083 = vunpack.c.l.b16 %v481
        %v2084 = vunpack.c.h.b16 %v481
        %v2085 = vunpack.c.l.b16 %v482
        %v2086 = vunpack.c.h.b16 %v482
        %v2087 = vunpack.c.l.b16 %v483
        %v2088 = vunpack.c.h.b16 %v483
        %v2089 = vunpack.c.l.b16 %v484
        %v2090 = vunpack.c.h.b16 %v484
        %v2091 = vunpack.c.l.b16 %v485
        %v2092 = vunpack.c.h.b16 %v485
        %v2093 = vunpack.c.l.b16 %v486
        %v2094 = vunpack.c.h.b16 %v486
        %v2095 = vunpack.c.l.b16 %v487
        %v2096 = vunpack.c.h.b16 %v487
        %v2097 = vpack.c.b16 %v2035, %v2033
        %v2098 = vpack.c.b16 %v2036, %v2034
        %v2099 = vpack.c.b16 %v2039, %v2037
        %v2100 = vpack.c.b16 %v2040, %v2038
        %v2101 = vpack.c.b16 %v2043, %v2041
        %v2102 = vpack.c.b16 %v2044, %v2042
        %v2103 = vpack.c.b16 %v2047, %v2045
        %v2104 = vpack.c.b16 %v2048, %v2046
        %v2105 = vpack.c.b16 %v2051, %v2049
        %v2106 = vpack.c.b16 %v2052, %v2050
        %v2107 = vpack.c.b16 %v2055, %v2053
        %v2108 = vpack.c.b16 %v2056, %v2054
        %v2109 = vpack.c.b16 %v2059, %v2057
        %v2110 = vpack.c.b16 %v2060, %v2058
        %v2111 = vpack.c.b16 %v2063, %v2061
        %v2112 = vpack.c.b16 %v2064, %v2062
        %v2113 = vpack.c.b16 %v2067, %v2065
        %v2114 = vpack.c.b16 %v2068, %v2066
        %v2115 = vpack.c.b16 %v2071, %v2069
        %v2116 = vpack.c.b16 %v2072, %v2070
        %v2117 = vpack.c.b16 %v2075, %v2073
        %v2118 = vpack.c.b16 %v2076, %v2074
        %v2119 = vpack.c.b16 %v2079, %v2077
        %v2120 = vpack.c.b16 %v2080, %v2078
        %v2121 = vpack.c.b16 %v2083, %v2081
        %v2122 = vpack.c.b16 %v2084, %v2082
        %v2123 = vpack.c.b16 %v2087, %v2085
        %v2124 = vpack.c.b16 %v2088, %v2086
        %v2125 = vpack.c.b16 %v2091, %v2089
        %v2126 = vpack.c.b16 %v2092, %v2090
        %v2127 = vpack.c.b16 %v2095, %v2093
        %v2128 = vpack.c.b16 %v2096, %v2094
        %2161 = vmatpush.bf16.msra.mxu0 %v2111
        %2162 = vmatpush.bf16.msra.mxu0 %v2109
        %2163 = vmatpush.bf16.msra.mxu0 %v2107
        %2164 = vmatpush.bf16.msra.mxu0 %v2105
        %2165 = vmatpush.bf16.msra.mxu0 %v2103
        %2166 = vmatpush.bf16.msra.mxu0 %v2101
        %2167 = vmatpush.bf16.msra.mxu0 %v2099
        %2168 = vmatpush.bf16.msra.mxu0 %v2097
        %2169 = vmatmul.bf16.gmra.mxu0 %v1979
        %v2170 = vpop.f32.mrf.mxu0
        %v2171 = vadd.f32 %v1999, %v2170
        %v2172 = vpop.f32.mrf.mxu0
        %v2173 = vadd.f32 %v1999, %v2172
        %2174 = vmatmul.bf16.gmra.mxu0 %v1981
        %v2175 = vpop.f32.mrf.mxu0
        %v2176 = vadd.f32 %v1999, %v2175
        %v2177 = vpop.f32.mrf.mxu0
        %v2178 = vadd.f32 %v1999, %v2177
        %2179 = vmatmul.bf16.gmra.mxu0 %v1983
        %v2180 = vpop.f32.mrf.mxu0
        %v2181 = vadd.f32 %v1999, %v2180
        %v2182 = vpop.f32.mrf.mxu0
        %v2183 = vadd.f32 %v1999, %v2182
        %2184 = vmatmul.bf16.gmra.mxu0 %v1985
        %v2185 = vpop.f32.mrf.mxu0
        %v2186 = vadd.f32 %v1999, %v2185
        %v2187 = vpop.f32.mrf.mxu0
        %v2188 = vadd.f32 %v1999, %v2187
        %2189 = vmatmul.bf16.gmra.mxu0 %v1987
        %v2190 = vpop.f32.mrf.mxu0
        %v2191 = vadd.f32 %v1999, %v2190
        %v2192 = vpop.f32.mrf.mxu0
        %v2193 = vadd.f32 %v1999, %v2192
        %2194 = vmatmul.bf16.gmra.mxu0 %v1989
        %v2195 = vpop.f32.mrf.mxu0
        %v2196 = vadd.f32 %v1999, %v2195
        %v2197 = vpop.f32.mrf.mxu0
        %v2198 = vadd.f32 %v1999, %v2197
        %2199 = vmatmul.bf16.gmra.mxu0 %v1991
        %v2200 = vpop.f32.mrf.mxu0
        %v2201 = vadd.f32 %v1999, %v2200
        %v2202 = vpop.f32.mrf.mxu0
        %v2203 = vadd.f32 %v1999, %v2202
        %2204 = vmatmul.bf16.gmra.mxu0 %v1993
        %v2205 = vpop.f32.mrf.mxu0
        %v2206 = vadd.f32 %v1999, %v2205
        %v2207 = vpop.f32.mrf.mxu0
        %v2208 = vadd.f32 %v1999, %v2207
        %2209 = vdwg.mxu0
        %2210 = vmatpush.bf16.msra.mxu0 %v2127
        %2211 = vmatpush.bf16.msra.mxu0 %v2125
        %2212 = vmatpush.bf16.msra.mxu0 %v2123
        %2213 = vmatpush.bf16.msra.mxu0 %v2121
        %2214 = vmatpush.bf16.msra.mxu0 %v2119
        %2215 = vmatpush.bf16.msra.mxu0 %v2117
        %2216 = vmatpush.bf16.msra.mxu0 %v2115
        %2217 = vmatpush.bf16.msra.mxu0 %v2113
        %2218 = vmatmul.bf16.gmra.mxu0 %v1980
        %v2219 = vpop.f32.mrf.mxu0
        %v2220 = vadd.f32 %v2171, %v2219
        %v2221 = vpop.f32.mrf.mxu0
        %v2222 = vadd.f32 %v2173, %v2221
        %2223 = vmatmul.bf16.gmra.mxu0 %v1982
        %v2224 = vpop.f32.mrf.mxu0
        %v2225 = vadd.f32 %v2176, %v2224
        %v2226 = vpop.f32.mrf.mxu0
        %v2227 = vadd.f32 %v2178, %v2226
        %2228 = vmatmul.bf16.gmra.mxu0 %v1984
        %v2229 = vpop.f32.mrf.mxu0
        %v2230 = vadd.f32 %v2181, %v2229
        %v2231 = vpop.f32.mrf.mxu0
        %v2232 = vadd.f32 %v2183, %v2231
        %2233 = vmatmul.bf16.gmra.mxu0 %v1986
        %v2234 = vpop.f32.mrf.mxu0
        %v2235 = vadd.f32 %v2186, %v2234
        %v2236 = vpop.f32.mrf.mxu0
        %v2237 = vadd.f32 %v2188, %v2236
        %2238 = vmatmul.bf16.gmra.mxu0 %v1988
        %v2239 = vpop.f32.mrf.mxu0
        %v2240 = vadd.f32 %v2191, %v2239
        %v2241 = vpop.f32.mrf.mxu0
        %v2242 = vadd.f32 %v2193, %v2241
        %2243 = vmatmul.bf16.gmra.mxu0 %v1990
        %v2244 = vpop.f32.mrf.mxu0
        %v2245 = vadd.f32 %v2196, %v2244
        %v2246 = vpop.f32.mrf.mxu0
        %v2247 = vadd.f32 %v2198, %v2246
        %2248 = vmatmul.bf16.gmra.mxu0 %v1992
        %v2249 = vpop.f32.mrf.mxu0
        %v2250 = vadd.f32 %v2201, %v2249
        %v2251 = vpop.f32.mrf.mxu0
        %v2252 = vadd.f32 %v2203, %v2251
        %2253 = vmatmul.bf16.gmra.mxu0 %v1994
        %v2254 = vpop.f32.mrf.mxu0
        %v2255 = vadd.f32 %v2206, %v2254
        %v2256 = vpop.f32.mrf.mxu0
        %v2257 = vadd.f32 %v2208, %v2256
        %2258 = vdwg.mxu0
        %2259 = vmatpush.bf16.msra.mxu0 %v2112
        %2260 = vmatpush.bf16.msra.mxu0 %v2110
        %2261 = vmatpush.bf16.msra.mxu0 %v2108
        %2262 = vmatpush.bf16.msra.mxu0 %v2106
        %2263 = vmatpush.bf16.msra.mxu0 %v2104
        %2264 = vmatpush.bf16.msra.mxu0 %v2102
        %2265 = vmatpush.bf16.msra.mxu0 %v2100
        %2266 = vmatpush.bf16.msra.mxu0 %v2098
        %2267 = vmatmul.bf16.gmra.mxu0 %v1979
        %v2268 = vpop.f32.mrf.mxu0
        %v2269 = vadd.f32 %v2000, %v2268
        %v2270 = vpop.f32.mrf.mxu0
        %v2271 = vadd.f32 %v2000, %v2270
        %2272 = vmatmul.bf16.gmra.mxu0 %v1981
        %v2273 = vpop.f32.mrf.mxu0
        %v2274 = vadd.f32 %v2000, %v2273
        %v2275 = vpop.f32.mrf.mxu0
        %v2276 = vadd.f32 %v2000, %v2275
        %2277 = vmatmul.bf16.gmra.mxu0 %v1983
        %v2278 = vpop.f32.mrf.mxu0
        %v2279 = vadd.f32 %v2000, %v2278
        %v2280 = vpop.f32.mrf.mxu0
        %v2281 = vadd.f32 %v2000, %v2280
        %2282 = vmatmul.bf16.gmra.mxu0 %v1985
        %v2283 = vpop.f32.mrf.mxu0
        %v2284 = vadd.f32 %v2000, %v2283
        %v2285 = vpop.f32.mrf.mxu0
        %v2286 = vadd.f32 %v2000, %v2285
        %2287 = vmatmul.bf16.gmra.mxu0 %v1987
        %v2288 = vpop.f32.mrf.mxu0
        %v2289 = vadd.f32 %v2000, %v2288
        %v2290 = vpop.f32.mrf.mxu0
        %v2291 = vadd.f32 %v2000, %v2290
        %2292 = vmatmul.bf16.gmra.mxu0 %v1989
        %v2293 = vpop.f32.mrf.mxu0
        %v2294 = vadd.f32 %v2000, %v2293
        %v2295 = vpop.f32.mrf.mxu0
        %v2296 = vadd.f32 %v2000, %v2295
        %2297 = vmatmul.bf16.gmra.mxu0 %v1991
        %v2298 = vpop.f32.mrf.mxu0
        %v2299 = vadd.f32 %v2000, %v2298
        %v2300 = vpop.f32.mrf.mxu0
        %v2301 = vadd.f32 %v2000, %v2300
        %2302 = vmatmul.bf16.gmra.mxu0 %v1993
        %v2303 = vpop.f32.mrf.mxu0
        %v2304 = vadd.f32 %v2000, %v2303
        %v2305 = vpop.f32.mrf.mxu0
        %v2306 = vadd.f32 %v2000, %v2305
        %2307 = vdwg.mxu0
        %2308 = vmatpush.bf16.msra.mxu0 %v2128
        %2309 = vmatpush.bf16.msra.mxu0 %v2126
        %2310 = vmatpush.bf16.msra.mxu0 %v2124
        %2311 = vmatpush.bf16.msra.mxu0 %v2122
        %2312 = vmatpush.bf16.msra.mxu0 %v2120
        %2313 = vmatpush.bf16.msra.mxu0 %v2118
        %2314 = vmatpush.bf16.msra.mxu0 %v2116
        %2315 = vmatpush.bf16.msra.mxu0 %v2114
        %2316 = vmatmul.bf16.gmra.mxu0 %v1980
        %v2317 = vpop.f32.mrf.mxu0
        %v2318 = vadd.f32 %v2269, %v2317
        %v2319 = vpop.f32.mrf.mxu0
        %v2320 = vadd.f32 %v2271, %v2319
        %2321 = vmatmul.bf16.gmra.mxu0 %v1982
        %v2322 = vpop.f32.mrf.mxu0
        %v2323 = vadd.f32 %v2274, %v2322
        %v2324 = vpop.f32.mrf.mxu0
        %v2325 = vadd.f32 %v2276, %v2324
        %2326 = vmatmul.bf16.gmra.mxu0 %v1984
        %v2327 = vpop.f32.mrf.mxu0
        %v2328 = vadd.f32 %v2279, %v2327
        %v2329 = vpop.f32.mrf.mxu0
        %v2330 = vadd.f32 %v2281, %v2329
        %2331 = vmatmul.bf16.gmra.mxu0 %v1986
        %v2332 = vpop.f32.mrf.mxu0
        %v2333 = vadd.f32 %v2284, %v2332
        %v2334 = vpop.f32.mrf.mxu0
        %v2335 = vadd.f32 %v2286, %v2334
        %2336 = vmatmul.bf16.gmra.mxu0 %v1988
        %v2337 = vpop.f32.mrf.mxu0
        %v2338 = vadd.f32 %v2289, %v2337
        %v2339 = vpop.f32.mrf.mxu0
        %v2340 = vadd.f32 %v2291, %v2339
        %2341 = vmatmul.bf16.gmra.mxu0 %v1990
        %v2342 = vpop.f32.mrf.mxu0
        %v2343 = vadd.f32 %v2294, %v2342
        %v2344 = vpop.f32.mrf.mxu0
        %v2345 = vadd.f32 %v2296, %v2344
        %2346 = vmatmul.bf16.gmra.mxu0 %v1992
        %v2347 = vpop.f32.mrf.mxu0
        %v2348 = vadd.f32 %v2299, %v2347
        %v2349 = vpop.f32.mrf.mxu0
        %v2350 = vadd.f32 %v2301, %v2349
        %2351 = vmatmul.bf16.gmra.mxu0 %v1994
        %v2352 = vpop.f32.mrf.mxu0
        %v2353 = vadd.f32 %v2304, %v2352
        %v2354 = vpop.f32.mrf.mxu0
        %v2355 = vadd.f32 %v2306, %v2354
        %2356 = vdwg.mxu0
        %v2357 = vadd.f32 %v2220, %v611
        %v2358 = vadd.f32 %v2318, %v660
        %v2359 = vadd.f32 %v2222, %v613
        %v2360 = vadd.f32 %v2320, %v662
        %v2361 = vadd.f32 %v2225, %v616
        %v2362 = vadd.f32 %v2323, %v665
        %v2363 = vadd.f32 %v2227, %v618
        %v2364 = vadd.f32 %v2325, %v667
        %v2365 = vadd.f32 %v2230, %v621
        %v2366 = vadd.f32 %v2328, %v670
        %v2367 = vadd.f32 %v2232, %v623
        %v2368 = vadd.f32 %v2330, %v672
        %v2369 = vadd.f32 %v2235, %v626
        %v2370 = vadd.f32 %v2333, %v675
        %v2371 = vadd.f32 %v2237, %v628
        %v2372 = vadd.f32 %v2335, %v677
        %v2373 = vadd.f32 %v2240, %v631
        %v2374 = vadd.f32 %v2338, %v680
        %v2375 = vadd.f32 %v2242, %v633
        %v2376 = vadd.f32 %v2340, %v682
        %v2377 = vadd.f32 %v2245, %v636
        %v2378 = vadd.f32 %v2343, %v685
        %v2379 = vadd.f32 %v2247, %v638
        %v2380 = vadd.f32 %v2345, %v687
        %v2381 = vadd.f32 %v2250, %v641
        %v2382 = vadd.f32 %v2348, %v690
        %v2383 = vadd.f32 %v2252, %v643
        %v2384 = vadd.f32 %v2350, %v692
        %v2385 = vadd.f32 %v2255, %v646
        %v2386 = vadd.f32 %v2353, %v695
        %v2387 = vadd.f32 %v2257, %v648
        %v2388 = vadd.f32 %v2355, %v697
        %v2389 = vadd.f32 %v2357, %v2358
        %2390 = vadd.xlane.f32.xlu0 %v2389
        %v2391 = vpop.xlane.xlu0 %2390
        %v2392 = vadd.f32 %v2359, %v2360
        %2393 = vadd.xlane.f32.xlu0 %v2392
        %v2394 = vpop.xlane.xlu0 %2393
        %v2395 = vadd.f32 %v2361, %v2362
        %2396 = vadd.xlane.f32.xlu0 %v2395
        %v2397 = vpop.xlane.xlu0 %2396
        %v2398 = vadd.f32 %v2363, %v2364
        %2399 = vadd.xlane.f32.xlu0 %v2398
        %v2400 = vpop.xlane.xlu0 %2399
        %v2401 = vadd.f32 %v2365, %v2366
        %2402 = vadd.xlane.f32.xlu0 %v2401
        %v2403 = vpop.xlane.xlu0 %2402
        %v2404 = vadd.f32 %v2367, %v2368
        %2405 = vadd.xlane.f32.xlu0 %v2404
        %v2406 = vpop.xlane.xlu0 %2405
        %v2407 = vadd.f32 %v2369, %v2370
        %2408 = vadd.xlane.f32.xlu0 %v2407
        %v2409 = vpop.xlane.xlu0 %2408
        %v2410 = vadd.f32 %v2371, %v2372
        %2411 = vadd.xlane.f32.xlu0 %v2410
        %v2412 = vpop.xlane.xlu0 %2411
        %v2413 = vadd.f32 %v2373, %v2374
        %2414 = vadd.xlane.f32.xlu0 %v2413
        %v2415 = vpop.xlane.xlu0 %2414
        %v2416 = vadd.f32 %v2375, %v2376
        %2417 = vadd.xlane.f32.xlu0 %v2416
        %v2418 = vpop.xlane.xlu0 %2417
        %v2419 = vadd.f32 %v2377, %v2378
        %2420 = vadd.xlane.f32.xlu0 %v2419
        %v2421 = vpop.xlane.xlu0 %2420
        %v2422 = vadd.f32 %v2379, %v2380
        %2423 = vadd.xlane.f32.xlu0 %v2422
        %v2424 = vpop.xlane.xlu0 %2423
        %v2425 = vadd.f32 %v2381, %v2382
        %2426 = vadd.xlane.f32.xlu0 %v2425
        %v2427 = vpop.xlane.xlu0 %2426
        %v2428 = vadd.f32 %v2383, %v2384
        %2429 = vadd.xlane.f32.xlu0 %v2428
        %v2430 = vpop.xlane.xlu0 %2429
        %v2431 = vadd.f32 %v2385, %v2386
        %2432 = vadd.xlane.f32.xlu0 %v2431
        %v2433 = vpop.xlane.xlu0 %2432
        %v2434 = vadd.f32 %v2387, %v2388
        %2435 = vadd.xlane.f32.xlu0 %v2434
        %v2436 = vpop.xlane.xlu0 %2435
        %v2437 = vrcp.pop 256.0
        %v2438 = vmul.f32 256.0, %v2437
        %v2439 = vsub.f32 1.0, %v2438
        %v2440 = vmul.f32 %v2437, %v2439
        %v2441 = vadd.f32 %v2437, %v2440
        %vm2442 = vweird.f32 %v2437
        %v2443 = vsel %vm2442, %v2437, %v2441
        %v2444 = vmul.f32 %v2391, %v2443
        %v2445 = vmul.f32 %v2394, %v2443
        %v2446 = vmul.f32 %v2397, %v2443
        %v2447 = vmul.f32 %v2400, %v2443
        %v2448 = vmul.f32 %v2403, %v2443
        %v2449 = vmul.f32 %v2406, %v2443
        %v2450 = vmul.f32 %v2409, %v2443
        %v2451 = vmul.f32 %v2412, %v2443
        %v2452 = vmul.f32 %v2415, %v2443
        %v2453 = vmul.f32 %v2418, %v2443
        %v2454 = vmul.f32 %v2421, %v2443
        %v2455 = vmul.f32 %v2424, %v2443
        %v2456 = vmul.f32 %v2427, %v2443
        %v2457 = vmul.f32 %v2430, %v2443
        %v2458 = vmul.f32 %v2433, %v2443
        %v2459 = vmul.f32 %v2436, %v2443
        %v2460 = vsub.f32 %v2357, %v2444
        %v2461 = vsub.f32 %v2358, %v2444
        %v2462 = vsub.f32 %v2359, %v2445
        %v2463 = vsub.f32 %v2360, %v2445
        %v2464 = vsub.f32 %v2361, %v2446
        %v2465 = vsub.f32 %v2362, %v2446
        %v2466 = vsub.f32 %v2363, %v2447
        %v2467 = vsub.f32 %v2364, %v2447
        %v2468 = vsub.f32 %v2365, %v2448
        %v2469 = vsub.f32 %v2366, %v2448
        %v2470 = vsub.f32 %v2367, %v2449
        %v2471 = vsub.f32 %v2368, %v2449
        %v2472 = vsub.f32 %v2369, %v2450
        %v2473 = vsub.f32 %v2370, %v2450
        %v2474 = vsub.f32 %v2371, %v2451
        %v2475 = vsub.f32 %v2372, %v2451
        %v2476 = vsub.f32 %v2373, %v2452
        %v2477 = vsub.f32 %v2374, %v2452
        %v2478 = vsub.f32 %v2375, %v2453
        %v2479 = vsub.f32 %v2376, %v2453
        %v2480 = vsub.f32 %v2377, %v2454
        %v2481 = vsub.f32 %v2378, %v2454
        %v2482 = vsub.f32 %v2379, %v2455
        %v2483 = vsub.f32 %v2380, %v2455
        %v2484 = vsub.f32 %v2381, %v2456
        %v2485 = vsub.f32 %v2382, %v2456
        %v2486 = vsub.f32 %v2383, %v2457
        %v2487 = vsub.f32 %v2384, %v2457
        %v2488 = vsub.f32 %v2385, %v2458
        %v2489 = vsub.f32 %v2386, %v2458
        %v2490 = vsub.f32 %v2387, %v2459
        %v2491 = vsub.f32 %v2388, %v2459
        %v2492 = vmul.f32 %v2460, %v2460
        %v2493 = vmul.f32 %v2461, %v2461
        %v2494 = vmul.f32 %v2462, %v2462
        %v2495 = vmul.f32 %v2463, %v2463
        %v2496 = vmul.f32 %v2464, %v2464
        %v2497 = vmul.f32 %v2465, %v2465
        %v2498 = vmul.f32 %v2466, %v2466
        %v2499 = vmul.f32 %v2467, %v2467
        %v2500 = vmul.f32 %v2468, %v2468
        %v2501 = vmul.f32 %v2469, %v2469
        %v2502 = vmul.f32 %v2470, %v2470
        %v2503 = vmul.f32 %v2471, %v2471
        %v2504 = vmul.f32 %v2472, %v2472
        %v2505 = vmul.f32 %v2473, %v2473
        %v2506 = vmul.f32 %v2474, %v2474
        %v2507 = vmul.f32 %v2475, %v2475
        %v2508 = vmul.f32 %v2476, %v2476
        %v2509 = vmul.f32 %v2477, %v2477
        %v2510 = vmul.f32 %v2478, %v2478
        %v2511 = vmul.f32 %v2479, %v2479
        %v2512 = vmul.f32 %v2480, %v2480
        %v2513 = vmul.f32 %v2481, %v2481
        %v2514 = vmul.f32 %v2482, %v2482
        %v2515 = vmul.f32 %v2483, %v2483
        %v2516 = vmul.f32 %v2484, %v2484
        %v2517 = vmul.f32 %v2485, %v2485
        %v2518 = vmul.f32 %v2486, %v2486
        %v2519 = vmul.f32 %v2487, %v2487
        %v2520 = vmul.f32 %v2488, %v2488
        %v2521 = vmul.f32 %v2489, %v2489
        %v2522 = vmul.f32 %v2490, %v2490
        %v2523 = vmul.f32 %v2491, %v2491
        %v2524 = vadd.f32 %v2492, %v2493
        %2525 = vadd.xlane.f32.xlu0 %v2524
        %v2526 = vpop.xlane.xlu0 %2525
        %v2527 = vadd.f32 %v2494, %v2495
        %2528 = vadd.xlane.f32.xlu0 %v2527
        %v2529 = vpop.xlane.xlu0 %2528
        %v2530 = vadd.f32 %v2496, %v2497
        %2531 = vadd.xlane.f32.xlu0 %v2530
        %v2532 = vpop.xlane.xlu0 %2531
        %v2533 = vadd.f32 %v2498, %v2499
        %2534 = vadd.xlane.f32.xlu0 %v2533
        %v2535 = vpop.xlane.xlu0 %2534
        %v2536 = vadd.f32 %v2500, %v2501
        %2537 = vadd.xlane.f32.xlu0 %v2536
        %v2538 = vpop.xlane.xlu0 %2537
        %v2539 = vadd.f32 %v2502, %v2503
        %2540 = vadd.xlane.f32.xlu0 %v2539
        %v2541 = vpop.xlane.xlu0 %2540
        %v2542 = vadd.f32 %v2504, %v2505
        %2543 = vadd.xlane.f32.xlu0 %v2542
        %v2544 = vpop.xlane.xlu0 %2543
        %v2545 = vadd.f32 %v2506, %v2507
        %2546 = vadd.xlane.f32.xlu0 %v2545
        %v2547 = vpop.xlane.xlu0 %2546
        %v2548 = vadd.f32 %v2508, %v2509
        %2549 = vadd.xlane.f32.xlu0 %v2548
        %v2550 = vpop.xlane.xlu0 %2549
        %v2551 = vadd.f32 %v2510, %v2511
        %2552 = vadd.xlane.f32.xlu0 %v2551
        %v2553 = vpop.xlane.xlu0 %2552
        %v2554 = vadd.f32 %v2512, %v2513
        %2555 = vadd.xlane.f32.xlu0 %v2554
        %v2556 = vpop.xlane.xlu0 %2555
        %v2557 = vadd.f32 %v2514, %v2515
        %2558 = vadd.xlane.f32.xlu0 %v2557
        %v2559 = vpop.xlane.xlu0 %2558
        %v2560 = vadd.f32 %v2516, %v2517
        %2561 = vadd.xlane.f32.xlu0 %v2560
        %v2562 = vpop.xlane.xlu0 %2561
        %v2563 = vadd.f32 %v2518, %v2519
        %2564 = vadd.xlane.f32.xlu0 %v2563
        %v2565 = vpop.xlane.xlu0 %2564
        %v2566 = vadd.f32 %v2520, %v2521
        %2567 = vadd.xlane.f32.xlu0 %v2566
        %v2568 = vpop.xlane.xlu0 %2567
        %v2569 = vadd.f32 %v2522, %v2523
        %2570 = vadd.xlane.f32.xlu0 %v2569
        %v2571 = vpop.xlane.xlu0 %2570
        %v2572 = vmul.f32 %v2526, %v2443
        %v2573 = vmul.f32 %v2529, %v2443
        %v2574 = vmul.f32 %v2532, %v2443
        %v2575 = vmul.f32 %v2535, %v2443
        %v2576 = vmul.f32 %v2538, %v2443
        %v2577 = vmul.f32 %v2541, %v2443
        %v2578 = vmul.f32 %v2544, %v2443
        %v2579 = vmul.f32 %v2547, %v2443
        %v2580 = vmul.f32 %v2550, %v2443
        %v2581 = vmul.f32 %v2553, %v2443
        %v2582 = vmul.f32 %v2556, %v2443
        %v2583 = vmul.f32 %v2559, %v2443
        %v2584 = vmul.f32 %v2562, %v2443
        %v2585 = vmul.f32 %v2565, %v2443
        %v2586 = vmul.f32 %v2568, %v2443
        %v2587 = vmul.f32 %v2571, %v2443
        %v2588 = vadd.f32 %v2572, 1e-05
        %v2589 = vadd.f32 %v2573, 1e-05
        %v2590 = vadd.f32 %v2574, 1e-05
        %v2591 = vadd.f32 %v2575, 1e-05
        %v2592 = vadd.f32 %v2576, 1e-05
        %v2593 = vadd.f32 %v2577, 1e-05
        %v2594 = vadd.f32 %v2578, 1e-05
        %v2595 = vadd.f32 %v2579, 1e-05
        %v2596 = vadd.f32 %v2580, 1e-05
        %v2597 = vadd.f32 %v2581, 1e-05
        %v2598 = vadd.f32 %v2582, 1e-05
        %v2599 = vadd.f32 %v2583, 1e-05
        %v2600 = vadd.f32 %v2584, 1e-05
        %v2601 = vadd.f32 %v2585, 1e-05
        %v2602 = vadd.f32 %v2586, 1e-05
        %v2603 = vadd.f32 %v2587, 1e-05
        %v2604 = vrsqrt.pop %v2588
        %v2605 = vmul.f32 %v2604, %v2588
        %v2606 = vmul.f32 %v2605, %v2604
        %v2607 = vmul.f32 0.5, %v2606
        %v2608 = vsub.f32 1.5, %v2607
        %v2609 = vmul.f32 %v2604, %v2608
        %vm2610 = vweird.f32 %v2588
        %vm2611 = vweird.f32 %v2604
        %vm2612 = vmor %vm2610, %vm2611
        %v2613 = vsel %vm2612, %v2604, %v2609
        %v2614 = vrsqrt.pop %v2589
        %v2615 = vmul.f32 %v2614, %v2589
        %v2616 = vmul.f32 %v2615, %v2614
        %v2617 = vmul.f32 0.5, %v2616
        %v2618 = vsub.f32 1.5, %v2617
        %v2619 = vmul.f32 %v2614, %v2618
        %vm2620 = vweird.f32 %v2589
        %vm2621 = vweird.f32 %v2614
        %vm2622 = vmor %vm2620, %vm2621
        %v2623 = vsel %vm2622, %v2614, %v2619
        %v2624 = vrsqrt.pop %v2590
        %v2625 = vmul.f32 %v2624, %v2590
        %v2626 = vmul.f32 %v2625, %v2624
        %v2627 = vmul.f32 0.5, %v2626
        %v2628 = vsub.f32 1.5, %v2627
        %v2629 = vmul.f32 %v2624, %v2628
        %vm2630 = vweird.f32 %v2590
        %vm2631 = vweird.f32 %v2624
        %vm2632 = vmor %vm2630, %vm2631
        %v2633 = vsel %vm2632, %v2624, %v2629
        %v2634 = vrsqrt.pop %v2591
        %v2635 = vmul.f32 %v2634, %v2591
        %v2636 = vmul.f32 %v2635, %v2634
        %v2637 = vmul.f32 0.5, %v2636
        %v2638 = vsub.f32 1.5, %v2637
        %v2639 = vmul.f32 %v2634, %v2638
        %vm2640 = vweird.f32 %v2591
        %vm2641 = vweird.f32 %v2634
        %vm2642 = vmor %vm2640, %vm2641
        %v2643 = vsel %vm2642, %v2634, %v2639
        %v2644 = vrsqrt.pop %v2592
        %v2645 = vmul.f32 %v2644, %v2592
        %v2646 = vmul.f32 %v2645, %v2644
        %v2647 = vmul.f32 0.5, %v2646
        %v2648 = vsub.f32 1.5, %v2647
        %v2649 = vmul.f32 %v2644, %v2648
        %vm2650 = vweird.f32 %v2592
        %vm2651 = vweird.f32 %v2644
        %vm2652 = vmor %vm2650, %vm2651
        %v2653 = vsel %vm2652, %v2644, %v2649
        %v2654 = vrsqrt.pop %v2593
        %v2655 = vmul.f32 %v2654, %v2593
        %v2656 = vmul.f32 %v2655, %v2654
        %v2657 = vmul.f32 0.5, %v2656
        %v2658 = vsub.f32 1.5, %v2657
        %v2659 = vmul.f32 %v2654, %v2658
        %vm2660 = vweird.f32 %v2593
        %vm2661 = vweird.f32 %v2654
        %vm2662 = vmor %vm2660, %vm2661
        %v2663 = vsel %vm2662, %v2654, %v2659
        %v2664 = vrsqrt.pop %v2594
        %v2665 = vmul.f32 %v2664, %v2594
        %v2666 = vmul.f32 %v2665, %v2664
        %v2667 = vmul.f32 0.5, %v2666
        %v2668 = vsub.f32 1.5, %v2667
        %v2669 = vmul.f32 %v2664, %v2668
        %vm2670 = vweird.f32 %v2594
        %vm2671 = vweird.f32 %v2664
        %vm2672 = vmor %vm2670, %vm2671
        %v2673 = vsel %vm2672, %v2664, %v2669
        %v2674 = vrsqrt.pop %v2595
        %v2675 = vmul.f32 %v2674, %v2595
        %v2676 = vmul.f32 %v2675, %v2674
        %v2677 = vmul.f32 0.5, %v2676
        %v2678 = vsub.f32 1.5, %v2677
        %v2679 = vmul.f32 %v2674, %v2678
        %vm2680 = vweird.f32 %v2595
        %vm2681 = vweird.f32 %v2674
        %vm2682 = vmor %vm2680, %vm2681
        %v2683 = vsel %vm2682, %v2674, %v2679
        %v2684 = vrsqrt.pop %v2596
        %v2685 = vmul.f32 %v2684, %v2596
        %v2686 = vmul.f32 %v2685, %v2684
        %v2687 = vmul.f32 0.5, %v2686
        %v2688 = vsub.f32 1.5, %v2687
        %v2689 = vmul.f32 %v2684, %v2688
        %vm2690 = vweird.f32 %v2596
        %vm2691 = vweird.f32 %v2684
        %vm2692 = vmor %vm2690, %vm2691
        %v2693 = vsel %vm2692, %v2684, %v2689
        %v2694 = vrsqrt.pop %v2597
        %v2695 = vmul.f32 %v2694, %v2597
        %v2696 = vmul.f32 %v2695, %v2694
        %v2697 = vmul.f32 0.5, %v2696
        %v2698 = vsub.f32 1.5, %v2697
        %v2699 = vmul.f32 %v2694, %v2698
        %vm2700 = vweird.f32 %v2597
        %vm2701 = vweird.f32 %v2694
        %vm2702 = vmor %vm2700, %vm2701
        %v2703 = vsel %vm2702, %v2694, %v2699
        %v2704 = vrsqrt.pop %v2598
        %v2705 = vmul.f32 %v2704, %v2598
        %v2706 = vmul.f32 %v2705, %v2704
        %v2707 = vmul.f32 0.5, %v2706
        %v2708 = vsub.f32 1.5, %v2707
        %v2709 = vmul.f32 %v2704, %v2708
        %vm2710 = vweird.f32 %v2598
        %vm2711 = vweird.f32 %v2704
        %vm2712 = vmor %vm2710, %vm2711
        %v2713 = vsel %vm2712, %v2704, %v2709
        %v2714 = vrsqrt.pop %v2599
        %v2715 = vmul.f32 %v2714, %v2599
        %v2716 = vmul.f32 %v2715, %v2714
        %v2717 = vmul.f32 0.5, %v2716
        %v2718 = vsub.f32 1.5, %v2717
        %v2719 = vmul.f32 %v2714, %v2718
        %vm2720 = vweird.f32 %v2599
        %vm2721 = vweird.f32 %v2714
        %vm2722 = vmor %vm2720, %vm2721
        %v2723 = vsel %vm2722, %v2714, %v2719
        %v2724 = vrsqrt.pop %v2600
        %v2725 = vmul.f32 %v2724, %v2600
        %v2726 = vmul.f32 %v2725, %v2724
        %v2727 = vmul.f32 0.5, %v2726
        %v2728 = vsub.f32 1.5, %v2727
        %v2729 = vmul.f32 %v2724, %v2728
        %vm2730 = vweird.f32 %v2600
        %vm2731 = vweird.f32 %v2724
        %vm2732 = vmor %vm2730, %vm2731
        %v2733 = vsel %vm2732, %v2724, %v2729
        %v2734 = vrsqrt.pop %v2601
        %v2735 = vmul.f32 %v2734, %v2601
        %v2736 = vmul.f32 %v2735, %v2734
        %v2737 = vmul.f32 0.5, %v2736
        %v2738 = vsub.f32 1.5, %v2737
        %v2739 = vmul.f32 %v2734, %v2738
        %vm2740 = vweird.f32 %v2601
        %vm2741 = vweird.f32 %v2734
        %vm2742 = vmor %vm2740, %vm2741
        %v2743 = vsel %vm2742, %v2734, %v2739
        %v2744 = vrsqrt.pop %v2602
        %v2745 = vmul.f32 %v2744, %v2602
        %v2746 = vmul.f32 %v2745, %v2744
        %v2747 = vmul.f32 0.5, %v2746
        %v2748 = vsub.f32 1.5, %v2747
        %v2749 = vmul.f32 %v2744, %v2748
        %vm2750 = vweird.f32 %v2602
        %vm2751 = vweird.f32 %v2744
        %vm2752 = vmor %vm2750, %vm2751
        %v2753 = vsel %vm2752, %v2744, %v2749
        %v2754 = vrsqrt.pop %v2603
        %v2755 = vmul.f32 %v2754, %v2603
        %v2756 = vmul.f32 %v2755, %v2754
        %v2757 = vmul.f32 0.5, %v2756
        %v2758 = vsub.f32 1.5, %v2757
        %v2759 = vmul.f32 %v2754, %v2758
        %vm2760 = vweird.f32 %v2603
        %vm2761 = vweird.f32 %v2754
        %vm2762 = vmor %vm2760, %vm2761
        %v2763 = vsel %vm2762, %v2754, %v2759
        %v2764 = vmul.f32 %v2460, %v2613
        %v2765 = vmul.f32 %v2461, %v2613
        %v2766 = vmul.f32 %v2462, %v2623
        %v2767 = vmul.f32 %v2463, %v2623
        %v2768 = vmul.f32 %v2464, %v2633
        %v2769 = vmul.f32 %v2465, %v2633
        %v2770 = vmul.f32 %v2466, %v2643
        %v2771 = vmul.f32 %v2467, %v2643
        %v2772 = vmul.f32 %v2468, %v2653
        %v2773 = vmul.f32 %v2469, %v2653
        %v2774 = vmul.f32 %v2470, %v2663
        %v2775 = vmul.f32 %v2471, %v2663
        %v2776 = vmul.f32 %v2472, %v2673
        %v2777 = vmul.f32 %v2473, %v2673
        %v2778 = vmul.f32 %v2474, %v2683
        %v2779 = vmul.f32 %v2475, %v2683
        %v2780 = vmul.f32 %v2476, %v2693
        %v2781 = vmul.f32 %v2477, %v2693
        %v2782 = vmul.f32 %v2478, %v2703
        %v2783 = vmul.f32 %v2479, %v2703
        %v2784 = vmul.f32 %v2480, %v2713
        %v2785 = vmul.f32 %v2481, %v2713
        %v2786 = vmul.f32 %v2482, %v2723
        %v2787 = vmul.f32 %v2483, %v2723
        %v2788 = vmul.f32 %v2484, %v2733
        %v2789 = vmul.f32 %v2485, %v2733
        %v2790 = vmul.f32 %v2486, %v2743
        %v2791 = vmul.f32 %v2487, %v2743
        %v2792 = vmul.f32 %v2488, %v2753
        %v2793 = vmul.f32 %v2489, %v2753
        %v2794 = vmul.f32 %v2490, %v2763
        %v2795 = vmul.f32 %v2491, %v2763
        %v2796 = vperm.slane %v488, 2
        %v2797 = vperm.slane %v488, 6
        %v2800 = vperm.slane %v2796, 2
        %v2801 = vperm.slane %v2797, 2
        %v2802 = vmul.f32 %v2764, %v2800
        %v2803 = vmul.f32 %v2765, %v2801
        %v2804 = vmul.f32 %v2766, %v2800
        %v2805 = vmul.f32 %v2767, %v2801
        %v2806 = vmul.f32 %v2768, %v2800
        %v2807 = vmul.f32 %v2769, %v2801
        %v2808 = vmul.f32 %v2770, %v2800
        %v2809 = vmul.f32 %v2771, %v2801
        %v2810 = vmul.f32 %v2772, %v2800
        %v2811 = vmul.f32 %v2773, %v2801
        %v2812 = vmul.f32 %v2774, %v2800
        %v2813 = vmul.f32 %v2775, %v2801
        %v2814 = vmul.f32 %v2776, %v2800
        %v2815 = vmul.f32 %v2777, %v2801
        %v2816 = vmul.f32 %v2778, %v2800
        %v2817 = vmul.f32 %v2779, %v2801
        %v2818 = vmul.f32 %v2780, %v2800
        %v2819 = vmul.f32 %v2781, %v2801
        %v2820 = vmul.f32 %v2782, %v2800
        %v2821 = vmul.f32 %v2783, %v2801
        %v2822 = vmul.f32 %v2784, %v2800
        %v2823 = vmul.f32 %v2785, %v2801
        %v2824 = vmul.f32 %v2786, %v2800
        %v2825 = vmul.f32 %v2787, %v2801
        %v2826 = vmul.f32 %v2788, %v2800
        %v2827 = vmul.f32 %v2789, %v2801
        %v2828 = vmul.f32 %v2790, %v2800
        %v2829 = vmul.f32 %v2791, %v2801
        %v2830 = vmul.f32 %v2792, %v2800
        %v2831 = vmul.f32 %v2793, %v2801
        %v2832 = vmul.f32 %v2794, %v2800
        %v2833 = vmul.f32 %v2795, %v2801
        %v2834 = vperm.slane %v488, 3
        %v2835 = vperm.slane %v488, 7
        %v2838 = vperm.slane %v2834, 3
        %v2839 = vperm.slane %v2835, 3
        %v2840 = vadd.f32 %v2802, %v2838
        %v2841 = vadd.f32 %v2803, %v2839
        %v2842 = vadd.f32 %v2804, %v2838
        %v2843 = vadd.f32 %v2805, %v2839
        %v2844 = vadd.f32 %v2806, %v2838
        %v2845 = vadd.f32 %v2807, %v2839
        %v2846 = vadd.f32 %v2808, %v2838
        %v2847 = vadd.f32 %v2809, %v2839
        %v2848 = vadd.f32 %v2810, %v2838
        %v2849 = vadd.f32 %v2811, %v2839
        %v2850 = vadd.f32 %v2812, %v2838
        %v2851 = vadd.f32 %v2813, %v2839
        %v2852 = vadd.f32 %v2814, %v2838
        %v2853 = vadd.f32 %v2815, %v2839
        %v2854 = vadd.f32 %v2816, %v2838
        %v2855 = vadd.f32 %v2817, %v2839
        %v2856 = vadd.f32 %v2818, %v2838
        %v2857 = vadd.f32 %v2819, %v2839
        %v2858 = vadd.f32 %v2820, %v2838
        %v2859 = vadd.f32 %v2821, %v2839
        %v2860 = vadd.f32 %v2822, %v2838
        %v2861 = vadd.f32 %v2823, %v2839
        %v2862 = vadd.f32 %v2824, %v2838
        %v2863 = vadd.f32 %v2825, %v2839
        %v2864 = vadd.f32 %v2826, %v2838
        %v2865 = vadd.f32 %v2827, %v2839
        %v2866 = vadd.f32 %v2828, %v2838
        %v2867 = vadd.f32 %v2829, %v2839
        %v2868 = vadd.f32 %v2830, %v2838
        %v2869 = vadd.f32 %v2831, %v2839
        %v2870 = vadd.f32 %v2832, %v2838
        %v2871 = vadd.f32 %v2833, %v2839
        %v2872 = vld [vmem:[%s427] sm:$0xf]
        %v2873 = vld [vmem:[%s427 + $0x4] sm:$0xf]
        %v2874 = vld [vmem:[%s427 + $0x8] sm:$0xf]
        %v2875 = vld [vmem:[%s427 + $0xc] sm:$0xf]
        %v2876 = vld [vmem:[%s427 + $0x10] sm:$0xf]
        %v2877 = vld [vmem:[%s427 + $0x14] sm:$0xf]
        %v2878 = vld [vmem:[%s427 + $0x18] sm:$0xf]
        %v2879 = vld [vmem:[%s427 + $0x1c] sm:$0xf]
        %v2880 = vld [vmem:[%s427 + $0x20] sm:$0xf]
        %v2881 = vld [vmem:[%s427 + $0x24] sm:$0xf]
        %v2882 = vld [vmem:[%s427 + $0x28] sm:$0xf]
        %v2883 = vld [vmem:[%s427 + $0x2c] sm:$0xf]
        %v2884 = vld [vmem:[%s427 + $0x30] sm:$0xf]
        %v2885 = vld [vmem:[%s427 + $0x34] sm:$0xf]
        %v2886 = vld [vmem:[%s427 + $0x38] sm:$0xf]
        %v2887 = vld [vmem:[%s427 + $0x3c] sm:$0xf]
        %v2888 = vld [vmem:[#allocation5] sm:$0xff]
        %v2889 = vld [vmem:[#allocation5 + $0x8] sm:$0xff]
        %v2890 = vld [vmem:[#allocation5 + $0x10] sm:$0xff]
        %v2891 = vld [vmem:[#allocation5 + $0x18] sm:$0xff]
        %v2892 = vld [vmem:[#allocation7] sm:$0xff]
        %v2893 = vld [vmem:[#allocation7 + $0x8] sm:$0xff]
        %v2894 = vld [vmem:[#allocation7 + $0x10] sm:$0xff]
        %v2895 = vld [vmem:[#allocation7 + $0x18] sm:$0xff]
        %v2896 = vld [vmem:[#allocation7 + $0x20] sm:$0xff]
        %v2897 = vld [vmem:[#allocation7 + $0x28] sm:$0xff]
        %v2898 = vld [vmem:[#allocation7 + $0x30] sm:$0xff]
        %v2899 = vld [vmem:[#allocation7 + $0x38] sm:$0xff]
        %v2900 = vld [vmem:[#allocation7 + $0x40] sm:$0xff]
        %v2901 = vld [vmem:[#allocation7 + $0x48] sm:$0xff]
        %v2902 = vld [vmem:[#allocation7 + $0x50] sm:$0xff]
        %v2903 = vld [vmem:[#allocation7 + $0x58] sm:$0xff]
        %v2904 = vld [vmem:[#allocation7 + $0x60] sm:$0xff]
        %v2905 = vld [vmem:[#allocation7 + $0x68] sm:$0xff]
        %v2906 = vld [vmem:[#allocation7 + $0x70] sm:$0xff]
        %v2907 = vld [vmem:[#allocation7 + $0x78] sm:$0xff]
        %v2908 = vld [vmem:[#allocation7 + $0x80] sm:$0xff]
        %v2909 = vld [vmem:[#allocation7 + $0x88] sm:$0xff]
        %v2910 = vld [vmem:[#allocation7 + $0x90] sm:$0xff]
        %v2911 = vld [vmem:[#allocation7 + $0x98] sm:$0xff]
        %v2912 = vld [vmem:[#allocation7 + $0xa0] sm:$0xff]
        %v2913 = vld [vmem:[#allocation7 + $0xa8] sm:$0xff]
        %v2914 = vld [vmem:[#allocation7 + $0xb0] sm:$0xff]
        %v2915 = vld [vmem:[#allocation7 + $0xb8] sm:$0xff]
        %v2916 = vld [vmem:[#allocation7 + $0xc0] sm:$0xff]
        %v2917 = vld [vmem:[#allocation7 + $0xc8] sm:$0xff]
        %v2918 = vld [vmem:[#allocation7 + $0xd0] sm:$0xff]
        %v2919 = vld [vmem:[#allocation7 + $0xd8] sm:$0xff]
        %v2920 = vld [vmem:[#allocation7 + $0xe0] sm:$0xff]
        %v2921 = vld [vmem:[#allocation7 + $0xe8] sm:$0xff]
        %v2922 = vld [vmem:[#allocation7 + $0xf0] sm:$0xff]
        %v2923 = vld [vmem:[#allocation7 + $0xf8] sm:$0xff]
        %v2924 = vld [vmem:[#allocation8] sm:$0xff]
        %v2926 = vperm.slane %v2924, 0
        %v2927 = vperm.slane %v2924, 4
        %v2930 = vperm.slane %v2926, 0
        %v2931 = vperm.slane %v2927, 0
        %v2948 = vunpack.c.l.b16 %v2872
        %v2949 = vunpack.c.l.b16 %v2873
        %v2950 = vunpack.c.l.b16 %v2874
        %v2951 = vunpack.c.l.b16 %v2875
        %v2952 = vunpack.c.l.b16 %v2876
        %v2953 = vunpack.c.l.b16 %v2877
        %v2954 = vunpack.c.l.b16 %v2878
        %v2955 = vunpack.c.l.b16 %v2879
        %v2956 = vunpack.c.l.b16 %v2880
        %v2957 = vunpack.c.l.b16 %v2881
        %v2958 = vunpack.c.l.b16 %v2882
        %v2959 = vunpack.c.l.b16 %v2883
        %v2960 = vunpack.c.l.b16 %v2884
        %v2961 = vunpack.c.l.b16 %v2885
        %v2962 = vunpack.c.l.b16 %v2886
        %v2963 = vunpack.c.l.b16 %v2887
        %v2964 = vpack.c.b16 %v2949, %v2948
        %v2965 = vpack.c.b16 %v2951, %v2950
        %v2966 = vpack.c.b16 %v2953, %v2952
        %v2967 = vpack.c.b16 %v2955, %v2954
        %v2968 = vpack.c.b16 %v2957, %v2956
        %v2969 = vpack.c.b16 %v2959, %v2958
        %v2970 = vpack.c.b16 %v2961, %v2960
        %v2971 = vpack.c.b16 %v2963, %v2962
        %v2976 = vunpack.c.l.b16 %v2888
        %v2977 = vunpack.c.h.b16 %v2888
        %v2978 = vunpack.c.l.b16 %v2889
        %v2979 = vunpack.c.h.b16 %v2889
        %v2980 = vunpack.c.l.b16 %v2890
        %v2981 = vunpack.c.h.b16 %v2890
        %v2982 = vunpack.c.l.b16 %v2891
        %v2983 = vunpack.c.h.b16 %v2891
        %v2984 = vpack.c.b16 %v2978, %v2976
        %v2985 = vpack.c.b16 %v2979, %v2977
        %v2986 = vpack.c.b16 %v2982, %v2980
        %v2987 = vpack.c.b16 %v2983, %v2981
        %vm2992 = vcmask 261120
        %v2994 = vsel %vm2992, %v2964, 0
        %v2997 = vsel %vm2992, %v2965, 0
        %v3000 = vsel %vm2992, %v2966, 0
        %v3003 = vsel %vm2992, %v2967, 0
        %v3006 = vsel %vm2992, %v2968, 0
        %v3009 = vsel %vm2992, %v2969, 0
        %v3012 = vsel %vm2992, %v2970, 0
        %v3015 = vsel %vm2992, %v2971, 0
        %3017 = vmatpush.bf16.msra.mxu0 0
        %3018 = vmatpush.bf16.msra.mxu0 0
        %3019 = vmatpush.bf16.msra.mxu0 0
        %3020 = vmatpush.bf16.msra.mxu0 0
        %3021 = vmatpush.bf16.msra.mxu0 0
        %3022 = vmatpush.bf16.msra.mxu0 0
        %3023 = vmatpush.bf16.msra.mxu0 %v2986
        %3024 = vmatpush.bf16.msra.mxu0 %v2984
        %3025 = vmatmul.bf16.gmra.mxu0 %v2994
        %v3026 = vpop.f32.mrf.mxu0
        %v3027 = vadd.f32 %v2930, %v3026
        %v3028 = vpop.f32.mrf.mxu0
        %v3029 = vadd.f32 %v2930, %v3028
        %3030 = vmatmul.bf16.gmra.mxu0 %v2997
        %v3031 = vpop.f32.mrf.mxu0
        %v3032 = vadd.f32 %v2930, %v3031
        %v3033 = vpop.f32.mrf.mxu0
        %v3034 = vadd.f32 %v2930, %v3033
        %3035 = vmatmul.bf16.gmra.mxu0 %v3000
        %v3036 = vpop.f32.mrf.mxu0
        %v3037 = vadd.f32 %v2930, %v3036
        %v3038 = vpop.f32.mrf.mxu0
        %v3039 = vadd.f32 %v2930, %v3038
        %3040 = vmatmul.bf16.gmra.mxu0 %v3003
        %v3041 = vpop.f32.mrf.mxu0
        %v3042 = vadd.f32 %v2930, %v3041
        %v3043 = vpop.f32.mrf.mxu0
        %v3044 = vadd.f32 %v2930, %v3043
        %3045 = vmatmul.bf16.gmra.mxu0 %v3006
        %v3046 = vpop.f32.mrf.mxu0
        %v3047 = vadd.f32 %v2930, %v3046
        %v3048 = vpop.f32.mrf.mxu0
        %v3049 = vadd.f32 %v2930, %v3048
        %3050 = vmatmul.bf16.gmra.mxu0 %v3009
        %v3051 = vpop.f32.mrf.mxu0
        %v3052 = vadd.f32 %v2930, %v3051
        %v3053 = vpop.f32.mrf.mxu0
        %v3054 = vadd.f32 %v2930, %v3053
        %3055 = vmatmul.bf16.gmra.mxu0 %v3012
        %v3056 = vpop.f32.mrf.mxu0
        %v3057 = vadd.f32 %v2930, %v3056
        %v3058 = vpop.f32.mrf.mxu0
        %v3059 = vadd.f32 %v2930, %v3058
        %3060 = vmatmul.bf16.gmra.mxu0 %v3015
        %v3061 = vpop.f32.mrf.mxu0
        %v3062 = vadd.f32 %v2930, %v3061
        %v3063 = vpop.f32.mrf.mxu0
        %v3064 = vadd.f32 %v2930, %v3063
        %3065 = vdwg.mxu0
        %3066 = vmatpush.bf16.msra.mxu0 0
        %3067 = vmatpush.bf16.msra.mxu0 0
        %3068 = vmatpush.bf16.msra.mxu0 0
        %3069 = vmatpush.bf16.msra.mxu0 0
        %3070 = vmatpush.bf16.msra.mxu0 0
        %3071 = vmatpush.bf16.msra.mxu0 0
        %3072 = vmatpush.bf16.msra.mxu0 %v2987
        %3073 = vmatpush.bf16.msra.mxu0 %v2985
        %3074 = vmatmul.bf16.gmra.mxu0 %v2994
        %v3075 = vpop.f32.mrf.mxu0
        %v3076 = vadd.f32 %v2931, %v3075
        %v3077 = vpop.f32.mrf.mxu0
        %v3078 = vadd.f32 %v2931, %v3077
        %3079 = vmatmul.bf16.gmra.mxu0 %v2997
        %v3080 = vpop.f32.mrf.mxu0
        %v3081 = vadd.f32 %v2931, %v3080
        %v3082 = vpop.f32.mrf.mxu0
        %v3083 = vadd.f32 %v2931, %v3082
        %3084 = vmatmul.bf16.gmra.mxu0 %v3000
        %v3085 = vpop.f32.mrf.mxu0
        %v3086 = vadd.f32 %v2931, %v3085
        %v3087 = vpop.f32.mrf.mxu0
        %v3088 = vadd.f32 %v2931, %v3087
        %3089 = vmatmul.bf16.gmra.mxu0 %v3003
        %v3090 = vpop.f32.mrf.mxu0
        %v3091 = vadd.f32 %v2931, %v3090
        %v3092 = vpop.f32.mrf.mxu0
        %v3093 = vadd.f32 %v2931, %v3092
        %3094 = vmatmul.bf16.gmra.mxu0 %v3006
        %v3095 = vpop.f32.mrf.mxu0
        %v3096 = vadd.f32 %v2931, %v3095
        %v3097 = vpop.f32.mrf.mxu0
        %v3098 = vadd.f32 %v2931, %v3097
        %3099 = vmatmul.bf16.gmra.mxu0 %v3009
        %v3100 = vpop.f32.mrf.mxu0
        %v3101 = vadd.f32 %v2931, %v3100
        %v3102 = vpop.f32.mrf.mxu0
        %v3103 = vadd.f32 %v2931, %v3102
        %3104 = vmatmul.bf16.gmra.mxu0 %v3012
        %v3105 = vpop.f32.mrf.mxu0
        %v3106 = vadd.f32 %v2931, %v3105
        %v3107 = vpop.f32.mrf.mxu0
        %v3108 = vadd.f32 %v2931, %v3107
        %3109 = vmatmul.bf16.gmra.mxu0 %v3015
        %v3110 = vpop.f32.mrf.mxu0
        %v3111 = vadd.f32 %v2931, %v3110
        %v3112 = vpop.f32.mrf.mxu0
        %v3113 = vadd.f32 %v2931, %v3112
        %3114 = vdwg.mxu0
        %v3115 = vmul.f32 %v3027, 0.5
        %v3116 = vmul.f32 %v3076, 0.5
        %v3117 = vmul.f32 %v3029, 0.5
        %v3118 = vmul.f32 %v3078, 0.5
        %v3119 = vmul.f32 %v3032, 0.5
        %v3120 = vmul.f32 %v3081, 0.5
        %v3121 = vmul.f32 %v3034, 0.5
        %v3122 = vmul.f32 %v3083, 0.5
        %v3123 = vmul.f32 %v3037, 0.5
        %v3124 = vmul.f32 %v3086, 0.5
        %v3125 = vmul.f32 %v3039, 0.5
        %v3126 = vmul.f32 %v3088, 0.5
        %v3127 = vmul.f32 %v3042, 0.5
        %v3128 = vmul.f32 %v3091, 0.5
        %v3129 = vmul.f32 %v3044, 0.5
        %v3130 = vmul.f32 %v3093, 0.5
        %v3131 = vmul.f32 %v3047, 0.5
        %v3132 = vmul.f32 %v3096, 0.5
        %v3133 = vmul.f32 %v3049, 0.5
        %v3134 = vmul.f32 %v3098, 0.5
        %v3135 = vmul.f32 %v3052, 0.5
        %v3136 = vmul.f32 %v3101, 0.5
        %v3137 = vmul.f32 %v3054, 0.5
        %v3138 = vmul.f32 %v3103, 0.5
        %v3139 = vmul.f32 %v3057, 0.5
        %v3140 = vmul.f32 %v3106, 0.5
        %v3141 = vmul.f32 %v3059, 0.5
        %v3142 = vmul.f32 %v3108, 0.5
        %v3143 = vmul.f32 %v3062, 0.5
        %v3144 = vmul.f32 %v3111, 0.5
        %v3145 = vmul.f32 %v3064, 0.5
        %v3146 = vmul.f32 %v3113, 0.5
        %v3147 = vmul.f32 %v3027, 0.70710677
        %v3148 = vmul.f32 %v3076, 0.70710677
        %v3149 = vmul.f32 %v3029, 0.70710677
        %v3150 = vmul.f32 %v3078, 0.70710677
        %v3151 = vmul.f32 %v3032, 0.70710677
        %v3152 = vmul.f32 %v3081, 0.70710677
        %v3153 = vmul.f32 %v3034, 0.70710677
        %v3154 = vmul.f32 %v3083, 0.70710677
        %v3155 = vmul.f32 %v3037, 0.70710677
        %v3156 = vmul.f32 %v3086, 0.70710677
        %v3157 = vmul.f32 %v3039, 0.70710677
        %v3158 = vmul.f32 %v3088, 0.70710677
        %v3159 = vmul.f32 %v3042, 0.70710677
        %v3160 = vmul.f32 %v3091, 0.70710677
        %v3161 = vmul.f32 %v3044, 0.70710677
        %v3162 = vmul.f32 %v3093, 0.70710677
        %v3163 = vmul.f32 %v3047, 0.70710677
        %v3164 = vmul.f32 %v3096, 0.70710677
        %v3165 = vmul.f32 %v3049, 0.70710677
        %v3166 = vmul.f32 %v3098, 0.70710677
        %v3167 = vmul.f32 %v3052, 0.70710677
        %v3168 = vmul.f32 %v3101, 0.70710677
        %v3169 = vmul.f32 %v3054, 0.70710677
        %v3170 = vmul.f32 %v3103, 0.70710677
        %v3171 = vmul.f32 %v3057, 0.70710677
        %v3172 = vmul.f32 %v3106, 0.70710677
        %v3173 = vmul.f32 %v3059, 0.70710677
        %v3174 = vmul.f32 %v3108, 0.70710677
        %v3175 = vmul.f32 %v3062, 0.70710677
        %v3176 = vmul.f32 %v3111, 0.70710677
        %v3177 = vmul.f32 %v3064, 0.70710677
        %v3178 = vmul.f32 %v3113, 0.70710677
        %vm3179 = vcmp.lt.f32.partialorder %v3147, 0.0
        %vm3180 = vcmp.lt.f32.partialorder %v3148, 0.0
        %vm3181 = vcmp.lt.f32.partialorder %v3149, 0.0
        %vm3182 = vcmp.lt.f32.partialorder %v3150, 0.0
        %vm3183 = vcmp.lt.f32.partialorder %v3151, 0.0
        %vm3184 = vcmp.lt.f32.partialorder %v3152, 0.0
        %vm3185 = vcmp.lt.f32.partialorder %v3153, 0.0
        %vm3186 = vcmp.lt.f32.partialorder %v3154, 0.0
        %vm3187 = vcmp.lt.f32.partialorder %v3155, 0.0
        %vm3188 = vcmp.lt.f32.partialorder %v3156, 0.0
        %vm3189 = vcmp.lt.f32.partialorder %v3157, 0.0
        %vm3190 = vcmp.lt.f32.partialorder %v3158, 0.0
        %vm3191 = vcmp.lt.f32.partialorder %v3159, 0.0
        %vm3192 = vcmp.lt.f32.partialorder %v3160, 0.0
        %vm3193 = vcmp.lt.f32.partialorder %v3161, 0.0
        %vm3194 = vcmp.lt.f32.partialorder %v3162, 0.0
        %vm3195 = vcmp.lt.f32.partialorder %v3163, 0.0
        %vm3196 = vcmp.lt.f32.partialorder %v3164, 0.0
        %vm3197 = vcmp.lt.f32.partialorder %v3165, 0.0
        %vm3198 = vcmp.lt.f32.partialorder %v3166, 0.0
        %vm3199 = vcmp.lt.f32.partialorder %v3167, 0.0
        %vm3200 = vcmp.lt.f32.partialorder %v3168, 0.0
        %vm3201 = vcmp.lt.f32.partialorder %v3169, 0.0
        %vm3202 = vcmp.lt.f32.partialorder %v3170, 0.0
        %vm3203 = vcmp.lt.f32.partialorder %v3171, 0.0
        %vm3204 = vcmp.lt.f32.partialorder %v3172, 0.0
        %vm3205 = vcmp.lt.f32.partialorder %v3173, 0.0
        %vm3206 = vcmp.lt.f32.partialorder %v3174, 0.0
        %vm3207 = vcmp.lt.f32.partialorder %v3175, 0.0
        %vm3208 = vcmp.lt.f32.partialorder %v3176, 0.0
        %vm3209 = vcmp.lt.f32.partialorder %v3177, 0.0
        %vm3210 = vcmp.lt.f32.partialorder %v3178, 0.0
        %v3211 = vsel %vm3179, -1.0, 1.0
        %v3212 = vsel %vm3180, -1.0, 1.0
        %v3213 = vsel %vm3181, -1.0, 1.0
        %v3214 = vsel %vm3182, -1.0, 1.0
        %v3215 = vsel %vm3183, -1.0, 1.0
        %v3216 = vsel %vm3184, -1.0, 1.0
        %v3217 = vsel %vm3185, -1.0, 1.0
        %v3218 = vsel %vm3186, -1.0, 1.0
        %v3219 = vsel %vm3187, -1.0, 1.0
        %v3220 = vsel %vm3188, -1.0, 1.0
        %v3221 = vsel %vm3189, -1.0, 1.0
        %v3222 = vsel %vm3190, -1.0, 1.0
        %v3223 = vsel %vm3191, -1.0, 1.0
        %v3224 = vsel %vm3192, -1.0, 1.0
        %v3225 = vsel %vm3193, -1.0, 1.0
        %v3226 = vsel %vm3194, -1.0, 1.0
        %v3227 = vsel %vm3195, -1.0, 1.0
        %v3228 = vsel %vm3196, -1.0, 1.0
        %v3229 = vsel %vm3197, -1.0, 1.0
        %v3230 = vsel %vm3198, -1.0, 1.0
        %v3231 = vsel %vm3199, -1.0, 1.0
        %v3232 = vsel %vm3200, -1.0, 1.0
        %v3233 = vsel %vm3201, -1.0, 1.0
        %v3234 = vsel %vm3202, -1.0, 1.0
        %v3235 = vsel %vm3203, -1.0, 1.0
        %v3236 = vsel %vm3204, -1.0, 1.0
        %v3237 = vsel %vm3205, -1.0, 1.0
        %v3238 = vsel %vm3206, -1.0, 1.0
        %v3239 = vsel %vm3207, -1.0, 1.0
        %v3240 = vsel %vm3208, -1.0, 1.0
        %v3241 = vsel %vm3209, -1.0, 1.0
        %v3242 = vsel %vm3210, -1.0, 1.0
        %v3243 = vand.u32 2147483647, %v3147
        %v3244 = vand.u32 2147483647, %v3148
        %v3245 = vand.u32 2147483647, %v3149
        %v3246 = vand.u32 2147483647, %v3150
        %v3247 = vand.u32 2147483647, %v3151
        %v3248 = vand.u32 2147483647, %v3152
        %v3249 = vand.u32 2147483647, %v3153
        %v3250 = vand.u32 2147483647, %v3154
        %v3251 = vand.u32 2147483647, %v3155
        %v3252 = vand.u32 2147483647, %v3156
        %v3253 = vand.u32 2147483647, %v3157
        %v3254 = vand.u32 2147483647, %v3158
        %v3255 = vand.u32 2147483647, %v3159
        %v3256 = vand.u32 2147483647, %v3160
        %v3257 = vand.u32 2147483647, %v3161
        %v3258 = vand.u32 2147483647, %v3162
        %v3259 = vand.u32 2147483647, %v3163
        %v3260 = vand.u32 2147483647, %v3164
        %v3261 = vand.u32 2147483647, %v3165
        %v3262 = vand.u32 2147483647, %v3166
        %v3263 = vand.u32 2147483647, %v3167
        %v3264 = vand.u32 2147483647, %v3168
        %v3265 = vand.u32 2147483647, %v3169
        %v3266 = vand.u32 2147483647, %v3170
        %v3267 = vand.u32 2147483647, %v3171
        %v3268 = vand.u32 2147483647, %v3172
        %v3269 = vand.u32 2147483647, %v3173
        %v3270 = vand.u32 2147483647, %v3174
        %v3271 = vand.u32 2147483647, %v3175
        %v3272 = vand.u32 2147483647, %v3176
        %v3273 = vand.u32 2147483647, %v3177
        %v3274 = vand.u32 2147483647, %v3178
        %v3275 = vmul.f32 %v3243, 0.3275911
        %v3276 = vmul.f32 %v3244, 0.3275911
        %v3277 = vmul.f32 %v3245, 0.3275911
        %v3278 = vmul.f32 %v3246, 0.3275911
        %v3279 = vmul.f32 %v3247, 0.3275911
        %v3280 = vmul.f32 %v3248, 0.3275911
        %v3281 = vmul.f32 %v3249, 0.3275911
        %v3282 = vmul.f32 %v3250, 0.3275911
        %v3283 = vmul.f32 %v3251, 0.3275911
        %v3284 = vmul.f32 %v3252, 0.3275911
        %v3285 = vmul.f32 %v3253, 0.3275911
        %v3286 = vmul.f32 %v3254, 0.3275911
        %v3287 = vmul.f32 %v3255, 0.3275911
        %v3288 = vmul.f32 %v3256, 0.3275911
        %v3289 = vmul.f32 %v3257, 0.3275911
        %v3290 = vmul.f32 %v3258, 0.3275911
        %v3291 = vmul.f32 %v3259, 0.3275911
        %v3292 = vmul.f32 %v3260, 0.3275911
        %v3293 = vmul.f32 %v3261, 0.3275911
        %v3294 = vmul.f32 %v3262, 0.3275911
        %v3295 = vmul.f32 %v3263, 0.3275911
        %v3296 = vmul.f32 %v3264, 0.3275911
        %v3297 = vmul.f32 %v3265, 0.3275911
        %v3298 = vmul.f32 %v3266, 0.3275911
        %v3299 = vmul.f32 %v3267, 0.3275911
        %v3300 = vmul.f32 %v3268, 0.3275911
        %v3301 = vmul.f32 %v3269, 0.3275911
        %v3302 = vmul.f32 %v3270, 0.3275911
        %v3303 = vmul.f32 %v3271, 0.3275911
        %v3304 = vmul.f32 %v3272, 0.3275911
        %v3305 = vmul.f32 %v3273, 0.3275911
        %v3306 = vmul.f32 %v3274, 0.3275911
        %v3307 = vadd.f32 %v3275, 1.0
        %v3308 = vadd.f32 %v3276, 1.0
        %v3309 = vadd.f32 %v3277, 1.0
        %v3310 = vadd.f32 %v3278, 1.0
        %v3311 = vadd.f32 %v3279, 1.0
        %v3312 = vadd.f32 %v3280, 1.0
        %v3313 = vadd.f32 %v3281, 1.0
        %v3314 = vadd.f32 %v3282, 1.0
        %v3315 = vadd.f32 %v3283, 1.0
        %v3316 = vadd.f32 %v3284, 1.0
        %v3317 = vadd.f32 %v3285, 1.0
        %v3318 = vadd.f32 %v3286, 1.0
        %v3319 = vadd.f32 %v3287, 1.0
        %v3320 = vadd.f32 %v3288, 1.0
        %v3321 = vadd.f32 %v3289, 1.0
        %v3322 = vadd.f32 %v3290, 1.0
        %v3323 = vadd.f32 %v3291, 1.0
        %v3324 = vadd.f32 %v3292, 1.0
        %v3325 = vadd.f32 %v3293, 1.0
        %v3326 = vadd.f32 %v3294, 1.0
        %v3327 = vadd.f32 %v3295, 1.0
        %v3328 = vadd.f32 %v3296, 1.0
        %v3329 = vadd.f32 %v3297, 1.0
        %v3330 = vadd.f32 %v3298, 1.0
        %v3331 = vadd.f32 %v3299, 1.0
        %v3332 = vadd.f32 %v3300, 1.0
        %v3333 = vadd.f32 %v3301, 1.0
        %v3334 = vadd.f32 %v3302, 1.0
        %v3335 = vadd.f32 %v3303, 1.0
        %v3336 = vadd.f32 %v3304, 1.0
        %v3337 = vadd.f32 %v3305, 1.0
        %v3338 = vadd.f32 %v3306, 1.0
        %v3339 = vrcp.pop %v3307
        %v3340 = vmul.f32 %v3307, %v3339
        %v3341 = vsub.f32 1.0, %v3340
        %v3342 = vmul.f32 %v3339, %v3341
        %v3343 = vadd.f32 %v3339, %v3342
        %vm3344 = vweird.f32 %v3307
        %vm3345 = vweird.f32 %v3339
        %vm3346 = vmor %vm3344, %vm3345
        %v3347 = vsel %vm3346, %v3339, %v3343
        %v3348 = vand.u32 2147483647, %v3307
        %vm3349 = vcmp.eq.f32.partialorder %v3348, 8.507059e+37
        %v3350 = vand.u32 %v3307, 2147483648
        %v3351 = vor.u32 1.1754944e-38, %v3350
        %v3352 = vsel %vm3349, %v3351, %v3347
        %v3353 = vmul.f32 1.0, %v3352
        %v3354 = vrcp.pop %v3308
        %v3355 = vmul.f32 %v3308, %v3354
        %v3356 = vsub.f32 1.0, %v3355
        %v3357 = vmul.f32 %v3354, %v3356
        %v3358 = vadd.f32 %v3354, %v3357
        %vm3359 = vweird.f32 %v3308
        %vm3360 = vweird.f32 %v3354
        %vm3361 = vmor %vm3359, %vm3360
        %v3362 = vsel %vm3361, %v3354, %v3358
        %v3363 = vand.u32 2147483647, %v3308
        %vm3364 = vcmp.eq.f32.partialorder %v3363, 8.507059e+37
        %v3365 = vand.u32 %v3308, 2147483648
        %v3366 = vor.u32 1.1754944e-38, %v3365
        %v3367 = vsel %vm3364, %v3366, %v3362
        %v3368 = vmul.f32 1.0, %v3367
        %v3369 = vrcp.pop %v3309
        %v3370 = vmul.f32 %v3309, %v3369
        %v3371 = vsub.f32 1.0, %v3370
        %v3372 = vmul.f32 %v3369, %v3371
        %v3373 = vadd.f32 %v3369, %v3372
        %vm3374 = vweird.f32 %v3309
        %vm3375 = vweird.f32 %v3369
        %vm3376 = vmor %vm3374, %vm3375
        %v3377 = vsel %vm3376, %v3369, %v3373
        %v3378 = vand.u32 2147483647, %v3309
        %vm3379 = vcmp.eq.f32.partialorder %v3378, 8.507059e+37
        %v3380 = vand.u32 %v3309, 2147483648
        %v3381 = vor.u32 1.1754944e-38, %v3380
        %v3382 = vsel %vm3379, %v3381, %v3377
        %v3383 = vmul.f32 1.0, %v3382
        %v3384 = vrcp.pop %v3310
        %v3385 = vmul.f32 %v3310, %v3384
        %v3386 = vsub.f32 1.0, %v3385
        %v3387 = vmul.f32 %v3384, %v3386
        %v3388 = vadd.f32 %v3384, %v3387
        %vm3389 = vweird.f32 %v3310
        %vm3390 = vweird.f32 %v3384
        %vm3391 = vmor %vm3389, %vm3390
        %v3392 = vsel %vm3391, %v3384, %v3388
        %v3393 = vand.u32 2147483647, %v3310
        %vm3394 = vcmp.eq.f32.partialorder %v3393, 8.507059e+37
        %v3395 = vand.u32 %v3310, 2147483648
        %v3396 = vor.u32 1.1754944e-38, %v3395
        %v3397 = vsel %vm3394, %v3396, %v3392
        %v3398 = vmul.f32 1.0, %v3397
        %v3399 = vrcp.pop %v3311
        %v3400 = vmul.f32 %v3311, %v3399
        %v3401 = vsub.f32 1.0, %v3400
        %v3402 = vmul.f32 %v3399, %v3401
        %v3403 = vadd.f32 %v3399, %v3402
        %vm3404 = vweird.f32 %v3311
        %vm3405 = vweird.f32 %v3399
        %vm3406 = vmor %vm3404, %vm3405
        %v3407 = vsel %vm3406, %v3399, %v3403
        %v3408 = vand.u32 2147483647, %v3311
        %vm3409 = vcmp.eq.f32.partialorder %v3408, 8.507059e+37
        %v3410 = vand.u32 %v3311, 2147483648
        %v3411 = vor.u32 1.1754944e-38, %v3410
        %v3412 = vsel %vm3409, %v3411, %v3407
        %v3413 = vmul.f32 1.0, %v3412
        %v3414 = vrcp.pop %v3312
        %v3415 = vmul.f32 %v3312, %v3414
        %v3416 = vsub.f32 1.0, %v3415
        %v3417 = vmul.f32 %v3414, %v3416
        %v3418 = vadd.f32 %v3414, %v3417
        %vm3419 = vweird.f32 %v3312
        %vm3420 = vweird.f32 %v3414
        %vm3421 = vmor %vm3419, %vm3420
        %v3422 = vsel %vm3421, %v3414, %v3418
        %v3423 = vand.u32 2147483647, %v3312
        %vm3424 = vcmp.eq.f32.partialorder %v3423, 8.507059e+37
        %v3425 = vand.u32 %v3312, 2147483648
        %v3426 = vor.u32 1.1754944e-38, %v3425
        %v3427 = vsel %vm3424, %v3426, %v3422
        %v3428 = vmul.f32 1.0, %v3427
        %v3429 = vrcp.pop %v3313
        %v3430 = vmul.f32 %v3313, %v3429
        %v3431 = vsub.f32 1.0, %v3430
        %v3432 = vmul.f32 %v3429, %v3431
        %v3433 = vadd.f32 %v3429, %v3432
        %vm3434 = vweird.f32 %v3313
        %vm3435 = vweird.f32 %v3429
        %vm3436 = vmor %vm3434, %vm3435
        %v3437 = vsel %vm3436, %v3429, %v3433
        %v3438 = vand.u32 2147483647, %v3313
        %vm3439 = vcmp.eq.f32.partialorder %v3438, 8.507059e+37
        %v3440 = vand.u32 %v3313, 2147483648
        %v3441 = vor.u32 1.1754944e-38, %v3440
        %v3442 = vsel %vm3439, %v3441, %v3437
        %v3443 = vmul.f32 1.0, %v3442
        %v3444 = vrcp.pop %v3314
        %v3445 = vmul.f32 %v3314, %v3444
        %v3446 = vsub.f32 1.0, %v3445
        %v3447 = vmul.f32 %v3444, %v3446
        %v3448 = vadd.f32 %v3444, %v3447
        %vm3449 = vweird.f32 %v3314
        %vm3450 = vweird.f32 %v3444
        %vm3451 = vmor %vm3449, %vm3450
        %v3452 = vsel %vm3451, %v3444, %v3448
        %v3453 = vand.u32 2147483647, %v3314
        %vm3454 = vcmp.eq.f32.partialorder %v3453, 8.507059e+37
        %v3455 = vand.u32 %v3314, 2147483648
        %v3456 = vor.u32 1.1754944e-38, %v3455
        %v3457 = vsel %vm3454, %v3456, %v3452
        %v3458 = vmul.f32 1.0, %v3457
        %v3459 = vrcp.pop %v3315
        %v3460 = vmul.f32 %v3315, %v3459
        %v3461 = vsub.f32 1.0, %v3460
        %v3462 = vmul.f32 %v3459, %v3461
        %v3463 = vadd.f32 %v3459, %v3462
        %vm3464 = vweird.f32 %v3315
        %vm3465 = vweird.f32 %v3459
        %vm3466 = vmor %vm3464, %vm3465
        %v3467 = vsel %vm3466, %v3459, %v3463
        %v3468 = vand.u32 2147483647, %v3315
        %vm3469 = vcmp.eq.f32.partialorder %v3468, 8.507059e+37
        %v3470 = vand.u32 %v3315, 2147483648
        %v3471 = vor.u32 1.1754944e-38, %v3470
        %v3472 = vsel %vm3469, %v3471, %v3467
        %v3473 = vmul.f32 1.0, %v3472
        %v3474 = vrcp.pop %v3316
        %v3475 = vmul.f32 %v3316, %v3474
        %v3476 = vsub.f32 1.0, %v3475
        %v3477 = vmul.f32 %v3474, %v3476
        %v3478 = vadd.f32 %v3474, %v3477
        %vm3479 = vweird.f32 %v3316
        %vm3480 = vweird.f32 %v3474
        %vm3481 = vmor %vm3479, %vm3480
        %v3482 = vsel %vm3481, %v3474, %v3478
        %v3483 = vand.u32 2147483647, %v3316
        %vm3484 = vcmp.eq.f32.partialorder %v3483, 8.507059e+37
        %v3485 = vand.u32 %v3316, 2147483648
        %v3486 = vor.u32 1.1754944e-38, %v3485
        %v3487 = vsel %vm3484, %v3486, %v3482
        %v3488 = vmul.f32 1.0, %v3487
        %v3489 = vrcp.pop %v3317
        %v3490 = vmul.f32 %v3317, %v3489
        %v3491 = vsub.f32 1.0, %v3490
        %v3492 = vmul.f32 %v3489, %v3491
        %v3493 = vadd.f32 %v3489, %v3492
        %vm3494 = vweird.f32 %v3317
        %vm3495 = vweird.f32 %v3489
        %vm3496 = vmor %vm3494, %vm3495
        %v3497 = vsel %vm3496, %v3489, %v3493
        %v3498 = vand.u32 2147483647, %v3317
        %vm3499 = vcmp.eq.f32.partialorder %v3498, 8.507059e+37
        %v3500 = vand.u32 %v3317, 2147483648
        %v3501 = vor.u32 1.1754944e-38, %v3500
        %v3502 = vsel %vm3499, %v3501, %v3497
        %v3503 = vmul.f32 1.0, %v3502
        %v3504 = vrcp.pop %v3318
        %v3505 = vmul.f32 %v3318, %v3504
        %v3506 = vsub.f32 1.0, %v3505
        %v3507 = vmul.f32 %v3504, %v3506
        %v3508 = vadd.f32 %v3504, %v3507
        %vm3509 = vweird.f32 %v3318
        %vm3510 = vweird.f32 %v3504
        %vm3511 = vmor %vm3509, %vm3510
        %v3512 = vsel %vm3511, %v3504, %v3508
        %v3513 = vand.u32 2147483647, %v3318
        %vm3514 = vcmp.eq.f32.partialorder %v3513, 8.507059e+37
        %v3515 = vand.u32 %v3318, 2147483648
        %v3516 = vor.u32 1.1754944e-38, %v3515
        %v3517 = vsel %vm3514, %v3516, %v3512
        %v3518 = vmul.f32 1.0, %v3517
        %v3519 = vrcp.pop %v3319
        %v3520 = vmul.f32 %v3319, %v3519
        %v3521 = vsub.f32 1.0, %v3520
        %v3522 = vmul.f32 %v3519, %v3521
        %v3523 = vadd.f32 %v3519, %v3522
        %vm3524 = vweird.f32 %v3319
        %vm3525 = vweird.f32 %v3519
        %vm3526 = vmor %vm3524, %vm3525
        %v3527 = vsel %vm3526, %v3519, %v3523
        %v3528 = vand.u32 2147483647, %v3319
        %vm3529 = vcmp.eq.f32.partialorder %v3528, 8.507059e+37
        %v3530 = vand.u32 %v3319, 2147483648
        %v3531 = vor.u32 1.1754944e-38, %v3530
        %v3532 = vsel %vm3529, %v3531, %v3527
        %v3533 = vmul.f32 1.0, %v3532
        %v3534 = vrcp.pop %v3320
        %v3535 = vmul.f32 %v3320, %v3534
        %v3536 = vsub.f32 1.0, %v3535
        %v3537 = vmul.f32 %v3534, %v3536
        %v3538 = vadd.f32 %v3534, %v3537
        %vm3539 = vweird.f32 %v3320
        %vm3540 = vweird.f32 %v3534
        %vm3541 = vmor %vm3539, %vm3540
        %v3542 = vsel %vm3541, %v3534, %v3538
        %v3543 = vand.u32 2147483647, %v3320
        %vm3544 = vcmp.eq.f32.partialorder %v3543, 8.507059e+37
        %v3545 = vand.u32 %v3320, 2147483648
        %v3546 = vor.u32 1.1754944e-38, %v3545
        %v3547 = vsel %vm3544, %v3546, %v3542
        %v3548 = vmul.f32 1.0, %v3547
        %v3549 = vrcp.pop %v3321
        %v3550 = vmul.f32 %v3321, %v3549
        %v3551 = vsub.f32 1.0, %v3550
        %v3552 = vmul.f32 %v3549, %v3551
        %v3553 = vadd.f32 %v3549, %v3552
        %vm3554 = vweird.f32 %v3321
        %vm3555 = vweird.f32 %v3549
        %vm3556 = vmor %vm3554, %vm3555
        %v3557 = vsel %vm3556, %v3549, %v3553
        %v3558 = vand.u32 2147483647, %v3321
        %vm3559 = vcmp.eq.f32.partialorder %v3558, 8.507059e+37
        %v3560 = vand.u32 %v3321, 2147483648
        %v3561 = vor.u32 1.1754944e-38, %v3560
        %v3562 = vsel %vm3559, %v3561, %v3557
        %v3563 = vmul.f32 1.0, %v3562
        %v3564 = vrcp.pop %v3322
        %v3565 = vmul.f32 %v3322, %v3564
        %v3566 = vsub.f32 1.0, %v3565
        %v3567 = vmul.f32 %v3564, %v3566
        %v3568 = vadd.f32 %v3564, %v3567
        %vm3569 = vweird.f32 %v3322
        %vm3570 = vweird.f32 %v3564
        %vm3571 = vmor %vm3569, %vm3570
        %v3572 = vsel %vm3571, %v3564, %v3568
        %v3573 = vand.u32 2147483647, %v3322
        %vm3574 = vcmp.eq.f32.partialorder %v3573, 8.507059e+37
        %v3575 = vand.u32 %v3322, 2147483648
        %v3576 = vor.u32 1.1754944e-38, %v3575
        %v3577 = vsel %vm3574, %v3576, %v3572
        %v3578 = vmul.f32 1.0, %v3577
        %v3579 = vrcp.pop %v3323
        %v3580 = vmul.f32 %v3323, %v3579
        %v3581 = vsub.f32 1.0, %v3580
        %v3582 = vmul.f32 %v3579, %v3581
        %v3583 = vadd.f32 %v3579, %v3582
        %vm3584 = vweird.f32 %v3323
        %vm3585 = vweird.f32 %v3579
        %vm3586 = vmor %vm3584, %vm3585
        %v3587 = vsel %vm3586, %v3579, %v3583
        %v3588 = vand.u32 2147483647, %v3323
        %vm3589 = vcmp.eq.f32.partialorder %v3588, 8.507059e+37
        %v3590 = vand.u32 %v3323, 2147483648
        %v3591 = vor.u32 1.1754944e-38, %v3590
        %v3592 = vsel %vm3589, %v3591, %v3587
        %v3593 = vmul.f32 1.0, %v3592
        %v3594 = vrcp.pop %v3324
        %v3595 = vmul.f32 %v3324, %v3594
        %v3596 = vsub.f32 1.0, %v3595
        %v3597 = vmul.f32 %v3594, %v3596
        %v3598 = vadd.f32 %v3594, %v3597
        %vm3599 = vweird.f32 %v3324
        %vm3600 = vweird.f32 %v3594
        %vm3601 = vmor %vm3599, %vm3600
        %v3602 = vsel %vm3601, %v3594, %v3598
        %v3603 = vand.u32 2147483647, %v3324
        %vm3604 = vcmp.eq.f32.partialorder %v3603, 8.507059e+37
        %v3605 = vand.u32 %v3324, 2147483648
        %v3606 = vor.u32 1.1754944e-38, %v3605
        %v3607 = vsel %vm3604, %v3606, %v3602
        %v3608 = vmul.f32 1.0, %v3607
        %v3609 = vrcp.pop %v3325
        %v3610 = vmul.f32 %v3325, %v3609
        %v3611 = vsub.f32 1.0, %v3610
        %v3612 = vmul.f32 %v3609, %v3611
        %v3613 = vadd.f32 %v3609, %v3612
        %vm3614 = vweird.f32 %v3325
        %vm3615 = vweird.f32 %v3609
        %vm3616 = vmor %vm3614, %vm3615
        %v3617 = vsel %vm3616, %v3609, %v3613
        %v3618 = vand.u32 2147483647, %v3325
        %vm3619 = vcmp.eq.f32.partialorder %v3618, 8.507059e+37
        %v3620 = vand.u32 %v3325, 2147483648
        %v3621 = vor.u32 1.1754944e-38, %v3620
        %v3622 = vsel %vm3619, %v3621, %v3617
        %v3623 = vmul.f32 1.0, %v3622
        %v3624 = vrcp.pop %v3326
        %v3625 = vmul.f32 %v3326, %v3624
        %v3626 = vsub.f32 1.0, %v3625
        %v3627 = vmul.f32 %v3624, %v3626
        %v3628 = vadd.f32 %v3624, %v3627
        %vm3629 = vweird.f32 %v3326
        %vm3630 = vweird.f32 %v3624
        %vm3631 = vmor %vm3629, %vm3630
        %v3632 = vsel %vm3631, %v3624, %v3628
        %v3633 = vand.u32 2147483647, %v3326
        %vm3634 = vcmp.eq.f32.partialorder %v3633, 8.507059e+37
        %v3635 = vand.u32 %v3326, 2147483648
        %v3636 = vor.u32 1.1754944e-38, %v3635
        %v3637 = vsel %vm3634, %v3636, %v3632
        %v3638 = vmul.f32 1.0, %v3637
        %v3639 = vrcp.pop %v3327
        %v3640 = vmul.f32 %v3327, %v3639
        %v3641 = vsub.f32 1.0, %v3640
        %v3642 = vmul.f32 %v3639, %v3641
        %v3643 = vadd.f32 %v3639, %v3642
        %vm3644 = vweird.f32 %v3327
        %vm3645 = vweird.f32 %v3639
        %vm3646 = vmor %vm3644, %vm3645
        %v3647 = vsel %vm3646, %v3639, %v3643
        %v3648 = vand.u32 2147483647, %v3327
        %vm3649 = vcmp.eq.f32.partialorder %v3648, 8.507059e+37
        %v3650 = vand.u32 %v3327, 2147483648
        %v3651 = vor.u32 1.1754944e-38, %v3650
        %v3652 = vsel %vm3649, %v3651, %v3647
        %v3653 = vmul.f32 1.0, %v3652
        %v3654 = vrcp.pop %v3328
        %v3655 = vmul.f32 %v3328, %v3654
        %v3656 = vsub.f32 1.0, %v3655
        %v3657 = vmul.f32 %v3654, %v3656
        %v3658 = vadd.f32 %v3654, %v3657
        %vm3659 = vweird.f32 %v3328
        %vm3660 = vweird.f32 %v3654
        %vm3661 = vmor %vm3659, %vm3660
        %v3662 = vsel %vm3661, %v3654, %v3658
        %v3663 = vand.u32 2147483647, %v3328
        %vm3664 = vcmp.eq.f32.partialorder %v3663, 8.507059e+37
        %v3665 = vand.u32 %v3328, 2147483648
        %v3666 = vor.u32 1.1754944e-38, %v3665
        %v3667 = vsel %vm3664, %v3666, %v3662
        %v3668 = vmul.f32 1.0, %v3667
        %v3669 = vrcp.pop %v3329
        %v3670 = vmul.f32 %v3329, %v3669
        %v3671 = vsub.f32 1.0, %v3670
        %v3672 = vmul.f32 %v3669, %v3671
        %v3673 = vadd.f32 %v3669, %v3672
        %vm3674 = vweird.f32 %v3329
        %vm3675 = vweird.f32 %v3669
        %vm3676 = vmor %vm3674, %vm3675
        %v3677 = vsel %vm3676, %v3669, %v3673
        %v3678 = vand.u32 2147483647, %v3329
        %vm3679 = vcmp.eq.f32.partialorder %v3678, 8.507059e+37
        %v3680 = vand.u32 %v3329, 2147483648
        %v3681 = vor.u32 1.1754944e-38, %v3680
        %v3682 = vsel %vm3679, %v3681, %v3677
        %v3683 = vmul.f32 1.0, %v3682
        %v3684 = vrcp.pop %v3330
        %v3685 = vmul.f32 %v3330, %v3684
        %v3686 = vsub.f32 1.0, %v3685
        %v3687 = vmul.f32 %v3684, %v3686
        %v3688 = vadd.f32 %v3684, %v3687
        %vm3689 = vweird.f32 %v3330
        %vm3690 = vweird.f32 %v3684
        %vm3691 = vmor %vm3689, %vm3690
        %v3692 = vsel %vm3691, %v3684, %v3688
        %v3693 = vand.u32 2147483647, %v3330
        %vm3694 = vcmp.eq.f32.partialorder %v3693, 8.507059e+37
        %v3695 = vand.u32 %v3330, 2147483648
        %v3696 = vor.u32 1.1754944e-38, %v3695
        %v3697 = vsel %vm3694, %v3696, %v3692
        %v3698 = vmul.f32 1.0, %v3697
        %v3699 = vrcp.pop %v3331
        %v3700 = vmul.f32 %v3331, %v3699
        %v3701 = vsub.f32 1.0, %v3700
        %v3702 = vmul.f32 %v3699, %v3701
        %v3703 = vadd.f32 %v3699, %v3702
        %vm3704 = vweird.f32 %v3331
        %vm3705 = vweird.f32 %v3699
        %vm3706 = vmor %vm3704, %vm3705
        %v3707 = vsel %vm3706, %v3699, %v3703
        %v3708 = vand.u32 2147483647, %v3331
        %vm3709 = vcmp.eq.f32.partialorder %v3708, 8.507059e+37
        %v3710 = vand.u32 %v3331, 2147483648
        %v3711 = vor.u32 1.1754944e-38, %v3710
        %v3712 = vsel %vm3709, %v3711, %v3707
        %v3713 = vmul.f32 1.0, %v3712
        %v3714 = vrcp.pop %v3332
        %v3715 = vmul.f32 %v3332, %v3714
        %v3716 = vsub.f32 1.0, %v3715
        %v3717 = vmul.f32 %v3714, %v3716
        %v3718 = vadd.f32 %v3714, %v3717
        %vm3719 = vweird.f32 %v3332
        %vm3720 = vweird.f32 %v3714
        %vm3721 = vmor %vm3719, %vm3720
        %v3722 = vsel %vm3721, %v3714, %v3718
        %v3723 = vand.u32 2147483647, %v3332
        %vm3724 = vcmp.eq.f32.partialorder %v3723, 8.507059e+37
        %v3725 = vand.u32 %v3332, 2147483648
        %v3726 = vor.u32 1.1754944e-38, %v3725
        %v3727 = vsel %vm3724, %v3726, %v3722
        %v3728 = vmul.f32 1.0, %v3727
        %v3729 = vrcp.pop %v3333
        %v3730 = vmul.f32 %v3333, %v3729
        %v3731 = vsub.f32 1.0, %v3730
        %v3732 = vmul.f32 %v3729, %v3731
        %v3733 = vadd.f32 %v3729, %v3732
        %vm3734 = vweird.f32 %v3333
        %vm3735 = vweird.f32 %v3729
        %vm3736 = vmor %vm3734, %vm3735
        %v3737 = vsel %vm3736, %v3729, %v3733
        %v3738 = vand.u32 2147483647, %v3333
        %vm3739 = vcmp.eq.f32.partialorder %v3738, 8.507059e+37
        %v3740 = vand.u32 %v3333, 2147483648
        %v3741 = vor.u32 1.1754944e-38, %v3740
        %v3742 = vsel %vm3739, %v3741, %v3737
        %v3743 = vmul.f32 1.0, %v3742
        %v3744 = vrcp.pop %v3334
        %v3745 = vmul.f32 %v3334, %v3744
        %v3746 = vsub.f32 1.0, %v3745
        %v3747 = vmul.f32 %v3744, %v3746
        %v3748 = vadd.f32 %v3744, %v3747
        %vm3749 = vweird.f32 %v3334
        %vm3750 = vweird.f32 %v3744
        %vm3751 = vmor %vm3749, %vm3750
        %v3752 = vsel %vm3751, %v3744, %v3748
        %v3753 = vand.u32 2147483647, %v3334
        %vm3754 = vcmp.eq.f32.partialorder %v3753, 8.507059e+37
        %v3755 = vand.u32 %v3334, 2147483648
        %v3756 = vor.u32 1.1754944e-38, %v3755
        %v3757 = vsel %vm3754, %v3756, %v3752
        %v3758 = vmul.f32 1.0, %v3757
        %v3759 = vrcp.pop %v3335
        %v3760 = vmul.f32 %v3335, %v3759
        %v3761 = vsub.f32 1.0, %v3760
        %v3762 = vmul.f32 %v3759, %v3761
        %v3763 = vadd.f32 %v3759, %v3762
        %vm3764 = vweird.f32 %v3335
        %vm3765 = vweird.f32 %v3759
        %vm3766 = vmor %vm3764, %vm3765
        %v3767 = vsel %vm3766, %v3759, %v3763
        %v3768 = vand.u32 2147483647, %v3335
        %vm3769 = vcmp.eq.f32.partialorder %v3768, 8.507059e+37
        %v3770 = vand.u32 %v3335, 2147483648
        %v3771 = vor.u32 1.1754944e-38, %v3770
        %v3772 = vsel %vm3769, %v3771, %v3767
        %v3773 = vmul.f32 1.0, %v3772
        %v3774 = vrcp.pop %v3336
        %v3775 = vmul.f32 %v3336, %v3774
        %v3776 = vsub.f32 1.0, %v3775
        %v3777 = vmul.f32 %v3774, %v3776
        %v3778 = vadd.f32 %v3774, %v3777
        %vm3779 = vweird.f32 %v3336
        %vm3780 = vweird.f32 %v3774
        %vm3781 = vmor %vm3779, %vm3780
        %v3782 = vsel %vm3781, %v3774, %v3778
        %v3783 = vand.u32 2147483647, %v3336
        %vm3784 = vcmp.eq.f32.partialorder %v3783, 8.507059e+37
        %v3785 = vand.u32 %v3336, 2147483648
        %v3786 = vor.u32 1.1754944e-38, %v3785
        %v3787 = vsel %vm3784, %v3786, %v3782
        %v3788 = vmul.f32 1.0, %v3787
        %v3789 = vrcp.pop %v3337
        %v3790 = vmul.f32 %v3337, %v3789
        %v3791 = vsub.f32 1.0, %v3790
        %v3792 = vmul.f32 %v3789, %v3791
        %v3793 = vadd.f32 %v3789, %v3792
        %vm3794 = vweird.f32 %v3337
        %vm3795 = vweird.f32 %v3789
        %vm3796 = vmor %vm3794, %vm3795
        %v3797 = vsel %vm3796, %v3789, %v3793
        %v3798 = vand.u32 2147483647, %v3337
        %vm3799 = vcmp.eq.f32.partialorder %v3798, 8.507059e+37
        %v3800 = vand.u32 %v3337, 2147483648
        %v3801 = vor.u32 1.1754944e-38, %v3800
        %v3802 = vsel %vm3799, %v3801, %v3797
        %v3803 = vmul.f32 1.0, %v3802
        %v3804 = vrcp.pop %v3338
        %v3805 = vmul.f32 %v3338, %v3804
        %v3806 = vsub.f32 1.0, %v3805
        %v3807 = vmul.f32 %v3804, %v3806
        %v3808 = vadd.f32 %v3804, %v3807
        %vm3809 = vweird.f32 %v3338
        %vm3810 = vweird.f32 %v3804
        %vm3811 = vmor %vm3809, %vm3810
        %v3812 = vsel %vm3811, %v3804, %v3808
        %v3813 = vand.u32 2147483647, %v3338
        %vm3814 = vcmp.eq.f32.partialorder %v3813, 8.507059e+37
        %v3815 = vand.u32 %v3338, 2147483648
        %v3816 = vor.u32 1.1754944e-38, %v3815
        %v3817 = vsel %vm3814, %v3816, %v3812
        %v3818 = vmul.f32 1.0, %v3817
        %v3819 = vmul.f32 %v3353, 1.0614054
        %v3820 = vmul.f32 %v3368, 1.0614054
        %v3821 = vmul.f32 %v3383, 1.0614054
        %v3822 = vmul.f32 %v3398, 1.0614054
        %v3823 = vmul.f32 %v3413, 1.0614054
        %v3824 = vmul.f32 %v3428, 1.0614054
        %v3825 = vmul.f32 %v3443, 1.0614054
        %v3826 = vmul.f32 %v3458, 1.0614054
        %v3827 = vmul.f32 %v3473, 1.0614054
        %v3828 = vmul.f32 %v3488, 1.0614054
        %v3829 = vmul.f32 %v3503, 1.0614054
        %v3830 = vmul.f32 %v3518, 1.0614054
        %v3831 = vmul.f32 %v3533, 1.0614054
        %v3832 = vmul.f32 %v3548, 1.0614054
        %v3833 = vmul.f32 %v3563, 1.0614054
        %v3834 = vmul.f32 %v3578, 1.0614054
        %v3835 = vmul.f32 %v3593, 1.0614054
        %v3836 = vmul.f32 %v3608, 1.0614054
        %v3837 = vmul.f32 %v3623, 1.0614054
        %v3838 = vmul.f32 %v3638, 1.0614054
        %v3839 = vmul.f32 %v3653, 1.0614054
        %v3840 = vmul.f32 %v3668, 1.0614054
        %v3841 = vmul.f32 %v3683, 1.0614054
        %v3842 = vmul.f32 %v3698, 1.0614054
        %v3843 = vmul.f32 %v3713, 1.0614054
        %v3844 = vmul.f32 %v3728, 1.0614054
        %v3845 = vmul.f32 %v3743, 1.0614054
        %v3846 = vmul.f32 %v3758, 1.0614054
        %v3847 = vmul.f32 %v3773, 1.0614054
        %v3848 = vmul.f32 %v3788, 1.0614054
        %v3849 = vmul.f32 %v3803, 1.0614054
        %v3850 = vmul.f32 %v3818, 1.0614054
        %v3851 = vadd.f32 %v3819, -1.4531521
        %v3852 = vadd.f32 %v3820, -1.4531521
        %v3853 = vadd.f32 %v3821, -1.4531521
        %v3854 = vadd.f32 %v3822, -1.4531521
        %v3855 = vadd.f32 %v3823, -1.4531521
        %v3856 = vadd.f32 %v3824, -1.4531521
        %v3857 = vadd.f32 %v3825, -1.4531521
        %v3858 = vadd.f32 %v3826, -1.4531521
        %v3859 = vadd.f32 %v3827, -1.4531521
        %v3860 = vadd.f32 %v3828, -1.4531521
        %v3861 = vadd.f32 %v3829, -1.4531521
        %v3862 = vadd.f32 %v3830, -1.4531521
        %v3863 = vadd.f32 %v3831, -1.4531521
        %v3864 = vadd.f32 %v3832, -1.4531521
        %v3865 = vadd.f32 %v3833, -1.4531521
        %v3866 = vadd.f32 %v3834, -1.4531521
        %v3867 = vadd.f32 %v3835, -1.4531521
        %v3868 = vadd.f32 %v3836, -1.4531521
        %v3869 = vadd.f32 %v3837, -1.4531521
        %v3870 = vadd.f32 %v3838, -1.4531521
        %v3871 = vadd.f32 %v3839, -1.4531521
        %v3872 = vadd.f32 %v3840, -1.4531521
        %v3873 = vadd.f32 %v3841, -1.4531521
        %v3874 = vadd.f32 %v3842, -1.4531521
        %v3875 = vadd.f32 %v3843, -1.4531521
        %v3876 = vadd.f32 %v3844, -1.4531521
        %v3877 = vadd.f32 %v3845, -1.4531521
        %v3878 = vadd.f32 %v3846, -1.4531521
        %v3879 = vadd.f32 %v3847, -1.4531521
        %v3880 = vadd.f32 %v3848, -1.4531521
        %v3881 = vadd.f32 %v3849, -1.4531521
        %v3882 = vadd.f32 %v3850, -1.4531521
        %v3883 = vmul.f32 %v3851, %v3353
        %v3884 = vmul.f32 %v3852, %v3368
        %v3885 = vmul.f32 %v3853, %v3383
        %v3886 = vmul.f32 %v3854, %v3398
        %v3887 = vmul.f32 %v3855, %v3413
        %v3888 = vmul.f32 %v3856, %v3428
        %v3889 = vmul.f32 %v3857, %v3443
        %v3890 = vmul.f32 %v3858, %v3458
        %v3891 = vmul.f32 %v3859, %v3473
        %v3892 = vmul.f32 %v3860, %v3488
        %v3893 = vmul.f32 %v3861, %v3503
        %v3894 = vmul.f32 %v3862, %v3518
        %v3895 = vmul.f32 %v3863, %v3533
        %v3896 = vmul.f32 %v3864, %v3548
        %v3897 = vmul.f32 %v3865, %v3563
        %v3898 = vmul.f32 %v3866, %v3578
        %v3899 = vmul.f32 %v3867, %v3593
        %v3900 = vmul.f32 %v3868, %v3608
        %v3901 = vmul.f32 %v3869, %v3623
        %v3902 = vmul.f32 %v3870, %v3638
        %v3903 = vmul.f32 %v3871, %v3653
        %v3904 = vmul.f32 %v3872, %v3668
        %v3905 = vmul.f32 %v3873, %v3683
        %v3906 = vmul.f32 %v3874, %v3698
        %v3907 = vmul.f32 %v3875, %v3713
        %v3908 = vmul.f32 %v3876, %v3728
        %v3909 = vmul.f32 %v3877, %v3743
        %v3910 = vmul.f32 %v3878, %v3758
        %v3911 = vmul.f32 %v3879, %v3773
        %v3912 = vmul.f32 %v3880, %v3788
        %v3913 = vmul.f32 %v3881, %v3803
        %v3914 = vmul.f32 %v3882, %v3818
        %v3915 = vadd.f32 %v3883, 1.4214138
        %v3916 = vadd.f32 %v3884, 1.4214138
        %v3917 = vadd.f32 %v3885, 1.4214138
        %v3918 = vadd.f32 %v3886, 1.4214138
        %v3919 = vadd.f32 %v3887, 1.4214138
        %v3920 = vadd.f32 %v3888, 1.4214138
        %v3921 = vadd.f32 %v3889, 1.4214138
        %v3922 = vadd.f32 %v3890, 1.4214138
        %v3923 = vadd.f32 %v3891, 1.4214138
        %v3924 = vadd.f32 %v3892, 1.4214138
        %v3925 = vadd.f32 %v3893, 1.4214138
        %v3926 = vadd.f32 %v3894, 1.4214138
        %v3927 = vadd.f32 %v3895, 1.4214138
        %v3928 = vadd.f32 %v3896, 1.4214138
        %v3929 = vadd.f32 %v3897, 1.4214138
        %v3930 = vadd.f32 %v3898, 1.4214138
        %v3931 = vadd.f32 %v3899, 1.4214138
        %v3932 = vadd.f32 %v3900, 1.4214138
        %v3933 = vadd.f32 %v3901, 1.4214138
        %v3934 = vadd.f32 %v3902, 1.4214138
        %v3935 = vadd.f32 %v3903, 1.4214138
        %v3936 = vadd.f32 %v3904, 1.4214138
        %v3937 = vadd.f32 %v3905, 1.4214138
        %v3938 = vadd.f32 %v3906, 1.4214138
        %v3939 = vadd.f32 %v3907, 1.4214138
        %v3940 = vadd.f32 %v3908, 1.4214138
        %v3941 = vadd.f32 %v3909, 1.4214138
        %v3942 = vadd.f32 %v3910, 1.4214138
        %v3943 = vadd.f32 %v3911, 1.4214138
        %v3944 = vadd.f32 %v3912, 1.4214138
        %v3945 = vadd.f32 %v3913, 1.4214138
        %v3946 = vadd.f32 %v3914, 1.4214138
        %v3947 = vmul.f32 %v3915, %v3353
        %v3948 = vmul.f32 %v3916, %v3368
        %v3949 = vmul.f32 %v3917, %v3383
        %v3950 = vmul.f32 %v3918, %v3398
        %v3951 = vmul.f32 %v3919, %v3413
        %v3952 = vmul.f32 %v3920, %v3428
        %v3953 = vmul.f32 %v3921, %v3443
        %v3954 = vmul.f32 %v3922, %v3458
        %v3955 = vmul.f32 %v3923, %v3473
        %v3956 = vmul.f32 %v3924, %v3488
        %v3957 = vmul.f32 %v3925, %v3503
        %v3958 = vmul.f32 %v3926, %v3518
        %v3959 = vmul.f32 %v3927, %v3533
        %v3960 = vmul.f32 %v3928, %v3548
        %v3961 = vmul.f32 %v3929, %v3563
        %v3962 = vmul.f32 %v3930, %v3578
        %v3963 = vmul.f32 %v3931, %v3593
        %v3964 = vmul.f32 %v3932, %v3608
        %v3965 = vmul.f32 %v3933, %v3623
        %v3966 = vmul.f32 %v3934, %v3638
        %v3967 = vmul.f32 %v3935, %v3653
        %v3968 = vmul.f32 %v3936, %v3668
        %v3969 = vmul.f32 %v3937, %v3683
        %v3970 = vmul.f32 %v3938, %v3698
        %v3971 = vmul.f32 %v3939, %v3713
        %v3972 = vmul.f32 %v3940, %v3728
        %v3973 = vmul.f32 %v3941, %v3743
        %v3974 = vmul.f32 %v3942, %v3758
        %v3975 = vmul.f32 %v3943, %v3773
        %v3976 = vmul.f32 %v3944, %v3788
        %v3977 = vmul.f32 %v3945, %v3803
        %v3978 = vmul.f32 %v3946, %v3818
        %v3979 = vadd.f32 %v3947, -0.28449672
        %v3980 = vadd.f32 %v3948, -0.28449672
        %v3981 = vadd.f32 %v3949, -0.28449672
        %v3982 = vadd.f32 %v3950, -0.28449672
        %v3983 = vadd.f32 %v3951, -0.28449672
        %v3984 = vadd.f32 %v3952, -0.28449672
        %v3985 = vadd.f32 %v3953, -0.28449672
        %v3986 = vadd.f32 %v3954, -0.28449672
        %v3987 = vadd.f32 %v3955, -0.28449672
        %v3988 = vadd.f32 %v3956, -0.28449672
        %v3989 = vadd.f32 %v3957, -0.28449672
        %v3990 = vadd.f32 %v3958, -0.28449672
        %v3991 = vadd.f32 %v3959, -0.28449672
        %v3992 = vadd.f32 %v3960, -0.28449672
        %v3993 = vadd.f32 %v3961, -0.28449672
        %v3994 = vadd.f32 %v3962, -0.28449672
        %v3995 = vadd.f32 %v3963, -0.28449672
        %v3996 = vadd.f32 %v3964, -0.28449672
        %v3997 = vadd.f32 %v3965, -0.28449672
        %v3998 = vadd.f32 %v3966, -0.28449672
        %v3999 = vadd.f32 %v3967, -0.28449672
        %v4000 = vadd.f32 %v3968, -0.28449672
        %v4001 = vadd.f32 %v3969, -0.28449672
        %v4002 = vadd.f32 %v3970, -0.28449672
        %v4003 = vadd.f32 %v3971, -0.28449672
        %v4004 = vadd.f32 %v3972, -0.28449672
        %v4005 = vadd.f32 %v3973, -0.28449672
        %v4006 = vadd.f32 %v3974, -0.28449672
        %v4007 = vadd.f32 %v3975, -0.28449672
        %v4008 = vadd.f32 %v3976, -0.28449672
        %v4009 = vadd.f32 %v3977, -0.28449672
        %v4010 = vadd.f32 %v3978, -0.28449672
        %v4011 = vmul.f32 %v3979, %v3353
        %v4012 = vmul.f32 %v3980, %v3368
        %v4013 = vmul.f32 %v3981, %v3383
        %v4014 = vmul.f32 %v3982, %v3398
        %v4015 = vmul.f32 %v3983, %v3413
        %v4016 = vmul.f32 %v3984, %v3428
        %v4017 = vmul.f32 %v3985, %v3443
        %v4018 = vmul.f32 %v3986, %v3458
        %v4019 = vmul.f32 %v3987, %v3473
        %v4020 = vmul.f32 %v3988, %v3488
        %v4021 = vmul.f32 %v3989, %v3503
        %v4022 = vmul.f32 %v3990, %v3518
        %v4023 = vmul.f32 %v3991, %v3533
        %v4024 = vmul.f32 %v3992, %v3548
        %v4025 = vmul.f32 %v3993, %v3563
        %v4026 = vmul.f32 %v3994, %v3578
        %v4027 = vmul.f32 %v3995, %v3593
        %v4028 = vmul.f32 %v3996, %v3608
        %v4029 = vmul.f32 %v3997, %v3623
        %v4030 = vmul.f32 %v3998, %v3638
        %v4031 = vmul.f32 %v3999, %v3653
        %v4032 = vmul.f32 %v4000, %v3668
        %v4033 = vmul.f32 %v4001, %v3683
        %v4034 = vmul.f32 %v4002, %v3698
        %v4035 = vmul.f32 %v4003, %v3713
        %v4036 = vmul.f32 %v4004, %v3728
        %v4037 = vmul.f32 %v4005, %v3743
        %v4038 = vmul.f32 %v4006, %v3758
        %v4039 = vmul.f32 %v4007, %v3773
        %v4040 = vmul.f32 %v4008, %v3788
        %v4041 = vmul.f32 %v4009, %v3803
        %v4042 = vmul.f32 %v4010, %v3818
        %v4043 = vadd.f32 %v4011, 0.2548296
        %v4044 = vadd.f32 %v4012, 0.2548296
        %v4045 = vadd.f32 %v4013, 0.2548296
        %v4046 = vadd.f32 %v4014, 0.2548296
        %v4047 = vadd.f32 %v4015, 0.2548296
        %v4048 = vadd.f32 %v4016, 0.2548296
        %v4049 = vadd.f32 %v4017, 0.2548296
        %v4050 = vadd.f32 %v4018, 0.2548296
        %v4051 = vadd.f32 %v4019, 0.2548296
        %v4052 = vadd.f32 %v4020, 0.2548296
        %v4053 = vadd.f32 %v4021, 0.2548296
        %v4054 = vadd.f32 %v4022, 0.2548296
        %v4055 = vadd.f32 %v4023, 0.2548296
        %v4056 = vadd.f32 %v4024, 0.2548296
        %v4057 = vadd.f32 %v4025, 0.2548296
        %v4058 = vadd.f32 %v4026, 0.2548296
        %v4059 = vadd.f32 %v4027, 0.2548296
        %v4060 = vadd.f32 %v4028, 0.2548296
        %v4061 = vadd.f32 %v4029, 0.2548296
        %v4062 = vadd.f32 %v4030, 0.2548296
        %v4063 = vadd.f32 %v4031, 0.2548296
        %v4064 = vadd.f32 %v4032, 0.2548296
        %v4065 = vadd.f32 %v4033, 0.2548296
        %v4066 = vadd.f32 %v4034, 0.2548296
        %v4067 = vadd.f32 %v4035, 0.2548296
        %v4068 = vadd.f32 %v4036, 0.2548296
        %v4069 = vadd.f32 %v4037, 0.2548296
        %v4070 = vadd.f32 %v4038, 0.2548296
        %v4071 = vadd.f32 %v4039, 0.2548296
        %v4072 = vadd.f32 %v4040, 0.2548296
        %v4073 = vadd.f32 %v4041, 0.2548296
        %v4074 = vadd.f32 %v4042, 0.2548296
        %v4075 = vmul.f32 %v4043, %v3353
        %v4076 = vmul.f32 %v4044, %v3368
        %v4077 = vmul.f32 %v4045, %v3383
        %v4078 = vmul.f32 %v4046, %v3398
        %v4079 = vmul.f32 %v4047, %v3413
        %v4080 = vmul.f32 %v4048, %v3428
        %v4081 = vmul.f32 %v4049, %v3443
        %v4082 = vmul.f32 %v4050, %v3458
        %v4083 = vmul.f32 %v4051, %v3473
        %v4084 = vmul.f32 %v4052, %v3488
        %v4085 = vmul.f32 %v4053, %v3503
        %v4086 = vmul.f32 %v4054, %v3518
        %v4087 = vmul.f32 %v4055, %v3533
        %v4088 = vmul.f32 %v4056, %v3548
        %v4089 = vmul.f32 %v4057, %v3563
        %v4090 = vmul.f32 %v4058, %v3578
        %v4091 = vmul.f32 %v4059, %v3593
        %v4092 = vmul.f32 %v4060, %v3608
        %v4093 = vmul.f32 %v4061, %v3623
        %v4094 = vmul.f32 %v4062, %v3638
        %v4095 = vmul.f32 %v4063, %v3653
        %v4096 = vmul.f32 %v4064, %v3668
        %v4097 = vmul.f32 %v4065, %v3683
        %v4098 = vmul.f32 %v4066, %v3698
        %v4099 = vmul.f32 %v4067, %v3713
        %v4100 = vmul.f32 %v4068, %v3728
        %v4101 = vmul.f32 %v4069, %v3743
        %v4102 = vmul.f32 %v4070, %v3758
        %v4103 = vmul.f32 %v4071, %v3773
        %v4104 = vmul.f32 %v4072, %v3788
        %v4105 = vmul.f32 %v4073, %v3803
        %v4106 = vmul.f32 %v4074, %v3818
        %v4107 = vsub.f32 0.0, %v3243
        %v4108 = vsub.f32 0.0, %v3244
        %v4109 = vsub.f32 0.0, %v3245
        %v4110 = vsub.f32 0.0, %v3246
        %v4111 = vsub.f32 0.0, %v3247
        %v4112 = vsub.f32 0.0, %v3248
        %v4113 = vsub.f32 0.0, %v3249
        %v4114 = vsub.f32 0.0, %v3250
        %v4115 = vsub.f32 0.0, %v3251
        %v4116 = vsub.f32 0.0, %v3252
        %v4117 = vsub.f32 0.0, %v3253
        %v4118 = vsub.f32 0.0, %v3254
        %v4119 = vsub.f32 0.0, %v3255
        %v4120 = vsub.f32 0.0, %v3256
        %v4121 = vsub.f32 0.0, %v3257
        %v4122 = vsub.f32 0.0, %v3258
        %v4123 = vsub.f32 0.0, %v3259
        %v4124 = vsub.f32 0.0, %v3260
        %v4125 = vsub.f32 0.0, %v3261
        %v4126 = vsub.f32 0.0, %v3262
        %v4127 = vsub.f32 0.0, %v3263
        %v4128 = vsub.f32 0.0, %v3264
        %v4129 = vsub.f32 0.0, %v3265
        %v4130 = vsub.f32 0.0, %v3266
        %v4131 = vsub.f32 0.0, %v3267
        %v4132 = vsub.f32 0.0, %v3268
        %v4133 = vsub.f32 0.0, %v3269
        %v4134 = vsub.f32 0.0, %v3270
        %v4135 = vsub.f32 0.0, %v3271
        %v4136 = vsub.f32 0.0, %v3272
        %v4137 = vsub.f32 0.0, %v3273
        %v4138 = vsub.f32 0.0, %v3274
        %v4139 = vmul.f32 %v4107, %v3243
        %v4140 = vmul.f32 %v4108, %v3244
        %v4141 = vmul.f32 %v4109, %v3245
        %v4142 = vmul.f32 %v4110, %v3246
        %v4143 = vmul.f32 %v4111, %v3247
        %v4144 = vmul.f32 %v4112, %v3248
        %v4145 = vmul.f32 %v4113, %v3249
        %v4146 = vmul.f32 %v4114, %v3250
        %v4147 = vmul.f32 %v4115, %v3251
        %v4148 = vmul.f32 %v4116, %v3252
        %v4149 = vmul.f32 %v4117, %v3253
        %v4150 = vmul.f32 %v4118, %v3254
        %v4151 = vmul.f32 %v4119, %v3255
        %v4152 = vmul.f32 %v4120, %v3256
        %v4153 = vmul.f32 %v4121, %v3257
        %v4154 = vmul.f32 %v4122, %v3258
        %v4155 = vmul.f32 %v4123, %v3259
        %v4156 = vmul.f32 %v4124, %v3260
        %v4157 = vmul.f32 %v4125, %v3261
        %v4158 = vmul.f32 %v4126, %v3262
        %v4159 = vmul.f32 %v4127, %v3263
        %v4160 = vmul.f32 %v4128, %v3264
        %v4161 = vmul.f32 %v4129, %v3265
        %v4162 = vmul.f32 %v4130, %v3266
        %v4163 = vmul.f32 %v4131, %v3267
        %v4164 = vmul.f32 %v4132, %v3268
        %v4165 = vmul.f32 %v4133, %v3269
        %v4166 = vmul.f32 %v4134, %v3270
        %v4167 = vmul.f32 %v4135, %v3271
        %v4168 = vmul.f32 %v4136, %v3272
        %v4169 = vmul.f32 %v4137, %v3273
        %v4170 = vmul.f32 %v4138, %v3274
        %v4171 = vmul.f32 %v4139, 1.442695
        %v4172 = vpow.pop %v4171
        %v4173 = vmul.f32 %v4140, 1.442695
        %v4174 = vpow.pop %v4173
        %v4175 = vmul.f32 %v4141, 1.442695
        %v4176 = vpow.pop %v4175
        %v4177 = vmul.f32 %v4142, 1.442695
        %v4178 = vpow.pop %v4177
        %v4179 = vmul.f32 %v4143, 1.442695
        %v4180 = vpow.pop %v4179
        %v4181 = vmul.f32 %v4144, 1.442695
        %v4182 = vpow.pop %v4181
        %v4183 = vmul.f32 %v4145, 1.442695
        %v4184 = vpow.pop %v4183
        %v4185 = vmul.f32 %v4146, 1.442695
        %v4186 = vpow.pop %v4185
        %v4187 = vmul.f32 %v4147, 1.442695
        %v4188 = vpow.pop %v4187
        %v4189 = vmul.f32 %v4148, 1.442695
        %v4190 = vpow.pop %v4189
        %v4191 = vmul.f32 %v4149, 1.442695
        %v4192 = vpow.pop %v4191
        %v4193 = vmul.f32 %v4150, 1.442695
        %v4194 = vpow.pop %v4193
        %v4195 = vmul.f32 %v4151, 1.442695
        %v4196 = vpow.pop %v4195
        %v4197 = vmul.f32 %v4152, 1.442695
        %v4198 = vpow.pop %v4197
        %v4199 = vmul.f32 %v4153, 1.442695
        %v4200 = vpow.pop %v4199
        %v4201 = vmul.f32 %v4154, 1.442695
        %v4202 = vpow.pop %v4201
        %v4203 = vmul.f32 %v4155, 1.442695
        %v4204 = vpow.pop %v4203
        %v4205 = vmul.f32 %v4156, 1.442695
        %v4206 = vpow.pop %v4205
        %v4207 = vmul.f32 %v4157, 1.442695
        %v4208 = vpow.pop %v4207
        %v4209 = vmul.f32 %v4158, 1.442695
        %v4210 = vpow.pop %v4209
        %v4211 = vmul.f32 %v4159, 1.442695
        %v4212 = vpow.pop %v4211
        %v4213 = vmul.f32 %v4160, 1.442695
        %v4214 = vpow.pop %v4213
        %v4215 = vmul.f32 %v4161, 1.442695
        %v4216 = vpow.pop %v4215
        %v4217 = vmul.f32 %v4162, 1.442695
        %v4218 = vpow.pop %v4217
        %v4219 = vmul.f32 %v4163, 1.442695
        %v4220 = vpow.pop %v4219
        %v4221 = vmul.f32 %v4164, 1.442695
        %v4222 = vpow.pop %v4221
        %v4223 = vmul.f32 %v4165, 1.442695
        %v4224 = vpow.pop %v4223
        %v4225 = vmul.f32 %v4166, 1.442695
        %v4226 = vpow.pop %v4225
        %v4227 = vmul.f32 %v4167, 1.442695
        %v4228 = vpow.pop %v4227
        %v4229 = vmul.f32 %v4168, 1.442695
        %v4230 = vpow.pop %v4229
        %v4231 = vmul.f32 %v4169, 1.442695
        %v4232 = vpow.pop %v4231
        %v4233 = vmul.f32 %v4170, 1.442695
        %v4234 = vpow.pop %v4233
        %v4235 = vmul.f32 %v4075, %v4172
        %v4236 = vmul.f32 %v4076, %v4174
        %v4237 = vmul.f32 %v4077, %v4176
        %v4238 = vmul.f32 %v4078, %v4178
        %v4239 = vmul.f32 %v4079, %v4180
        %v4240 = vmul.f32 %v4080, %v4182
        %v4241 = vmul.f32 %v4081, %v4184
        %v4242 = vmul.f32 %v4082, %v4186
        %v4243 = vmul.f32 %v4083, %v4188
        %v4244 = vmul.f32 %v4084, %v4190
        %v4245 = vmul.f32 %v4085, %v4192
        %v4246 = vmul.f32 %v4086, %v4194
        %v4247 = vmul.f32 %v4087, %v4196
        %v4248 = vmul.f32 %v4088, %v4198
        %v4249 = vmul.f32 %v4089, %v4200
        %v4250 = vmul.f32 %v4090, %v4202
        %v4251 = vmul.f32 %v4091, %v4204
        %v4252 = vmul.f32 %v4092, %v4206
        %v4253 = vmul.f32 %v4093, %v4208
        %v4254 = vmul.f32 %v4094, %v4210
        %v4255 = vmul.f32 %v4095, %v4212
        %v4256 = vmul.f32 %v4096, %v4214
        %v4257 = vmul.f32 %v4097, %v4216
        %v4258 = vmul.f32 %v4098, %v4218
        %v4259 = vmul.f32 %v4099, %v4220
        %v4260 = vmul.f32 %v4100, %v4222
        %v4261 = vmul.f32 %v4101, %v4224
        %v4262 = vmul.f32 %v4102, %v4226
        %v4263 = vmul.f32 %v4103, %v4228
        %v4264 = vmul.f32 %v4104, %v4230
        %v4265 = vmul.f32 %v4105, %v4232
        %v4266 = vmul.f32 %v4106, %v4234
        %v4267 = vsub.f32 1.0, %v4235
        %v4268 = vsub.f32 1.0, %v4236
        %v4269 = vsub.f32 1.0, %v4237
        %v4270 = vsub.f32 1.0, %v4238
        %v4271 = vsub.f32 1.0, %v4239
        %v4272 = vsub.f32 1.0, %v4240
        %v4273 = vsub.f32 1.0, %v4241
        %v4274 = vsub.f32 1.0, %v4242
        %v4275 = vsub.f32 1.0, %v4243
        %v4276 = vsub.f32 1.0, %v4244
        %v4277 = vsub.f32 1.0, %v4245
        %v4278 = vsub.f32 1.0, %v4246
        %v4279 = vsub.f32 1.0, %v4247
        %v4280 = vsub.f32 1.0, %v4248
        %v4281 = vsub.f32 1.0, %v4249
        %v4282 = vsub.f32 1.0, %v4250
        %v4283 = vsub.f32 1.0, %v4251
        %v4284 = vsub.f32 1.0, %v4252
        %v4285 = vsub.f32 1.0, %v4253
        %v4286 = vsub.f32 1.0, %v4254
        %v4287 = vsub.f32 1.0, %v4255
        %v4288 = vsub.f32 1.0, %v4256
        %v4289 = vsub.f32 1.0, %v4257
        %v4290 = vsub.f32 1.0, %v4258
        %v4291 = vsub.f32 1.0, %v4259
        %v4292 = vsub.f32 1.0, %v4260
        %v4293 = vsub.f32 1.0, %v4261
        %v4294 = vsub.f32 1.0, %v4262
        %v4295 = vsub.f32 1.0, %v4263
        %v4296 = vsub.f32 1.0, %v4264
        %v4297 = vsub.f32 1.0, %v4265
        %v4298 = vsub.f32 1.0, %v4266
        %v4299 = vmul.f32 %v3211, %v4267
        %v4300 = vmul.f32 %v3212, %v4268
        %v4301 = vmul.f32 %v3213, %v4269
        %v4302 = vmul.f32 %v3214, %v4270
        %v4303 = vmul.f32 %v3215, %v4271
        %v4304 = vmul.f32 %v3216, %v4272
        %v4305 = vmul.f32 %v3217, %v4273
        %v4306 = vmul.f32 %v3218, %v4274
        %v4307 = vmul.f32 %v3219, %v4275
        %v4308 = vmul.f32 %v3220, %v4276
        %v4309 = vmul.f32 %v3221, %v4277
        %v4310 = vmul.f32 %v3222, %v4278
        %v4311 = vmul.f32 %v3223, %v4279
        %v4312 = vmul.f32 %v3224, %v4280
        %v4313 = vmul.f32 %v3225, %v4281
        %v4314 = vmul.f32 %v3226, %v4282
        %v4315 = vmul.f32 %v3227, %v4283
        %v4316 = vmul.f32 %v3228, %v4284
        %v4317 = vmul.f32 %v3229, %v4285
        %v4318 = vmul.f32 %v3230, %v4286
        %v4319 = vmul.f32 %v3231, %v4287
        %v4320 = vmul.f32 %v3232, %v4288
        %v4321 = vmul.f32 %v3233, %v4289
        %v4322 = vmul.f32 %v3234, %v4290
        %v4323 = vmul.f32 %v3235, %v4291
        %v4324 = vmul.f32 %v3236, %v4292
        %v4325 = vmul.f32 %v3237, %v4293
        %v4326 = vmul.f32 %v3238, %v4294
        %v4327 = vmul.f32 %v3239, %v4295
        %v4328 = vmul.f32 %v3240, %v4296
        %v4329 = vmul.f32 %v3241, %v4297
        %v4330 = vmul.f32 %v3242, %v4298
        %v4331 = vadd.f32 %v4299, 1.0
        %v4332 = vadd.f32 %v4300, 1.0
        %v4333 = vadd.f32 %v4301, 1.0
        %v4334 = vadd.f32 %v4302, 1.0
        %v4335 = vadd.f32 %v4303, 1.0
        %v4336 = vadd.f32 %v4304, 1.0
        %v4337 = vadd.f32 %v4305, 1.0
        %v4338 = vadd.f32 %v4306, 1.0
        %v4339 = vadd.f32 %v4307, 1.0
        %v4340 = vadd.f32 %v4308, 1.0
        %v4341 = vadd.f32 %v4309, 1.0
        %v4342 = vadd.f32 %v4310, 1.0
        %v4343 = vadd.f32 %v4311, 1.0
        %v4344 = vadd.f32 %v4312, 1.0
        %v4345 = vadd.f32 %v4313, 1.0
        %v4346 = vadd.f32 %v4314, 1.0
        %v4347 = vadd.f32 %v4315, 1.0
        %v4348 = vadd.f32 %v4316, 1.0
        %v4349 = vadd.f32 %v4317, 1.0
        %v4350 = vadd.f32 %v4318, 1.0
        %v4351 = vadd.f32 %v4319, 1.0
        %v4352 = vadd.f32 %v4320, 1.0
        %v4353 = vadd.f32 %v4321, 1.0
        %v4354 = vadd.f32 %v4322, 1.0
        %v4355 = vadd.f32 %v4323, 1.0
        %v4356 = vadd.f32 %v4324, 1.0
        %v4357 = vadd.f32 %v4325, 1.0
        %v4358 = vadd.f32 %v4326, 1.0
        %v4359 = vadd.f32 %v4327, 1.0
        %v4360 = vadd.f32 %v4328, 1.0
        %v4361 = vadd.f32 %v4329, 1.0
        %v4362 = vadd.f32 %v4330, 1.0
        %v4363 = vmul.f32 %v3115, %v4331
        %v4364 = vmul.f32 %v3116, %v4332
        %v4365 = vmul.f32 %v3117, %v4333
        %v4366 = vmul.f32 %v3118, %v4334
        %v4367 = vmul.f32 %v3119, %v4335
        %v4368 = vmul.f32 %v3120, %v4336
        %v4369 = vmul.f32 %v3121, %v4337
        %v4370 = vmul.f32 %v3122, %v4338
        %v4371 = vmul.f32 %v3123, %v4339
        %v4372 = vmul.f32 %v3124, %v4340
        %v4373 = vmul.f32 %v3125, %v4341
        %v4374 = vmul.f32 %v3126, %v4342
        %v4375 = vmul.f32 %v3127, %v4343
        %v4376 = vmul.f32 %v3128, %v4344
        %v4377 = vmul.f32 %v3129, %v4345
        %v4378 = vmul.f32 %v3130, %v4346
        %v4379 = vmul.f32 %v3131, %v4347
        %v4380 = vmul.f32 %v3132, %v4348
        %v4381 = vmul.f32 %v3133, %v4349
        %v4382 = vmul.f32 %v3134, %v4350
        %v4383 = vmul.f32 %v3135, %v4351
        %v4384 = vmul.f32 %v3136, %v4352
        %v4385 = vmul.f32 %v3137, %v4353
        %v4386 = vmul.f32 %v3138, %v4354
        %v4387 = vmul.f32 %v3139, %v4355
        %v4388 = vmul.f32 %v3140, %v4356
        %v4389 = vmul.f32 %v3141, %v4357
        %v4390 = vmul.f32 %v3142, %v4358
        %v4391 = vmul.f32 %v3143, %v4359
        %v4392 = vmul.f32 %v3144, %v4360
        %v4393 = vmul.f32 %v3145, %v4361
        %v4394 = vmul.f32 %v3146, %v4362
        %v4395 = vpack.c.bf16 %v4365, %v4363
        %v4396 = vpack.c.bf16 %v4366, %v4364
        %v4397 = vpack.c.bf16 %v4369, %v4367
        %v4398 = vpack.c.bf16 %v4370, %v4368
        %v4399 = vpack.c.bf16 %v4373, %v4371
        %v4400 = vpack.c.bf16 %v4374, %v4372
        %v4401 = vpack.c.bf16 %v4377, %v4375
        %v4402 = vpack.c.bf16 %v4378, %v4376
        %v4403 = vpack.c.bf16 %v4381, %v4379
        %v4404 = vpack.c.bf16 %v4382, %v4380
        %v4405 = vpack.c.bf16 %v4385, %v4383
        %v4406 = vpack.c.bf16 %v4386, %v4384
        %v4407 = vpack.c.bf16 %v4389, %v4387
        %v4408 = vpack.c.bf16 %v4390, %v4388
        %v4409 = vpack.c.bf16 %v4393, %v4391
        %v4410 = vpack.c.bf16 %v4394, %v4392
        %v4411 = vperm.slane %v2924, 1
        %v4412 = vperm.slane %v2924, 5
        %v4415 = vperm.slane %v4411, 1
        %v4416 = vperm.slane %v4412, 1
        %v4449 = vunpack.c.l.b16 %v2892
        %v4450 = vunpack.c.h.b16 %v2892
        %v4451 = vunpack.c.l.b16 %v2893
        %v4452 = vunpack.c.h.b16 %v2893
        %v4453 = vunpack.c.l.b16 %v2894
        %v4454 = vunpack.c.h.b16 %v2894
        %v4455 = vunpack.c.l.b16 %v2895
        %v4456 = vunpack.c.h.b16 %v2895
        %v4457 = vunpack.c.l.b16 %v2896
        %v4458 = vunpack.c.h.b16 %v2896
        %v4459 = vunpack.c.l.b16 %v2897
        %v4460 = vunpack.c.h.b16 %v2897
        %v4461 = vunpack.c.l.b16 %v2898
        %v4462 = vunpack.c.h.b16 %v2898
        %v4463 = vunpack.c.l.b16 %v2899
        %v4464 = vunpack.c.h.b16 %v2899
        %v4465 = vunpack.c.l.b16 %v2900
        %v4466 = vunpack.c.h.b16 %v2900
        %v4467 = vunpack.c.l.b16 %v2901
        %v4468 = vunpack.c.h.b16 %v2901
        %v4469 = vunpack.c.l.b16 %v2902
        %v4470 = vunpack.c.h.b16 %v2902
        %v4471 = vunpack.c.l.b16 %v2903
        %v4472 = vunpack.c.h.b16 %v2903
        %v4473 = vunpack.c.l.b16 %v2904
        %v4474 = vunpack.c.h.b16 %v2904
        %v4475 = vunpack.c.l.b16 %v2905
        %v4476 = vunpack.c.h.b16 %v2905
        %v4477 = vunpack.c.l.b16 %v2906
        %v4478 = vunpack.c.h.b16 %v2906
        %v4479 = vunpack.c.l.b16 %v2907
        %v4480 = vunpack.c.h.b16 %v2907
        %v4481 = vunpack.c.l.b16 %v2908
        %v4482 = vunpack.c.h.b16 %v2908
        %v4483 = vunpack.c.l.b16 %v2909
        %v4484 = vunpack.c.h.b16 %v2909
        %v4485 = vunpack.c.l.b16 %v2910
        %v4486 = vunpack.c.h.b16 %v2910
        %v4487 = vunpack.c.l.b16 %v2911
        %v4488 = vunpack.c.h.b16 %v2911
        %v4489 = vunpack.c.l.b16 %v2912
        %v4490 = vunpack.c.h.b16 %v2912
        %v4491 = vunpack.c.l.b16 %v2913
        %v4492 = vunpack.c.h.b16 %v2913
        %v4493 = vunpack.c.l.b16 %v2914
        %v4494 = vunpack.c.h.b16 %v2914
        %v4495 = vunpack.c.l.b16 %v2915
        %v4496 = vunpack.c.h.b16 %v2915
        %v4497 = vunpack.c.l.b16 %v2916
        %v4498 = vunpack.c.h.b16 %v2916
        %v4499 = vunpack.c.l.b16 %v2917
        %v4500 = vunpack.c.h.b16 %v2917
        %v4501 = vunpack.c.l.b16 %v2918
        %v4502 = vunpack.c.h.b16 %v2918
        %v4503 = vunpack.c.l.b16 %v2919
        %v4504 = vunpack.c.h.b16 %v2919
        %v4505 = vunpack.c.l.b16 %v2920
        %v4506 = vunpack.c.h.b16 %v2920
        %v4507 = vunpack.c.l.b16 %v2921
        %v4508 = vunpack.c.h.b16 %v2921
        %v4509 = vunpack.c.l.b16 %v2922
        %v4510 = vunpack.c.h.b16 %v2922
        %v4511 = vunpack.c.l.b16 %v2923
        %v4512 = vunpack.c.h.b16 %v2923
        %v4513 = vpack.c.b16 %v4451, %v4449
        %v4514 = vpack.c.b16 %v4452, %v4450
        %v4515 = vpack.c.b16 %v4455, %v4453
        %v4516 = vpack.c.b16 %v4456, %v4454
        %v4517 = vpack.c.b16 %v4459, %v4457
        %v4518 = vpack.c.b16 %v4460, %v4458
        %v4519 = vpack.c.b16 %v4463, %v4461
        %v4520 = vpack.c.b16 %v4464, %v4462
        %v4521 = vpack.c.b16 %v4467, %v4465
        %v4522 = vpack.c.b16 %v4468, %v4466
        %v4523 = vpack.c.b16 %v4471, %v4469
        %v4524 = vpack.c.b16 %v4472, %v4470
        %v4525 = vpack.c.b16 %v4475, %v4473
        %v4526 = vpack.c.b16 %v4476, %v4474
        %v4527 = vpack.c.b16 %v4479, %v4477
        %v4528 = vpack.c.b16 %v4480, %v4478
        %v4529 = vpack.c.b16 %v4483, %v4481
        %v4530 = vpack.c.b16 %v4484, %v4482
        %v4531 = vpack.c.b16 %v4487, %v4485
        %v4532 = vpack.c.b16 %v4488, %v4486
        %v4533 = vpack.c.b16 %v4491, %v4489
        %v4534 = vpack.c.b16 %v4492, %v4490
        %v4535 = vpack.c.b16 %v4495, %v4493
        %v4536 = vpack.c.b16 %v4496, %v4494
        %v4537 = vpack.c.b16 %v4499, %v4497
        %v4538 = vpack.c.b16 %v4500, %v4498
        %v4539 = vpack.c.b16 %v4503, %v4501
        %v4540 = vpack.c.b16 %v4504, %v4502
        %v4541 = vpack.c.b16 %v4507, %v4505
        %v4542 = vpack.c.b16 %v4508, %v4506
        %v4543 = vpack.c.b16 %v4511, %v4509
        %v4544 = vpack.c.b16 %v4512, %v4510
        %4577 = vmatpush.bf16.msra.mxu0 %v4527
        %4578 = vmatpush.bf16.msra.mxu0 %v4525
        %4579 = vmatpush.bf16.msra.mxu0 %v4523
        %4580 = vmatpush.bf16.msra.mxu0 %v4521
        %4581 = vmatpush.bf16.msra.mxu0 %v4519
        %4582 = vmatpush.bf16.msra.mxu0 %v4517
        %4583 = vmatpush.bf16.msra.mxu0 %v4515
        %4584 = vmatpush.bf16.msra.mxu0 %v4513
        %4585 = vmatmul.bf16.gmra.mxu0 %v4395
        %v4586 = vpop.f32.mrf.mxu0
        %v4587 = vadd.f32 %v4415, %v4586
        %v4588 = vpop.f32.mrf.mxu0
        %v4589 = vadd.f32 %v4415, %v4588
        %4590 = vmatmul.bf16.gmra.mxu0 %v4397
        %v4591 = vpop.f32.mrf.mxu0
        %v4592 = vadd.f32 %v4415, %v4591
        %v4593 = vpop.f32.mrf.mxu0
        %v4594 = vadd.f32 %v4415, %v4593
        %4595 = vmatmul.bf16.gmra.mxu0 %v4399
        %v4596 = vpop.f32.mrf.mxu0
        %v4597 = vadd.f32 %v4415, %v4596
        %v4598 = vpop.f32.mrf.mxu0
        %v4599 = vadd.f32 %v4415, %v4598
        %4600 = vmatmul.bf16.gmra.mxu0 %v4401
        %v4601 = vpop.f32.mrf.mxu0
        %v4602 = vadd.f32 %v4415, %v4601
        %v4603 = vpop.f32.mrf.mxu0
        %v4604 = vadd.f32 %v4415, %v4603
        %4605 = vmatmul.bf16.gmra.mxu0 %v4403
        %v4606 = vpop.f32.mrf.mxu0
        %v4607 = vadd.f32 %v4415, %v4606
        %v4608 = vpop.f32.mrf.mxu0
        %v4609 = vadd.f32 %v4415, %v4608
        %4610 = vmatmul.bf16.gmra.mxu0 %v4405
        %v4611 = vpop.f32.mrf.mxu0
        %v4612 = vadd.f32 %v4415, %v4611
        %v4613 = vpop.f32.mrf.mxu0
        %v4614 = vadd.f32 %v4415, %v4613
        %4615 = vmatmul.bf16.gmra.mxu0 %v4407
        %v4616 = vpop.f32.mrf.mxu0
        %v4617 = vadd.f32 %v4415, %v4616
        %v4618 = vpop.f32.mrf.mxu0
        %v4619 = vadd.f32 %v4415, %v4618
        %4620 = vmatmul.bf16.gmra.mxu0 %v4409
        %v4621 = vpop.f32.mrf.mxu0
        %v4622 = vadd.f32 %v4415, %v4621
        %v4623 = vpop.f32.mrf.mxu0
        %v4624 = vadd.f32 %v4415, %v4623
        %4625 = vdwg.mxu0
        %4626 = vmatpush.bf16.msra.mxu0 %v4543
        %4627 = vmatpush.bf16.msra.mxu0 %v4541
        %4628 = vmatpush.bf16.msra.mxu0 %v4539
        %4629 = vmatpush.bf16.msra.mxu0 %v4537
        %4630 = vmatpush.bf16.msra.mxu0 %v4535
        %4631 = vmatpush.bf16.msra.mxu0 %v4533
        %4632 = vmatpush.bf16.msra.mxu0 %v4531
        %4633 = vmatpush.bf16.msra.mxu0 %v4529
        %4634 = vmatmul.bf16.gmra.mxu0 %v4396
        %v4635 = vpop.f32.mrf.mxu0
        %v4636 = vadd.f32 %v4587, %v4635
        %v4637 = vpop.f32.mrf.mxu0
        %v4638 = vadd.f32 %v4589, %v4637
        %4639 = vmatmul.bf16.gmra.mxu0 %v4398
        %v4640 = vpop.f32.mrf.mxu0
        %v4641 = vadd.f32 %v4592, %v4640
        %v4642 = vpop.f32.mrf.mxu0
        %v4643 = vadd.f32 %v4594, %v4642
        %4644 = vmatmul.bf16.gmra.mxu0 %v4400
        %v4645 = vpop.f32.mrf.mxu0
        %v4646 = vadd.f32 %v4597, %v4645
        %v4647 = vpop.f32.mrf.mxu0
        %v4648 = vadd.f32 %v4599, %v4647
        %4649 = vmatmul.bf16.gmra.mxu0 %v4402
        %v4650 = vpop.f32.mrf.mxu0
        %v4651 = vadd.f32 %v4602, %v4650
        %v4652 = vpop.f32.mrf.mxu0
        %v4653 = vadd.f32 %v4604, %v4652
        %4654 = vmatmul.bf16.gmra.mxu0 %v4404
        %v4655 = vpop.f32.mrf.mxu0
        %v4656 = vadd.f32 %v4607, %v4655
        %v4657 = vpop.f32.mrf.mxu0
        %v4658 = vadd.f32 %v4609, %v4657
        %4659 = vmatmul.bf16.gmra.mxu0 %v4406
        %v4660 = vpop.f32.mrf.mxu0
        %v4661 = vadd.f32 %v4612, %v4660
        %v4662 = vpop.f32.mrf.mxu0
        %v4663 = vadd.f32 %v4614, %v4662
        %4664 = vmatmul.bf16.gmra.mxu0 %v4408
        %v4665 = vpop.f32.mrf.mxu0
        %v4666 = vadd.f32 %v4617, %v4665
        %v4667 = vpop.f32.mrf.mxu0
        %v4668 = vadd.f32 %v4619, %v4667
        %4669 = vmatmul.bf16.gmra.mxu0 %v4410
        %v4670 = vpop.f32.mrf.mxu0
        %v4671 = vadd.f32 %v4622, %v4670
        %v4672 = vpop.f32.mrf.mxu0
        %v4673 = vadd.f32 %v4624, %v4672
        %4674 = vdwg.mxu0
        %4675 = vmatpush.bf16.msra.mxu0 %v4528
        %4676 = vmatpush.bf16.msra.mxu0 %v4526
        %4677 = vmatpush.bf16.msra.mxu0 %v4524
        %4678 = vmatpush.bf16.msra.mxu0 %v4522
        %4679 = vmatpush.bf16.msra.mxu0 %v4520
        %4680 = vmatpush.bf16.msra.mxu0 %v4518
        %4681 = vmatpush.bf16.msra.mxu0 %v4516
        %4682 = vmatpush.bf16.msra.mxu0 %v4514
        %4683 = vmatmul.bf16.gmra.mxu0 %v4395
        %v4684 = vpop.f32.mrf.mxu0
        %v4685 = vadd.f32 %v4416, %v4684
        %v4686 = vpop.f32.mrf.mxu0
        %v4687 = vadd.f32 %v4416, %v4686
        %4688 = vmatmul.bf16.gmra.mxu0 %v4397
        %v4689 = vpop.f32.mrf.mxu0
        %v4690 = vadd.f32 %v4416, %v4689
        %v4691 = vpop.f32.mrf.mxu0
        %v4692 = vadd.f32 %v4416, %v4691
        %4693 = vmatmul.bf16.gmra.mxu0 %v4399
        %v4694 = vpop.f32.mrf.mxu0
        %v4695 = vadd.f32 %v4416, %v4694
        %v4696 = vpop.f32.mrf.mxu0
        %v4697 = vadd.f32 %v4416, %v4696
        %4698 = vmatmul.bf16.gmra.mxu0 %v4401
        %v4699 = vpop.f32.mrf.mxu0
        %v4700 = vadd.f32 %v4416, %v4699
        %v4701 = vpop.f32.mrf.mxu0
        %v4702 = vadd.f32 %v4416, %v4701
        %4703 = vmatmul.bf16.gmra.mxu0 %v4403
        %v4704 = vpop.f32.mrf.mxu0
        %v4705 = vadd.f32 %v4416, %v4704
        %v4706 = vpop.f32.mrf.mxu0
        %v4707 = vadd.f32 %v4416, %v4706
        %4708 = vmatmul.bf16.gmra.mxu0 %v4405
        %v4709 = vpop.f32.mrf.mxu0
        %v4710 = vadd.f32 %v4416, %v4709
        %v4711 = vpop.f32.mrf.mxu0
        %v4712 = vadd.f32 %v4416, %v4711
        %4713 = vmatmul.bf16.gmra.mxu0 %v4407
        %v4714 = vpop.f32.mrf.mxu0
        %v4715 = vadd.f32 %v4416, %v4714
        %v4716 = vpop.f32.mrf.mxu0
        %v4717 = vadd.f32 %v4416, %v4716
        %4718 = vmatmul.bf16.gmra.mxu0 %v4409
        %v4719 = vpop.f32.mrf.mxu0
        %v4720 = vadd.f32 %v4416, %v4719
        %v4721 = vpop.f32.mrf.mxu0
        %v4722 = vadd.f32 %v4416, %v4721
        %4723 = vdwg.mxu0
        %4724 = vmatpush.bf16.msra.mxu0 %v4544
        %4725 = vmatpush.bf16.msra.mxu0 %v4542
        %4726 = vmatpush.bf16.msra.mxu0 %v4540
        %4727 = vmatpush.bf16.msra.mxu0 %v4538
        %4728 = vmatpush.bf16.msra.mxu0 %v4536
        %4729 = vmatpush.bf16.msra.mxu0 %v4534
        %4730 = vmatpush.bf16.msra.mxu0 %v4532
        %4731 = vmatpush.bf16.msra.mxu0 %v4530
        %4732 = vmatmul.bf16.gmra.mxu0 %v4396
        %v4733 = vpop.f32.mrf.mxu0
        %v4734 = vadd.f32 %v4685, %v4733
        %v4735 = vpop.f32.mrf.mxu0
        %v4736 = vadd.f32 %v4687, %v4735
        %4737 = vmatmul.bf16.gmra.mxu0 %v4398
        %v4738 = vpop.f32.mrf.mxu0
        %v4739 = vadd.f32 %v4690, %v4738
        %v4740 = vpop.f32.mrf.mxu0
        %v4741 = vadd.f32 %v4692, %v4740
        %4742 = vmatmul.bf16.gmra.mxu0 %v4400
        %v4743 = vpop.f32.mrf.mxu0
        %v4744 = vadd.f32 %v4695, %v4743
        %v4745 = vpop.f32.mrf.mxu0
        %v4746 = vadd.f32 %v4697, %v4745
        %4747 = vmatmul.bf16.gmra.mxu0 %v4402
        %v4748 = vpop.f32.mrf.mxu0
        %v4749 = vadd.f32 %v4700, %v4748
        %v4750 = vpop.f32.mrf.mxu0
        %v4751 = vadd.f32 %v4702, %v4750
        %4752 = vmatmul.bf16.gmra.mxu0 %v4404
        %v4753 = vpop.f32.mrf.mxu0
        %v4754 = vadd.f32 %v4705, %v4753
        %v4755 = vpop.f32.mrf.mxu0
        %v4756 = vadd.f32 %v4707, %v4755
        %4757 = vmatmul.bf16.gmra.mxu0 %v4406
        %v4758 = vpop.f32.mrf.mxu0
        %v4759 = vadd.f32 %v4710, %v4758
        %v4760 = vpop.f32.mrf.mxu0
        %v4761 = vadd.f32 %v4712, %v4760
        %4762 = vmatmul.bf16.gmra.mxu0 %v4408
        %v4763 = vpop.f32.mrf.mxu0
        %v4764 = vadd.f32 %v4715, %v4763
        %v4765 = vpop.f32.mrf.mxu0
        %v4766 = vadd.f32 %v4717, %v4765
        %4767 = vmatmul.bf16.gmra.mxu0 %v4410
        %v4768 = vpop.f32.mrf.mxu0
        %v4769 = vadd.f32 %v4720, %v4768
        %v4770 = vpop.f32.mrf.mxu0
        %v4771 = vadd.f32 %v4722, %v4770
        %4772 = vdwg.mxu0
        %v4773 = vadd.f32 %v4636, %v3027
        %v4774 = vadd.f32 %v4734, %v3076
        %v4775 = vadd.f32 %v4638, %v3029
        %v4776 = vadd.f32 %v4736, %v3078
        %v4777 = vadd.f32 %v4641, %v3032
        %v4778 = vadd.f32 %v4739, %v3081
        %v4779 = vadd.f32 %v4643, %v3034
        %v4780 = vadd.f32 %v4741, %v3083
        %v4781 = vadd.f32 %v4646, %v3037
        %v4782 = vadd.f32 %v4744, %v3086
        %v4783 = vadd.f32 %v4648, %v3039
        %v4784 = vadd.f32 %v4746, %v3088
        %v4785 = vadd.f32 %v4651, %v3042
        %v4786 = vadd.f32 %v4749, %v3091
        %v4787 = vadd.f32 %v4653, %v3044
        %v4788 = vadd.f32 %v4751, %v3093
        %v4789 = vadd.f32 %v4656, %v3047
        %v4790 = vadd.f32 %v4754, %v3096
        %v4791 = vadd.f32 %v4658, %v3049
        %v4792 = vadd.f32 %v4756, %v3098
        %v4793 = vadd.f32 %v4661, %v3052
        %v4794 = vadd.f32 %v4759, %v3101
        %v4795 = vadd.f32 %v4663, %v3054
        %v4796 = vadd.f32 %v4761, %v3103
        %v4797 = vadd.f32 %v4666, %v3057
        %v4798 = vadd.f32 %v4764, %v3106
        %v4799 = vadd.f32 %v4668, %v3059
        %v4800 = vadd.f32 %v4766, %v3108
        %v4801 = vadd.f32 %v4671, %v3062
        %v4802 = vadd.f32 %v4769, %v3111
        %v4803 = vadd.f32 %v4673, %v3064
        %v4804 = vadd.f32 %v4771, %v3113
        %v4805 = vadd.f32 %v4773, %v4774
        %4806 = vadd.xlane.f32.xlu0 %v4805
        %v4807 = vpop.xlane.xlu0 %4806
        %v4808 = vadd.f32 %v4775, %v4776
        %4809 = vadd.xlane.f32.xlu0 %v4808
        %v4810 = vpop.xlane.xlu0 %4809
        %v4811 = vadd.f32 %v4777, %v4778
        %4812 = vadd.xlane.f32.xlu0 %v4811
        %v4813 = vpop.xlane.xlu0 %4812
        %v4814 = vadd.f32 %v4779, %v4780
        %4815 = vadd.xlane.f32.xlu0 %v4814
        %v4816 = vpop.xlane.xlu0 %4815
        %v4817 = vadd.f32 %v4781, %v4782
        %4818 = vadd.xlane.f32.xlu0 %v4817
        %v4819 = vpop.xlane.xlu0 %4818
        %v4820 = vadd.f32 %v4783, %v4784
        %4821 = vadd.xlane.f32.xlu0 %v4820
        %v4822 = vpop.xlane.xlu0 %4821
        %v4823 = vadd.f32 %v4785, %v4786
        %4824 = vadd.xlane.f32.xlu0 %v4823
        %v4825 = vpop.xlane.xlu0 %4824
        %v4826 = vadd.f32 %v4787, %v4788
        %4827 = vadd.xlane.f32.xlu0 %v4826
        %v4828 = vpop.xlane.xlu0 %4827
        %v4829 = vadd.f32 %v4789, %v4790
        %4830 = vadd.xlane.f32.xlu0 %v4829
        %v4831 = vpop.xlane.xlu0 %4830
        %v4832 = vadd.f32 %v4791, %v4792
        %4833 = vadd.xlane.f32.xlu0 %v4832
        %v4834 = vpop.xlane.xlu0 %4833
        %v4835 = vadd.f32 %v4793, %v4794
        %4836 = vadd.xlane.f32.xlu0 %v4835
        %v4837 = vpop.xlane.xlu0 %4836
        %v4838 = vadd.f32 %v4795, %v4796
        %4839 = vadd.xlane.f32.xlu0 %v4838
        %v4840 = vpop.xlane.xlu0 %4839
        %v4841 = vadd.f32 %v4797, %v4798
        %4842 = vadd.xlane.f32.xlu0 %v4841
        %v4843 = vpop.xlane.xlu0 %4842
        %v4844 = vadd.f32 %v4799, %v4800
        %4845 = vadd.xlane.f32.xlu0 %v4844
        %v4846 = vpop.xlane.xlu0 %4845
        %v4847 = vadd.f32 %v4801, %v4802
        %4848 = vadd.xlane.f32.xlu0 %v4847
        %v4849 = vpop.xlane.xlu0 %4848
        %v4850 = vadd.f32 %v4803, %v4804
        %4851 = vadd.xlane.f32.xlu0 %v4850
        %v4852 = vpop.xlane.xlu0 %4851
        %v4853 = vmul.f32 %v4807, %v2443
        %v4854 = vmul.f32 %v4810, %v2443
        %v4855 = vmul.f32 %v4813, %v2443
        %v4856 = vmul.f32 %v4816, %v2443
        %v4857 = vmul.f32 %v4819, %v2443
        %v4858 = vmul.f32 %v4822, %v2443
        %v4859 = vmul.f32 %v4825, %v2443
        %v4860 = vmul.f32 %v4828, %v2443
        %v4861 = vmul.f32 %v4831, %v2443
        %v4862 = vmul.f32 %v4834, %v2443
        %v4863 = vmul.f32 %v4837, %v2443
        %v4864 = vmul.f32 %v4840, %v2443
        %v4865 = vmul.f32 %v4843, %v2443
        %v4866 = vmul.f32 %v4846, %v2443
        %v4867 = vmul.f32 %v4849, %v2443
        %v4868 = vmul.f32 %v4852, %v2443
        %v4869 = vsub.f32 %v4773, %v4853
        %v4870 = vsub.f32 %v4774, %v4853
        %v4871 = vsub.f32 %v4775, %v4854
        %v4872 = vsub.f32 %v4776, %v4854
        %v4873 = vsub.f32 %v4777, %v4855
        %v4874 = vsub.f32 %v4778, %v4855
        %v4875 = vsub.f32 %v4779, %v4856
        %v4876 = vsub.f32 %v4780, %v4856
        %v4877 = vsub.f32 %v4781, %v4857
        %v4878 = vsub.f32 %v4782, %v4857
        %v4879 = vsub.f32 %v4783, %v4858
        %v4880 = vsub.f32 %v4784, %v4858
        %v4881 = vsub.f32 %v4785, %v4859
        %v4882 = vsub.f32 %v4786, %v4859
        %v4883 = vsub.f32 %v4787, %v4860
        %v4884 = vsub.f32 %v4788, %v4860
        %v4885 = vsub.f32 %v4789, %v4861
        %v4886 = vsub.f32 %v4790, %v4861
        %v4887 = vsub.f32 %v4791, %v4862
        %v4888 = vsub.f32 %v4792, %v4862
        %v4889 = vsub.f32 %v4793, %v4863
        %v4890 = vsub.f32 %v4794, %v4863
        %v4891 = vsub.f32 %v4795, %v4864
        %v4892 = vsub.f32 %v4796, %v4864
        %v4893 = vsub.f32 %v4797, %v4865
        %v4894 = vsub.f32 %v4798, %v4865
        %v4895 = vsub.f32 %v4799, %v4866
        %v4896 = vsub.f32 %v4800, %v4866
        %v4897 = vsub.f32 %v4801, %v4867
        %v4898 = vsub.f32 %v4802, %v4867
        %v4899 = vsub.f32 %v4803, %v4868
        %v4900 = vsub.f32 %v4804, %v4868
        %v4901 = vmul.f32 %v4869, %v4869
        %v4902 = vmul.f32 %v4870, %v4870
        %v4903 = vmul.f32 %v4871, %v4871
        %v4904 = vmul.f32 %v4872, %v4872
        %v4905 = vmul.f32 %v4873, %v4873
        %v4906 = vmul.f32 %v4874, %v4874
        %v4907 = vmul.f32 %v4875, %v4875
        %v4908 = vmul.f32 %v4876, %v4876
        %v4909 = vmul.f32 %v4877, %v4877
        %v4910 = vmul.f32 %v4878, %v4878
        %v4911 = vmul.f32 %v4879, %v4879
        %v4912 = vmul.f32 %v4880, %v4880
        %v4913 = vmul.f32 %v4881, %v4881
        %v4914 = vmul.f32 %v4882, %v4882
        %v4915 = vmul.f32 %v4883, %v4883
        %v4916 = vmul.f32 %v4884, %v4884
        %v4917 = vmul.f32 %v4885, %v4885
        %v4918 = vmul.f32 %v4886, %v4886
        %v4919 = vmul.f32 %v4887, %v4887
        %v4920 = vmul.f32 %v4888, %v4888
        %v4921 = vmul.f32 %v4889, %v4889
        %v4922 = vmul.f32 %v4890, %v4890
        %v4923 = vmul.f32 %v4891, %v4891
        %v4924 = vmul.f32 %v4892, %v4892
        %v4925 = vmul.f32 %v4893, %v4893
        %v4926 = vmul.f32 %v4894, %v4894
        %v4927 = vmul.f32 %v4895, %v4895
        %v4928 = vmul.f32 %v4896, %v4896
        %v4929 = vmul.f32 %v4897, %v4897
        %v4930 = vmul.f32 %v4898, %v4898
        %v4931 = vmul.f32 %v4899, %v4899
        %v4932 = vmul.f32 %v4900, %v4900
        %v4933 = vadd.f32 %v4901, %v4902
        %4934 = vadd.xlane.f32.xlu0 %v4933
        %v4935 = vpop.xlane.xlu0 %4934
        %v4936 = vadd.f32 %v4903, %v4904
        %4937 = vadd.xlane.f32.xlu0 %v4936
        %v4938 = vpop.xlane.xlu0 %4937
        %v4939 = vadd.f32 %v4905, %v4906
        %4940 = vadd.xlane.f32.xlu0 %v4939
        %v4941 = vpop.xlane.xlu0 %4940
        %v4942 = vadd.f32 %v4907, %v4908
        %4943 = vadd.xlane.f32.xlu0 %v4942
        %v4944 = vpop.xlane.xlu0 %4943
        %v4945 = vadd.f32 %v4909, %v4910
        %4946 = vadd.xlane.f32.xlu0 %v4945
        %v4947 = vpop.xlane.xlu0 %4946
        %v4948 = vadd.f32 %v4911, %v4912
        %4949 = vadd.xlane.f32.xlu0 %v4948
        %v4950 = vpop.xlane.xlu0 %4949
        %v4951 = vadd.f32 %v4913, %v4914
        %4952 = vadd.xlane.f32.xlu0 %v4951
        %v4953 = vpop.xlane.xlu0 %4952
        %v4954 = vadd.f32 %v4915, %v4916
        %4955 = vadd.xlane.f32.xlu0 %v4954
        %v4956 = vpop.xlane.xlu0 %4955
        %v4957 = vadd.f32 %v4917, %v4918
        %4958 = vadd.xlane.f32.xlu0 %v4957
        %v4959 = vpop.xlane.xlu0 %4958
        %v4960 = vadd.f32 %v4919, %v4920
        %4961 = vadd.xlane.f32.xlu0 %v4960
        %v4962 = vpop.xlane.xlu0 %4961
        %v4963 = vadd.f32 %v4921, %v4922
        %4964 = vadd.xlane.f32.xlu0 %v4963
        %v4965 = vpop.xlane.xlu0 %4964
        %v4966 = vadd.f32 %v4923, %v4924
        %4967 = vadd.xlane.f32.xlu0 %v4966
        %v4968 = vpop.xlane.xlu0 %4967
        %v4969 = vadd.f32 %v4925, %v4926
        %4970 = vadd.xlane.f32.xlu0 %v4969
        %v4971 = vpop.xlane.xlu0 %4970
        %v4972 = vadd.f32 %v4927, %v4928
        %4973 = vadd.xlane.f32.xlu0 %v4972
        %v4974 = vpop.xlane.xlu0 %4973
        %v4975 = vadd.f32 %v4929, %v4930
        %4976 = vadd.xlane.f32.xlu0 %v4975
        %v4977 = vpop.xlane.xlu0 %4976
        %v4978 = vadd.f32 %v4931, %v4932
        %4979 = vadd.xlane.f32.xlu0 %v4978
        %v4980 = vpop.xlane.xlu0 %4979
        %v4981 = vmul.f32 %v4935, %v2443
        %v4982 = vmul.f32 %v4938, %v2443
        %v4983 = vmul.f32 %v4941, %v2443
        %v4984 = vmul.f32 %v4944, %v2443
        %v4985 = vmul.f32 %v4947, %v2443
        %v4986 = vmul.f32 %v4950, %v2443
        %v4987 = vmul.f32 %v4953, %v2443
        %v4988 = vmul.f32 %v4956, %v2443
        %v4989 = vmul.f32 %v4959, %v2443
        %v4990 = vmul.f32 %v4962, %v2443
        %v4991 = vmul.f32 %v4965, %v2443
        %v4992 = vmul.f32 %v4968, %v2443
        %v4993 = vmul.f32 %v4971, %v2443
        %v4994 = vmul.f32 %v4974, %v2443
        %v4995 = vmul.f32 %v4977, %v2443
        %v4996 = vmul.f32 %v4980, %v2443
        %v4997 = vadd.f32 %v4981, 1e-05
        %v4998 = vadd.f32 %v4982, 1e-05
        %v4999 = vadd.f32 %v4983, 1e-05
        %v5000 = vadd.f32 %v4984, 1e-05
        %v5001 = vadd.f32 %v4985, 1e-05
        %v5002 = vadd.f32 %v4986, 1e-05
        %v5003 = vadd.f32 %v4987, 1e-05
        %v5004 = vadd.f32 %v4988, 1e-05
        %v5005 = vadd.f32 %v4989, 1e-05
        %v5006 = vadd.f32 %v4990, 1e-05
        %v5007 = vadd.f32 %v4991, 1e-05
        %v5008 = vadd.f32 %v4992, 1e-05
        %v5009 = vadd.f32 %v4993, 1e-05
        %v5010 = vadd.f32 %v4994, 1e-05
        %v5011 = vadd.f32 %v4995, 1e-05
        %v5012 = vadd.f32 %v4996, 1e-05
        %v5013 = vrsqrt.pop %v4997
        %v5014 = vmul.f32 %v5013, %v4997
        %v5015 = vmul.f32 %v5014, %v5013
        %v5016 = vmul.f32 0.5, %v5015
        %v5017 = vsub.f32 1.5, %v5016
        %v5018 = vmul.f32 %v5013, %v5017
        %vm5019 = vweird.f32 %v4997
        %vm5020 = vweird.f32 %v5013
        %vm5021 = vmor %vm5019, %vm5020
        %v5022 = vsel %vm5021, %v5013, %v5018
        %v5023 = vrsqrt.pop %v4998
        %v5024 = vmul.f32 %v5023, %v4998
        %v5025 = vmul.f32 %v5024, %v5023
        %v5026 = vmul.f32 0.5, %v5025
        %v5027 = vsub.f32 1.5, %v5026
        %v5028 = vmul.f32 %v5023, %v5027
        %vm5029 = vweird.f32 %v4998
        %vm5030 = vweird.f32 %v5023
        %vm5031 = vmor %vm5029, %vm5030
        %v5032 = vsel %vm5031, %v5023, %v5028
        %v5033 = vrsqrt.pop %v4999
        %v5034 = vmul.f32 %v5033, %v4999
        %v5035 = vmul.f32 %v5034, %v5033
        %v5036 = vmul.f32 0.5, %v5035
        %v5037 = vsub.f32 1.5, %v5036
        %v5038 = vmul.f32 %v5033, %v5037
        %vm5039 = vweird.f32 %v4999
        %vm5040 = vweird.f32 %v5033
        %vm5041 = vmor %vm5039, %vm5040
        %v5042 = vsel %vm5041, %v5033, %v5038
        %v5043 = vrsqrt.pop %v5000
        %v5044 = vmul.f32 %v5043, %v5000
        %v5045 = vmul.f32 %v5044, %v5043
        %v5046 = vmul.f32 0.5, %v5045
        %v5047 = vsub.f32 1.5, %v5046
        %v5048 = vmul.f32 %v5043, %v5047
        %vm5049 = vweird.f32 %v5000
        %vm5050 = vweird.f32 %v5043
        %vm5051 = vmor %vm5049, %vm5050
        %v5052 = vsel %vm5051, %v5043, %v5048
        %v5053 = vrsqrt.pop %v5001
        %v5054 = vmul.f32 %v5053, %v5001
        %v5055 = vmul.f32 %v5054, %v5053
        %v5056 = vmul.f32 0.5, %v5055
        %v5057 = vsub.f32 1.5, %v5056
        %v5058 = vmul.f32 %v5053, %v5057
        %vm5059 = vweird.f32 %v5001
        %vm5060 = vweird.f32 %v5053
        %vm5061 = vmor %vm5059, %vm5060
        %v5062 = vsel %vm5061, %v5053, %v5058
        %v5063 = vrsqrt.pop %v5002
        %v5064 = vmul.f32 %v5063, %v5002
        %v5065 = vmul.f32 %v5064, %v5063
        %v5066 = vmul.f32 0.5, %v5065
        %v5067 = vsub.f32 1.5, %v5066
        %v5068 = vmul.f32 %v5063, %v5067
        %vm5069 = vweird.f32 %v5002
        %vm5070 = vweird.f32 %v5063
        %vm5071 = vmor %vm5069, %vm5070
        %v5072 = vsel %vm5071, %v5063, %v5068
        %v5073 = vrsqrt.pop %v5003
        %v5074 = vmul.f32 %v5073, %v5003
        %v5075 = vmul.f32 %v5074, %v5073
        %v5076 = vmul.f32 0.5, %v5075
        %v5077 = vsub.f32 1.5, %v5076
        %v5078 = vmul.f32 %v5073, %v5077
        %vm5079 = vweird.f32 %v5003
        %vm5080 = vweird.f32 %v5073
        %vm5081 = vmor %vm5079, %vm5080
        %v5082 = vsel %vm5081, %v5073, %v5078
        %v5083 = vrsqrt.pop %v5004
        %v5084 = vmul.f32 %v5083, %v5004
        %v5085 = vmul.f32 %v5084, %v5083
        %v5086 = vmul.f32 0.5, %v5085
        %v5087 = vsub.f32 1.5, %v5086
        %v5088 = vmul.f32 %v5083, %v5087
        %vm5089 = vweird.f32 %v5004
        %vm5090 = vweird.f32 %v5083
        %vm5091 = vmor %vm5089, %vm5090
        %v5092 = vsel %vm5091, %v5083, %v5088
        %v5093 = vrsqrt.pop %v5005
        %v5094 = vmul.f32 %v5093, %v5005
        %v5095 = vmul.f32 %v5094, %v5093
        %v5096 = vmul.f32 0.5, %v5095
        %v5097 = vsub.f32 1.5, %v5096
        %v5098 = vmul.f32 %v5093, %v5097
        %vm5099 = vweird.f32 %v5005
        %vm5100 = vweird.f32 %v5093
        %vm5101 = vmor %vm5099, %vm5100
        %v5102 = vsel %vm5101, %v5093, %v5098
        %v5103 = vrsqrt.pop %v5006
        %v5104 = vmul.f32 %v5103, %v5006
        %v5105 = vmul.f32 %v5104, %v5103
        %v5106 = vmul.f32 0.5, %v5105
        %v5107 = vsub.f32 1.5, %v5106
        %v5108 = vmul.f32 %v5103, %v5107
        %vm5109 = vweird.f32 %v5006
        %vm5110 = vweird.f32 %v5103
        %vm5111 = vmor %vm5109, %vm5110
        %v5112 = vsel %vm5111, %v5103, %v5108
        %v5113 = vrsqrt.pop %v5007
        %v5114 = vmul.f32 %v5113, %v5007
        %v5115 = vmul.f32 %v5114, %v5113
        %v5116 = vmul.f32 0.5, %v5115
        %v5117 = vsub.f32 1.5, %v5116
        %v5118 = vmul.f32 %v5113, %v5117
        %vm5119 = vweird.f32 %v5007
        %vm5120 = vweird.f32 %v5113
        %vm5121 = vmor %vm5119, %vm5120
        %v5122 = vsel %vm5121, %v5113, %v5118
        %v5123 = vrsqrt.pop %v5008
        %v5124 = vmul.f32 %v5123, %v5008
        %v5125 = vmul.f32 %v5124, %v5123
        %v5126 = vmul.f32 0.5, %v5125
        %v5127 = vsub.f32 1.5, %v5126
        %v5128 = vmul.f32 %v5123, %v5127
        %vm5129 = vweird.f32 %v5008
        %vm5130 = vweird.f32 %v5123
        %vm5131 = vmor %vm5129, %vm5130
        %v5132 = vsel %vm5131, %v5123, %v5128
        %v5133 = vrsqrt.pop %v5009
        %v5134 = vmul.f32 %v5133, %v5009
        %v5135 = vmul.f32 %v5134, %v5133
        %v5136 = vmul.f32 0.5, %v5135
        %v5137 = vsub.f32 1.5, %v5136
        %v5138 = vmul.f32 %v5133, %v5137
        %vm5139 = vweird.f32 %v5009
        %vm5140 = vweird.f32 %v5133
        %vm5141 = vmor %vm5139, %vm5140
        %v5142 = vsel %vm5141, %v5133, %v5138
        %v5143 = vrsqrt.pop %v5010
        %v5144 = vmul.f32 %v5143, %v5010
        %v5145 = vmul.f32 %v5144, %v5143
        %v5146 = vmul.f32 0.5, %v5145
        %v5147 = vsub.f32 1.5, %v5146
        %v5148 = vmul.f32 %v5143, %v5147
        %vm5149 = vweird.f32 %v5010
        %vm5150 = vweird.f32 %v5143
        %vm5151 = vmor %vm5149, %vm5150
        %v5152 = vsel %vm5151, %v5143, %v5148
        %v5153 = vrsqrt.pop %v5011
        %v5154 = vmul.f32 %v5153, %v5011
        %v5155 = vmul.f32 %v5154, %v5153
        %v5156 = vmul.f32 0.5, %v5155
        %v5157 = vsub.f32 1.5, %v5156
        %v5158 = vmul.f32 %v5153, %v5157
        %vm5159 = vweird.f32 %v5011
        %vm5160 = vweird.f32 %v5153
        %vm5161 = vmor %vm5159, %vm5160
        %v5162 = vsel %vm5161, %v5153, %v5158
        %v5163 = vrsqrt.pop %v5012
        %v5164 = vmul.f32 %v5163, %v5012
        %v5165 = vmul.f32 %v5164, %v5163
        %v5166 = vmul.f32 0.5, %v5165
        %v5167 = vsub.f32 1.5, %v5166
        %v5168 = vmul.f32 %v5163, %v5167
        %vm5169 = vweird.f32 %v5012
        %vm5170 = vweird.f32 %v5163
        %vm5171 = vmor %vm5169, %vm5170
        %v5172 = vsel %vm5171, %v5163, %v5168
        %v5173 = vmul.f32 %v4869, %v5022
        %v5174 = vmul.f32 %v4870, %v5022
        %v5175 = vmul.f32 %v4871, %v5032
        %v5176 = vmul.f32 %v4872, %v5032
        %v5177 = vmul.f32 %v4873, %v5042
        %v5178 = vmul.f32 %v4874, %v5042
        %v5179 = vmul.f32 %v4875, %v5052
        %v5180 = vmul.f32 %v4876, %v5052
        %v5181 = vmul.f32 %v4877, %v5062
        %v5182 = vmul.f32 %v4878, %v5062
        %v5183 = vmul.f32 %v4879, %v5072
        %v5184 = vmul.f32 %v4880, %v5072
        %v5185 = vmul.f32 %v4881, %v5082
        %v5186 = vmul.f32 %v4882, %v5082
        %v5187 = vmul.f32 %v4883, %v5092
        %v5188 = vmul.f32 %v4884, %v5092
        %v5189 = vmul.f32 %v4885, %v5102
        %v5190 = vmul.f32 %v4886, %v5102
        %v5191 = vmul.f32 %v4887, %v5112
        %v5192 = vmul.f32 %v4888, %v5112
        %v5193 = vmul.f32 %v4889, %v5122
        %v5194 = vmul.f32 %v4890, %v5122
        %v5195 = vmul.f32 %v4891, %v5132
        %v5196 = vmul.f32 %v4892, %v5132
        %v5197 = vmul.f32 %v4893, %v5142
        %v5198 = vmul.f32 %v4894, %v5142
        %v5199 = vmul.f32 %v4895, %v5152
        %v5200 = vmul.f32 %v4896, %v5152
        %v5201 = vmul.f32 %v4897, %v5162
        %v5202 = vmul.f32 %v4898, %v5162
        %v5203 = vmul.f32 %v4899, %v5172
        %v5204 = vmul.f32 %v4900, %v5172
        %v5205 = vperm.slane %v2924, 2
        %v5206 = vperm.slane %v2924, 6
        %v5209 = vperm.slane %v5205, 2
        %v5210 = vperm.slane %v5206, 2
        %v5211 = vmul.f32 %v5173, %v5209
        %v5212 = vmul.f32 %v5174, %v5210
        %v5213 = vmul.f32 %v5175, %v5209
        %v5214 = vmul.f32 %v5176, %v5210
        %v5215 = vmul.f32 %v5177, %v5209
        %v5216 = vmul.f32 %v5178, %v5210
        %v5217 = vmul.f32 %v5179, %v5209
        %v5218 = vmul.f32 %v5180, %v5210
        %v5219 = vmul.f32 %v5181, %v5209
        %v5220 = vmul.f32 %v5182, %v5210
        %v5221 = vmul.f32 %v5183, %v5209
        %v5222 = vmul.f32 %v5184, %v5210
        %v5223 = vmul.f32 %v5185, %v5209
        %v5224 = vmul.f32 %v5186, %v5210
        %v5225 = vmul.f32 %v5187, %v5209
        %v5226 = vmul.f32 %v5188, %v5210
        %v5227 = vmul.f32 %v5189, %v5209
        %v5228 = vmul.f32 %v5190, %v5210
        %v5229 = vmul.f32 %v5191, %v5209
        %v5230 = vmul.f32 %v5192, %v5210
        %v5231 = vmul.f32 %v5193, %v5209
        %v5232 = vmul.f32 %v5194, %v5210
        %v5233 = vmul.f32 %v5195, %v5209
        %v5234 = vmul.f32 %v5196, %v5210
        %v5235 = vmul.f32 %v5197, %v5209
        %v5236 = vmul.f32 %v5198, %v5210
        %v5237 = vmul.f32 %v5199, %v5209
        %v5238 = vmul.f32 %v5200, %v5210
        %v5239 = vmul.f32 %v5201, %v5209
        %v5240 = vmul.f32 %v5202, %v5210
        %v5241 = vmul.f32 %v5203, %v5209
        %v5242 = vmul.f32 %v5204, %v5210
        %v5243 = vperm.slane %v2924, 3
        %v5244 = vperm.slane %v2924, 7
        %v5247 = vperm.slane %v5243, 3
        %v5248 = vperm.slane %v5244, 3
        %v5249 = vadd.f32 %v5211, %v5247
        %v5250 = vadd.f32 %v5212, %v5248
        %v5251 = vadd.f32 %v5213, %v5247
        %v5252 = vadd.f32 %v5214, %v5248
        %v5253 = vadd.f32 %v5215, %v5247
        %v5254 = vadd.f32 %v5216, %v5248
        %v5255 = vadd.f32 %v5217, %v5247
        %v5256 = vadd.f32 %v5218, %v5248
        %v5257 = vadd.f32 %v5219, %v5247
        %v5258 = vadd.f32 %v5220, %v5248
        %v5259 = vadd.f32 %v5221, %v5247
        %v5260 = vadd.f32 %v5222, %v5248
        %v5261 = vadd.f32 %v5223, %v5247
        %v5262 = vadd.f32 %v5224, %v5248
        %v5263 = vadd.f32 %v5225, %v5247
        %v5264 = vadd.f32 %v5226, %v5248
        %v5265 = vadd.f32 %v5227, %v5247
        %v5266 = vadd.f32 %v5228, %v5248
        %v5267 = vadd.f32 %v5229, %v5247
        %v5268 = vadd.f32 %v5230, %v5248
        %v5269 = vadd.f32 %v5231, %v5247
        %v5270 = vadd.f32 %v5232, %v5248
        %v5271 = vadd.f32 %v5233, %v5247
        %v5272 = vadd.f32 %v5234, %v5248
        %v5273 = vadd.f32 %v5235, %v5247
        %v5274 = vadd.f32 %v5236, %v5248
        %v5275 = vadd.f32 %v5237, %v5247
        %v5276 = vadd.f32 %v5238, %v5248
        %v5277 = vadd.f32 %v5239, %v5247
        %v5278 = vadd.f32 %v5240, %v5248
        %v5279 = vadd.f32 %v5241, %v5247
        %v5280 = vadd.f32 %v5242, %v5248
        %v5281 = vpack.c.bf16 %v2841, %v2840
        %v5282 = vpack.c.bf16 %v2843, %v2842
        %v5283 = vpack.c.bf16 %v2845, %v2844
        %v5284 = vpack.c.bf16 %v2847, %v2846
        %v5285 = vpack.c.bf16 %v2849, %v2848
        %v5286 = vpack.c.bf16 %v2851, %v2850
        %v5287 = vpack.c.bf16 %v2853, %v2852
        %v5288 = vpack.c.bf16 %v2855, %v2854
        %v5289 = vpack.c.bf16 %v2857, %v2856
        %v5290 = vpack.c.bf16 %v2859, %v2858
        %v5291 = vpack.c.bf16 %v2861, %v2860
        %v5292 = vpack.c.bf16 %v2863, %v2862
        %v5293 = vpack.c.bf16 %v2865, %v2864
        %v5294 = vpack.c.bf16 %v2867, %v2866
        %v5295 = vpack.c.bf16 %v2869, %v2868
        %v5296 = vpack.c.bf16 %v2871, %v2870
        %5297 = vst [vmem:[%s409] sm:$0xff] %v5281
        %5298 = vst [vmem:[%s409 + $0x8] sm:$0xff] %v5282
        %5299 = vst [vmem:[%s409 + $0x10] sm:$0xff] %v5283
        %5300 = vst [vmem:[%s409 + $0x18] sm:$0xff] %v5284
        %5301 = vst [vmem:[%s409 + $0x20] sm:$0xff] %v5285
        %5302 = vst [vmem:[%s409 + $0x28] sm:$0xff] %v5286
        %5303 = vst [vmem:[%s409 + $0x30] sm:$0xff] %v5287
        %5304 = vst [vmem:[%s409 + $0x38] sm:$0xff] %v5288
        %5305 = vst [vmem:[%s409 + $0x40] sm:$0xff] %v5289
        %5306 = vst [vmem:[%s409 + $0x48] sm:$0xff] %v5290
        %5307 = vst [vmem:[%s409 + $0x50] sm:$0xff] %v5291
        %5308 = vst [vmem:[%s409 + $0x58] sm:$0xff] %v5292
        %5309 = vst [vmem:[%s409 + $0x60] sm:$0xff] %v5293
        %5310 = vst [vmem:[%s409 + $0x68] sm:$0xff] %v5294
        %5311 = vst [vmem:[%s409 + $0x70] sm:$0xff] %v5295
        %5312 = vst [vmem:[%s409 + $0x78] sm:$0xff] %v5296
        %v5313 = vpack.c.bf16 %v5250, %v5249
        %v5314 = vpack.c.bf16 %v5252, %v5251
        %v5315 = vpack.c.bf16 %v5254, %v5253
        %v5316 = vpack.c.bf16 %v5256, %v5255
        %v5317 = vpack.c.bf16 %v5258, %v5257
        %v5318 = vpack.c.bf16 %v5260, %v5259
        %v5319 = vpack.c.bf16 %v5262, %v5261
        %v5320 = vpack.c.bf16 %v5264, %v5263
        %v5321 = vpack.c.bf16 %v5266, %v5265
        %v5322 = vpack.c.bf16 %v5268, %v5267
        %v5323 = vpack.c.bf16 %v5270, %v5269
        %v5324 = vpack.c.bf16 %v5272, %v5271
        %v5325 = vpack.c.bf16 %v5274, %v5273
        %v5326 = vpack.c.bf16 %v5276, %v5275
        %v5327 = vpack.c.bf16 %v5278, %v5277
        %v5328 = vpack.c.bf16 %v5280, %v5279
        %5329 = vst [vmem:[%s416] sm:$0xff] %v5313
        %5330 = vst [vmem:[%s416 + $0x8] sm:$0xff] %v5314
        %5331 = vst [vmem:[%s416 + $0x10] sm:$0xff] %v5315
        %5332 = vst [vmem:[%s416 + $0x18] sm:$0xff] %v5316
        %5333 = vst [vmem:[%s416 + $0x20] sm:$0xff] %v5317
        %5334 = vst [vmem:[%s416 + $0x28] sm:$0xff] %v5318
        %5335 = vst [vmem:[%s416 + $0x30] sm:$0xff] %v5319
        %5336 = vst [vmem:[%s416 + $0x38] sm:$0xff] %v5320
        %5337 = vst [vmem:[%s416 + $0x40] sm:$0xff] %v5321
        %5338 = vst [vmem:[%s416 + $0x48] sm:$0xff] %v5322
        %5339 = vst [vmem:[%s416 + $0x50] sm:$0xff] %v5323
        %5340 = vst [vmem:[%s416 + $0x58] sm:$0xff] %v5324
        %5341 = vst [vmem:[%s416 + $0x60] sm:$0xff] %v5325
        %5342 = vst [vmem:[%s416 + $0x68] sm:$0xff] %v5326
        %5343 = vst [vmem:[%s416 + $0x70] sm:$0xff] %v5327
        %5344 = vst [vmem:[%s416 + $0x78] sm:$0xff] %v5328
        %s5345 = sand.u32 %s216, 1
        %s5346 = scalar_lea.sflag [#allocation4], %s5345
        %s5347 = sand.u32 %s216, 1
        %s5348 = smul.addr %s5347, 128
        %s5349 = scalar_lea.vmem [#allocation10], %s5348
        %s5350 = sand.u32 %s242, 1
        %s5351 = scalar_lea.sflag [#allocation12], %s5350
        %s5352 = sand.u32 %s242, 1
        %s5353 = smul.addr %s5352, 128
        %s5354 = scalar_lea.vmem [#allocation11], %s5353
        // Predicated region
        $region69: #{tpu_custom_call.1} parent=51 // pred_check
          %p5355 = pneg %p226
        $region70: #{tpu_custom_call.1} parent=51 // pred_check_branch
          %5357 = sbr.rel (%p5355) target = $region72
        $region71: #{tpu_custom_call.1} parent=51 // pred_region
          %s5358 = smul.u32 16, %s30
          %5360 = vsyncadd %s5346, 0
          %s5361 = smul.addr %s5358, 2
          %s5362 = smul.addr %s5361, 4
          %s5363 = scalar_lea.hbm %s8, %s5362
          %s5364 = sshll.u32 %s5349, 4
          %s5365 = int_to_ptr.vmem [resolvable:$true] %s5364
          %s5366 = sshll.u32 %s5363, 4
          %s5367 = int_to_ptr.hbm [resolvable:$true] %s5366
          %5372 = dma.vmem_to_hbm [thread:$0]  %s5365, 2048, %s5367, %s5346, 128, 128, 8
        $region72: #{tpu_custom_call.1} parent=51 // pred_fallthru
          _
        // Predicated region
        $region73: #{tpu_custom_call.1} parent=51 // pred_check
          %p5373 = pneg %p252
        $region74: #{tpu_custom_call.1} parent=51 // pred_check_branch
          %5375 = sbr.rel (%p5373) target = $region76
        $region75: #{tpu_custom_call.1} parent=51 // pred_region
          %s5376 = smul.u32 16, %s30
          %5378 = vsyncadd %s5351, 0
          %s5379 = smul.addr %s5376, 2
          %s5380 = smul.addr %s5379, 4
          %s5381 = scalar_lea.hbm %s9, %s5380
          %s5382 = sshll.u32 %s5354, 4
          %s5383 = int_to_ptr.vmem [resolvable:$true] %s5382
          %s5384 = sshll.u32 %s5381, 4
          %s5385 = int_to_ptr.hbm [resolvable:$true] %s5384
          %5390 = dma.vmem_to_hbm [thread:$0]  %s5383, 2048, %s5385, %s5351, 128, 128, 8
        $region76: #{tpu_custom_call.1} parent=51 // pred_fallthru
          _
      $region52: #{tpu_custom_call.1} parent=5 // pred_fallthru
        _
      %p5391 = scmp.le.s32.totalorder 2, %s25
      // Predicated region
      $region77: #{tpu_custom_call.1} parent=5 // pred_check
        %p5392 = pneg %p5391
      $region78: #{tpu_custom_call.1} parent=5 // pred_check_branch
        %5394 = sbr.rel (%p5392) target = $region80
      $region79: #{tpu_custom_call.1} parent=5 // pred_region
        %s5395 = ssub.s32 %s25, 2
        // Predicated region
        $region81: #{tpu_custom_call.1} parent=79 // pred_check
          %p5396 = pneg %p232
        $region82: #{tpu_custom_call.1} parent=79 // pred_check_branch
          %5398 = sbr.rel (%p5396) target = $region84
        $region83: #{tpu_custom_call.1} parent=79 // pred_region
          %s5399 = sand.u32 %s217, 1
          %s5400 = scalar_lea.sflag [#allocation4], %s5399
          %s5401 = sand.u32 %s217, 1
          %s5402 = smul.addr %s5401, 128
          %s5403 = scalar_lea.vmem [#allocation10], %s5402
          %5405 = dma.done %s5400, 2048
        $region84: #{tpu_custom_call.1} parent=79 // pred_fallthru
          _
        // Predicated region
        $region85: #{tpu_custom_call.1} parent=79 // pred_check
          %p5406 = pneg %p258
        $region86: #{tpu_custom_call.1} parent=79 // pred_check_branch
          %5408 = sbr.rel (%p5406) target = $region88
        $region87: #{tpu_custom_call.1} parent=79 // pred_region
          %s5409 = sand.u32 %s243, 1
          %s5410 = scalar_lea.sflag [#allocation12], %s5409
          %s5411 = sand.u32 %s243, 1
          %s5412 = smul.addr %s5411, 128
          %s5413 = scalar_lea.vmem [#allocation11], %s5412
          %5415 = dma.done %s5410, 2048
        $region88: #{tpu_custom_call.1} parent=79 // pred_fallthru
          _
      $region80: #{tpu_custom_call.1} parent=5 // pred_fallthru
        _
    $region6: #{tpu_custom_call.1} parent=1 // loop_footer
      %s29 = sadd.s32 1, %s25
    $region7: #{tpu_custom_call.1} parent=1 // loop_footer_branch
      %24 = sbr.rel target = $region3
    $region8: #{tpu_custom_call.1} parent=1 // loop_exit
      _
    %5416 = vsyncpa [#allocation3], 1
    %s5417 = scalar_lea.sflag [#allocation3], 1
    %5418 = vsyncpa %s5417, 1
    %5419 = vsyncpa [#allocation6], 1
    %5420 = vsyncpa [#allocation9], 1
    %5421 = vsyncpa [#allocation4], 1
    %s5422 = scalar_lea.sflag [#allocation4], 1
    %5423 = vsyncpa %s5422, 1
    %5424 = vsyncpa [#allocation12], 1
    %s5425 = scalar_lea.sflag [#allocation12], 1
    %5426 = vsyncpa %s5425, 1

</llo_original>
